<compile_context>
chip_gen: v5e
topology: v5e:2x2
jax: 0.10.0
libtpu: 0.0.40
codegen_flags: <defaults>
</compile_context>

<pallas_src>
import jax
import jax.numpy as jnp
from jax.experimental import pallas as pl
from jax.experimental.pallas import tpu as pltpu


# ----------------------------------------------------------------------------
# Layout helpers
# ----------------------------------------------------------------------------
def _layout_dims(H, W):
    """Padded-spatial, 8-sublane-aligned layout constants."""
    Hp = H + 2                                   # 1 row of conv padding each side
    Wp = ((W + 2 + 7) // 8) * 8                  # conv padding + align to 8
    Pp = Hp * Wp                                 # rows per batch slab (multiple of 8)
    Gs = ((Wp + 1 + 7) // 8) * 8                 # scratch guard rows >= max tap shift
    return Hp, Wp, Pp, Gs


# ----------------------------------------------------------------------------
# Fused Pallas kernel
# ----------------------------------------------------------------------------
def _make_fused_kernel(*, B, Pp, Gs, Wp, F, R, C_all, U, NH, A):
    P = B * Pp
    Nout = U + NH * A
    shifts = [dh * Wp + dw for dh in (-1, 0, 1) for dw in (-1, 0, 1)]  # t = kh*3+kw
    Gx = Pp            # input guard = one full zero batch slab on each side

    def kernel(xg_ref, mask_ref, wcb_ref, wres_ref, w1x1_ref, whz_ref,
               bv1_ref, wv2_ref, bv2_ref, bh_ref, q_ref,
               feat_ref, tmp_ref, col_ref):
        # Guard-row init only: interior rows are always fully overwritten with
        # masked values, so only the guard slabs need to be made finite/zero.
        zg = jnp.zeros((Gs, F), jnp.float32)
        feat_ref[0:Gs, :] = zg
        feat_ref[Gs + P:Gs + P + Gs, :] = zg
        tmp_ref[0:Gs, :] = zg
        tmp_ref[Gs + P:Gs + P + Gs, :] = zg

        # hoist the (P,1)->(P,F) mask broadcast once
        mask_b = jnp.broadcast_to(mask_ref[...], (P, F))

        def conv3x3(src_ref, g_src, w_merged):
            # merged-K conv: 9 shifted slabs -> (P, 9F) im2col scratch,
            # then a single wide-K MXU matmul.
            for t in range(9):
                col_ref[:, t * F:(t + 1) * F] = src_ref[pl.ds(g_src + shifts[t], P), :]
            return jnp.dot(col_ref[...], w_merged,
                           preferred_element_type=jnp.float32)

        # ---- conv block: 3x3 conv + ReLU -----------------------------------
        acc = conv3x3(xg_ref, Gx, wcb_ref[...])
        feat_ref[Gs:Gs + P, :] = jnp.maximum(acc, 0.0) * mask_b

        # ---- residual blocks: relu(conv2(relu(conv1(x))) + x) --------------
        # TODO(synk): switch to lax.fori_loop if num_res_block grows large.
        for r in range(R):
            w1 = wres_ref[(2 * r) * 9 * F:(2 * r + 1) * 9 * F, :]
            w2 = wres_ref[(2 * r + 1) * 9 * F:(2 * r + 2) * 9 * F, :]
            a1 = conv3x3(feat_ref, Gs, w1)
            tmp_ref[Gs:Gs + P, :] = jnp.maximum(a1, 0.0) * mask_b
            a2 = conv3x3(tmp_ref, Gs, w2)
            resid = feat_ref[Gs:Gs + P, :]
            feat_ref[Gs:Gs + P, :] = jnp.maximum(a2 + resid, 0.0) * mask_b

        # ---- batched 1x1 convs (value conv + all heads' adv convs) + ReLU --
        feat = feat_ref[Gs:Gs + P, :]
        m1x1 = jnp.maximum(
            jnp.dot(feat, w1x1_ref[...], preferred_element_type=jnp.float32),
            0.0)                                               # (P, C_all)

        # ---- fused value-fc1 + all head Linears ----------------------------
        # contraction over (spatial position, 1x1 channel) per batch, kept on
        # the sublane axis -> no (P, C_all)->(B, Pp*C_all) relayout needed.
        rows = []
        for b in range(B):
            mb = m1x1[b * Pp:(b + 1) * Pp, :]                  # (Pp, C_all)
            gb = jnp.zeros((Pp, Nout), jnp.float32)
            for c in range(C_all):
                gb = gb + mb[:, c:c + 1] * whz_ref[c * Pp:(c + 1) * Pp, :]
            rows.append(jnp.sum(gb, axis=0, keepdims=True))    # (1, Nout)
        zz = jnp.concatenate(rows, axis=0)                     # (B, Nout)

        # ---- value MLP ------------------------------------------------------
        h1 = jnp.maximum(zz[:, :U] + bv1_ref[...], 0.0)        # (B, U)
        value = jnp.sum(h1 * wv2_ref[...], axis=1, keepdims=True) + bv2_ref[...]

        # ---- dueling heads ---------------------------------------------------
        adv = zz[:, U:] + bh_ref[...]                          # (B, NH*A)
        for hd in range(NH):
            a_h = adv[:, hd * A:(hd + 1) * A]
            q_ref[:, hd * A:(hd + 1) * A] = (
                value + a_h - jnp.mean(a_h, axis=1, keepdims=True))

    return kernel


# ----------------------------------------------------------------------------
# Parameter init (deterministic, synthetic; PyTorch layouts)
# ----------------------------------------------------------------------------
def init_params(key, in_channels, H, W, num_actions, num_head,
                num_res_block, num_filters, num_fc_units):
    conv_out = H * W

    def nrm(k, shape, fan_in):
        return jax.random.normal(k, shape, jnp.float32) / jnp.sqrt(jnp.float32(fan_in))

    keys = iter(jax.random.split(key, 8 + 2 * num_res_block + 2 * num_head))
    params = {}
    params["conv_block_w"] = nrm(next(keys), (num_filters, in_channels, 3, 3),
                                 in_channels * 9)
    params["res"] = []
    for _ in range(num_res_block):
        w1 = nrm(next(keys), (num_filters, num_filters, 3, 3), num_filters * 9)
        w2 = nrm(next(keys), (num_filters, num_filters, 3, 3), num_filters * 9)
        params["res"].append((w1, w2))
    params["value_conv_w"] = nrm(next(keys), (1, num_filters, 1, 1), num_filters)
    params["value_fc1_w"] = nrm(next(keys), (num_fc_units, conv_out), conv_out)
    params["value_fc1_b"] = 0.01 * jax.random.normal(next(keys), (num_fc_units,),
                                                     jnp.float32)
    params["value_fc2_w"] = nrm(next(keys), (1, num_fc_units), num_fc_units)
    params["value_fc2_b"] = jnp.zeros((1,), jnp.float32)
    params["heads"] = []
    for _ in range(num_head):
        cw = nrm(next(keys), (2, num_filters, 1, 1), num_filters)
        lw = nrm(next(keys), (num_actions, 2 * conv_out), 2 * conv_out)
        lb = jnp.zeros((num_actions,), jnp.float32)
        params["heads"].append((cw, lw, lb))
    return params


# ----------------------------------------------------------------------------
# Convert PyTorch-layout parameters into the fused-kernel layouts
# ----------------------------------------------------------------------------
def prepare_params(params, H, W, batch_size):
    F = params["conv_block_w"].shape[0]
    Cin = params["conv_block_w"].shape[1]
    NH = len(params["heads"])
    A = params["heads"][0][1].shape[0]
    U = params["value_fc1_w"].shape[0]
    Hp, Wp, Pp, _ = _layout_dims(H, W)
    C_all = 1 + 2 * NH
    Nout = U + NH * A
    assert Cin <= F, "in_channels must be <= num_filters for channel embedding"

    def conv_taps(w_oihw):                     # (O, I, 3, 3) -> (9, I, O), t = kh*3+kw
        return jnp.transpose(w_oihw, (2, 3, 1, 0)).reshape(
            9, w_oihw.shape[1], w_oihw.shape[0])

    # conv block: embed Cin -> F input lanes, merge taps along K -> (9F, F)
    t_cb = conv_taps(params["conv_block_w"])                       # (9, Cin, F)
    wcb = jnp.zeros((9, F, F), jnp.float32).at[:, :Cin, :].set(t_cb).reshape(9 * F, F)

    # residual convs, merged taps, stacked -> (2R*9F, F)
    res_list = []
    for (w1, w2) in params["res"]:
        res_list.append(conv_taps(w1).reshape(9 * F, F))
        res_list.append(conv_taps(w2).reshape(9 * F, F))
    wres = jnp.concatenate(res_list, axis=0)

    # batched 1x1 convs: value conv + every head's advantage conv -> (F, C_all)
    w1x1 = jnp.zeros((F, C_all), jnp.float32)
    w1x1 = w1x1.at[:, 0].set(params["value_conv_w"][0, :, 0, 0])
    for hd, (cw, _, _) in enumerate(params["heads"]):
        w1x1 = w1x1.at[:, 1 + 2 * hd].set(cw[0, :, 0, 0])
        w1x1 = w1x1.at[:, 2 + 2 * hd].set(cw[1, :, 0, 0])

    # fused value-fc1 + head Linears, per-channel padded-spatial layout
    # whz[c, p, n]: contribution of 1x1-channel c at padded position p to
    # fused output n (n<U: value fc1 unit, n>=U: head hd action a), with the
    # PyTorch NCHW flatten order folded in.  (C_all*Pp, Nout)
    whz = jnp.zeros((C_all, Hp, Wp, Nout), jnp.float32)
    whz = whz.at[0, 1:H + 1, 1:W + 1, :U].set(
        jnp.transpose(params["value_fc1_w"].reshape(U, H, W), (1, 2, 0)))
    bh = jnp.zeros((1, NH * A), jnp.float32)
    for hd, (_, lw, lb) in enumerate(params["heads"]):
        blk = jnp.transpose(lw.reshape(A, 2, H, W), (2, 3, 1, 0))   # (H, W, 2, A)
        whz = whz.at[1 + 2 * hd, 1:H + 1, 1:W + 1,
                     U + hd * A:U + (hd + 1) * A].set(blk[:, :, 0, :])
        whz = whz.at[2 + 2 * hd, 1:H + 1, 1:W + 1,
                     U + hd * A:U + (hd + 1) * A].set(blk[:, :, 1, :])
        bh = bh.at[0, hd * A:(hd + 1) * A].set(lb)
    whz = whz.reshape(C_all * Pp, Nout)

    bv1 = params["value_fc1_b"].reshape(1, U).astype(jnp.float32)
    wv2 = params["value_fc2_w"].reshape(1, U).astype(jnp.float32)   # row vector
    bv2 = params["value_fc2_b"].reshape(1, 1).astype(jnp.float32)

    # static interior mask, precomputed once outside the forward path
    m2 = jnp.zeros((Hp, Wp), jnp.float32).at[1:H + 1, 1:W + 1].set(1.0)
    mask = jnp.tile(m2.reshape(-1), batch_size).reshape(batch_size * Pp, 1)

    return dict(wcb=wcb, wres=wres, w1x1=w1x1, whz=whz, bv1=bv1, wv2=wv2,
                bv2=bv2, bh=bh, mask=mask)


# ----------------------------------------------------------------------------
# Forward pass (k=None path): ONE pallas_call
# ----------------------------------------------------------------------------
@jax.jit
def ddqn_forward(kp, x_nchw):
    """x_nchw: (B, c*num_category, H, W) -> list of per-head (B, 1, A)."""
    B, Cin, H, W = x_nchw.shape
    F = kp["wcb"].shape[1]
    R = kp["wres"].shape[0] // (18 * F)
    C_all = kp["w1x1"].shape[1]
    NH = (C_all - 1) // 2
    U = kp["bv1"].shape[1]
    A = kp["bh"].shape[1] // NH
    Nout = U + NH * A
    Hp, Wp, Pp, Gs = _layout_dims(H, W)
    P = B * Pp
    assert kp["mask"].shape[0] == P
    assert kp["whz"].shape[0] == C_all * Pp

    # Glue: one transpose + one pad.  The pad provides conv padding, alignment
    # padding, Cin->F channel embedding, AND one full zero batch slab on each
    # side that doubles as the guard rows for the flattened 3x3 tap shifts.
    x = jnp.transpose(x_nchw, (0, 2, 3, 1)).astype(jnp.float32)      # NCHW -> NHWC
    xg = jnp.pad(x, ((1, 1), (1, Hp - 1 - H), (1, Wp - 1 - W), (0, F - Cin)))
    xg = xg.reshape((B + 2) * Pp, F)

    flops = ((1 + 2 * R) * 2 * P * (9 * F) * F          # merged-K convs
             + 2 * P * F * C_all                         # 1x1 convs
             + 2 * B * Pp * C_all * Nout                 # fused fc1/head contraction
             + 2 * B * U + 4 * B * NH * A)               # value MLP + dueling combine
    bytes_acc = 4 * (xg.size + kp["mask"].size + kp["wcb"].size + kp["wres"].size
                     + kp["w1x1"].size + kp["whz"].size + kp["bv1"].size
                     + kp["wv2"].size + kp["bv2"].size + kp["bh"].size + B * NH * A)

    kern = _make_fused_kernel(B=B, Pp=Pp, Gs=Gs, Wp=Wp, F=F, R=R,
                              C_all=C_all, U=U, NH=NH, A=A)
    # VMEM footprint is only a few hundred KiB; no grid needed at these shapes.
    # (Re-tile over batch / rows before scaling B, H, W, num_filters.)
    q = pl.pallas_call(
        kern,
        out_shape=jax.ShapeDtypeStruct((B, NH * A), jnp.float32),
        in_specs=[pl.BlockSpec(memory_space=pltpu.MemorySpace.VMEM)] * 10,
        out_specs=pl.BlockSpec(memory_space=pltpu.MemorySpace.VMEM),
        scratch_shapes=[pltpu.VMEM((P + 2 * Gs, F), jnp.float32),     # feat
                        pltpu.VMEM((P + 2 * Gs, F), jnp.float32),     # tmp
                        pltpu.VMEM((P, 9 * F), jnp.float32)],         # im2col
        cost_estimate=pl.CostEstimate(flops=int(flops), transcendentals=0,
                                      bytes_accessed=int(bytes_acc)),
    )(xg, kp["mask"], kp["wcb"], kp["wres"], kp["w1x1"], kp["whz"],
      kp["bv1"], kp["wv2"], kp["bv2"], kp["bh"])

    return [q[:, hd * A:(hd + 1) * A][:, None, :] for hd in range(NH)]


# ----------------------------------------------------------------------------
# Pure-JAX reference (mirrors the PyTorch module) for correctness check
# ----------------------------------------------------------------------------
def _reference_forward(params, x_nchw):
    PREC = jax.lax.Precision.HIGHEST
    x = jnp.transpose(x_nchw, (0, 2, 3, 1)).astype(jnp.float32)
    B, H, W, _ = x.shape

    def conv3x3(inp, w_oihw):
        xpad = jnp.pad(inp, ((0, 0), (1, 1), (1, 1), (0, 0)))
        out = jnp.zeros(inp.shape[:3] + (w_oihw.shape[0],), jnp.float32)
        for kh in range(3):
            for kw in range(3):
                patch = xpad[:, kh:kh + H, kw:kw + W, :]
                out = out + jnp.einsum('bhwi,oi->bhwo', patch,
                                       w_oihw[:, :, kh, kw], precision=PREC)
        return out

    feat = jax.nn.relu(conv3x3(x, params["conv_block_w"]))
    for (w1, w2) in params["res"]:
        out = jax.nn.relu(conv3x3(feat, w1))
        out = conv3x3(out, w2)
        feat = jax.nn.relu(out + feat)

    v = jax.nn.relu(jnp.einsum('bhwi,oi->bhwo', feat,
                               params["value_conv_w"][:, :, 0, 0], precision=PREC))
    v_flat = v[..., 0].reshape(B, H * W)
    h1 = jax.nn.relu(jnp.dot(v_flat, params["value_fc1_w"].T, precision=PREC)
                     + params["value_fc1_b"])
    value = jnp.dot(h1, params["value_fc2_w"].T, precision=PREC) + params["value_fc2_b"]

    outs = []
    for (cw, lw, lb) in params["heads"]:
        a = jax.nn.relu(jnp.einsum('bhwi,oi->bhwo', feat, cw[:, :, 0, 0],
                                   precision=PREC))
        a_flat = jnp.transpose(a, (0, 3, 1, 2)).reshape(B, 2 * H * W)
        adv = jnp.dot(a_flat, lw.T, precision=PREC) + lb
        q = value + adv - adv.mean(axis=-1, keepdims=True)
        outs.append(q[:, None, :])
    return outs


# ----------------------------------------------------------------------------
if __name__ == "__main__":
    key = jax.random.PRNGKey(0)

    # small shapes consistent with DDQN.__init__: input_shape=(c,h,w), one-hot
    # over num_category categories => conv in_channels = c * num_category.
    B = 2
    c, num_category = 2, 2
    H = W = 5
    num_actions = 8
    num_head = 2
    num_res_block = 2
    num_filters = 32
    num_fc_units = 32
    in_channels = c * num_category

    pkey, xkey = jax.random.split(key)
    params = init_params(pkey, in_channels, H, W, num_actions, num_head,
                         num_res_block, num_filters, num_fc_units)
    kparams = prepare_params(params, H, W, batch_size=B)
    x = jax.random.normal(xkey, (B, in_channels, H, W), jnp.float32)

    outs = ddqn_forward(kparams, x)
    outs = [jax.block_until_ready(o) for o in outs]

    assert len(outs) == num_head
    assert all(o.shape == (B, 1, num_actions) for o in outs)
    assert all(bool(jnp.all(jnp.isfinite(o))) for o in outs)

    # numerical check against a pure-JAX re-implementation of the module
    refs = _reference_forward(params, x)
    for o, r in zip(outs, refs):
        assert bool(jnp.allclose(o, r, atol=5e-3, rtol=5e-3)), \
            float(jnp.max(jnp.abs(o - r)))

    print("KERNEL_OK")
</pallas_src>

<mosaic_0001>
module attributes {stable_mosaic.version = 11 : i64} {
  func.func @kernel(%arg0: memref<224x32xf32, #tpu.memory_space<vmem>>, %arg1: memref<112x1xf32, #tpu.memory_space<vmem>>, %arg2: memref<288x32xf32, #tpu.memory_space<vmem>>, %arg3: memref<1152x32xf32, #tpu.memory_space<vmem>>, %arg4: memref<32x5xf32, #tpu.memory_space<vmem>>, %arg5: memref<280x48xf32, #tpu.memory_space<vmem>>, %arg6: memref<1x32xf32, #tpu.memory_space<vmem>>, %arg7: memref<1x32xf32, #tpu.memory_space<vmem>>, %arg8: memref<1x1xf32, #tpu.memory_space<vmem>>, %arg9: memref<1x16xf32, #tpu.memory_space<vmem>>, %arg10: memref<2x16xf32, #tpu.memory_space<vmem>>, %arg11: memref<144x32xf32, #tpu.memory_space<vmem>>, %arg12: memref<144x32xf32, #tpu.memory_space<vmem>>, %arg13: memref<112x288xf32, #tpu.memory_space<vmem>>) attributes {dimension_semantics = [], scalar_prefetch = 0 : i64, scratch_operands = 3 : i64, tpu.core_type = #tpu.core_type<tc>} {
    %cst = arith.constant 0.000000e+00 : f32
    %0 = vector.broadcast %cst : f32 to vector<16x32xf32>
    %c0 = arith.constant 0 : index
    %c0_0 = arith.constant 0 : index
    %1 = vector.load %arg11[%c0, %c0_0] : memref<144x32xf32, #tpu.memory_space<vmem>>, vector<16x32xf32>
    tpu.vector_store %arg11[%c0, %c0_0], %0 {strides = array<i32>} : memref<144x32xf32, #tpu.memory_space<vmem>>, vector<16x32xf32>,
    %c128 = arith.constant 128 : index
    %c0_1 = arith.constant 0 : index
    %2 = vector.load %arg11[%c128, %c0_1] : memref<144x32xf32, #tpu.memory_space<vmem>>, vector<16x32xf32>
    tpu.vector_store %arg11[%c128, %c0_1], %0 {strides = array<i32>} : memref<144x32xf32, #tpu.memory_space<vmem>>, vector<16x32xf32>,
    %c0_2 = arith.constant 0 : index
    %c0_3 = arith.constant 0 : index
    %3 = vector.load %arg12[%c0_2, %c0_3] : memref<144x32xf32, #tpu.memory_space<vmem>>, vector<16x32xf32>
    tpu.vector_store %arg12[%c0_2, %c0_3], %0 {strides = array<i32>} : memref<144x32xf32, #tpu.memory_space<vmem>>, vector<16x32xf32>,
    %c128_4 = arith.constant 128 : index
    %c0_5 = arith.constant 0 : index
    %4 = vector.load %arg12[%c128_4, %c0_5] : memref<144x32xf32, #tpu.memory_space<vmem>>, vector<16x32xf32>
    tpu.vector_store %arg12[%c128_4, %c0_5], %0 {strides = array<i32>} : memref<144x32xf32, #tpu.memory_space<vmem>>, vector<16x32xf32>,
    %c0_6 = arith.constant 0 : index
    %c0_7 = arith.constant 0 : index
    %5 = vector.load %arg1[%c0_6, %c0_7] : memref<112x1xf32, #tpu.memory_space<vmem>>, vector<112x1xf32>
    %6 = vector.shape_cast %5 : vector<112x1xf32> to vector<112x1xf32>
    %7 = vector.broadcast %6 : vector<112x1xf32> to vector<112x32xf32>
    %c0_8 = arith.constant 0 : index
    %c0_9 = arith.constant 0 : index
    %8 = vector.load %arg2[%c0_8, %c0_9] : memref<288x32xf32, #tpu.memory_space<vmem>>, vector<288x32xf32>
    %c47 = arith.constant 47 : index
    %c0_10 = arith.constant 0 : index
    %9 = vector.load %arg0[%c47, %c0_10] : memref<224x32xf32, #tpu.memory_space<vmem>>, vector<112x32xf32>
    %c0_11 = arith.constant 0 : index
    %c0_12 = arith.constant 0 : index
    %10 = vector.load %arg13[%c0_11, %c0_12] : memref<112x288xf32, #tpu.memory_space<vmem>>, vector<112x32xf32>
    tpu.vector_store %arg13[%c0_11, %c0_12], %9 {strides = array<i32>} : memref<112x288xf32, #tpu.memory_space<vmem>>, vector<112x32xf32>,
    %c48 = arith.constant 48 : index
    %c0_13 = arith.constant 0 : index
    %11 = vector.load %arg0[%c48, %c0_13] : memref<224x32xf32, #tpu.memory_space<vmem>>, vector<112x32xf32>
    %c0_14 = arith.constant 0 : index
    %c32 = arith.constant 32 : index
    %12 = vector.load %arg13[%c0_14, %c32] : memref<112x288xf32, #tpu.memory_space<vmem>>, vector<112x32xf32>
    tpu.vector_store %arg13[%c0_14, %c32], %11 {strides = array<i32>} : memref<112x288xf32, #tpu.memory_space<vmem>>, vector<112x32xf32>,
    %c49 = arith.constant 49 : index
    %c0_15 = arith.constant 0 : index
    %13 = vector.load %arg0[%c49, %c0_15] : memref<224x32xf32, #tpu.memory_space<vmem>>, vector<112x32xf32>
    %c0_16 = arith.constant 0 : index
    %c64 = arith.constant 64 : index
    %14 = vector.load %arg13[%c0_16, %c64] : memref<112x288xf32, #tpu.memory_space<vmem>>, vector<112x32xf32>
    tpu.vector_store %arg13[%c0_16, %c64], %13 {strides = array<i32>} : memref<112x288xf32, #tpu.memory_space<vmem>>, vector<112x32xf32>,
    %c55 = arith.constant 55 : index
    %c0_17 = arith.constant 0 : index
    %15 = vector.load %arg0[%c55, %c0_17] : memref<224x32xf32, #tpu.memory_space<vmem>>, vector<112x32xf32>
    %c0_18 = arith.constant 0 : index
    %c96 = arith.constant 96 : index
    %16 = vector.load %arg13[%c0_18, %c96] : memref<112x288xf32, #tpu.memory_space<vmem>>, vector<112x32xf32>
    tpu.vector_store %arg13[%c0_18, %c96], %15 {strides = array<i32>} : memref<112x288xf32, #tpu.memory_space<vmem>>, vector<112x32xf32>,
    %c56 = arith.constant 56 : index
    %c0_19 = arith.constant 0 : index
    %17 = vector.load %arg0[%c56, %c0_19] : memref<224x32xf32, #tpu.memory_space<vmem>>, vector<112x32xf32>
    %c0_20 = arith.constant 0 : index
    %c128_21 = arith.constant 128 : index
    %18 = vector.load %arg13[%c0_20, %c128_21] : memref<112x288xf32, #tpu.memory_space<vmem>>, vector<112x32xf32>
    tpu.vector_store %arg13[%c0_20, %c128_21], %17 {strides = array<i32>} : memref<112x288xf32, #tpu.memory_space<vmem>>, vector<112x32xf32>,
    %c57 = arith.constant 57 : index
    %c0_22 = arith.constant 0 : index
    %19 = vector.load %arg0[%c57, %c0_22] : memref<224x32xf32, #tpu.memory_space<vmem>>, vector<112x32xf32>
    %c0_23 = arith.constant 0 : index
    %c160 = arith.constant 160 : index
    %20 = vector.load %arg13[%c0_23, %c160] : memref<112x288xf32, #tpu.memory_space<vmem>>, vector<112x32xf32>
    tpu.vector_store %arg13[%c0_23, %c160], %19 {strides = array<i32>} : memref<112x288xf32, #tpu.memory_space<vmem>>, vector<112x32xf32>,
    %c63 = arith.constant 63 : index
    %c0_24 = arith.constant 0 : index
    %21 = vector.load %arg0[%c63, %c0_24] : memref<224x32xf32, #tpu.memory_space<vmem>>, vector<112x32xf32>
    %c0_25 = arith.constant 0 : index
    %c192 = arith.constant 192 : index
    %22 = vector.load %arg13[%c0_25, %c192] : memref<112x288xf32, #tpu.memory_space<vmem>>, vector<112x32xf32>
    tpu.vector_store %arg13[%c0_25, %c192], %21 {strides = array<i32>} : memref<112x288xf32, #tpu.memory_space<vmem>>, vector<112x32xf32>,
    %c64_26 = arith.constant 64 : index
    %c0_27 = arith.constant 0 : index
    %23 = vector.load %arg0[%c64_26, %c0_27] : memref<224x32xf32, #tpu.memory_space<vmem>>, vector<112x32xf32>
    %c0_28 = arith.constant 0 : index
    %c224 = arith.constant 224 : index
    %24 = vector.load %arg13[%c0_28, %c224] : memref<112x288xf32, #tpu.memory_space<vmem>>, vector<112x32xf32>
    tpu.vector_store %arg13[%c0_28, %c224], %23 {strides = array<i32>} : memref<112x288xf32, #tpu.memory_space<vmem>>, vector<112x32xf32>,
    %c65 = arith.constant 65 : index
    %c0_29 = arith.constant 0 : index
    %25 = vector.load %arg0[%c65, %c0_29] : memref<224x32xf32, #tpu.memory_space<vmem>>, vector<112x32xf32>
    %c0_30 = arith.constant 0 : index
    %c256 = arith.constant 256 : index
    %26 = vector.load %arg13[%c0_30, %c256] : memref<112x288xf32, #tpu.memory_space<vmem>>, vector<112x32xf32>
    tpu.vector_store %arg13[%c0_30, %c256], %25 {strides = array<i32>} : memref<112x288xf32, #tpu.memory_space<vmem>>, vector<112x32xf32>,
    %c0_31 = arith.constant 0 : index
    %c0_32 = arith.constant 0 : index
    %27 = vector.load %arg13[%c0_31, %c0_32] : memref<112x288xf32, #tpu.memory_space<vmem>>, vector<112x288xf32>
    %cst_33 = arith.constant dense<0.000000e+00> : vector<112x32xf32>
    %28 = tpu.matmul %27, %8, %cst_33 {dimension_numbers = #tpu.dot_dimension_numbers<[1], [0], [0], [1], [0, 0, 1, 1], [], []>} : vector<112x288xf32>, vector<288x32xf32>, vector<112x32xf32> -> vector<112x32xf32>
    %cst_34 = arith.constant 0.000000e+00 : f32
    %29 = vector.broadcast %cst_34 : f32 to vector<112x32xf32>
    %30 = arith.maximumf %28, %29 : vector<112x32xf32>
    %31 = arith.mulf %30, %7 : vector<112x32xf32>
    %c16 = arith.constant 16 : index
    %c0_35 = arith.constant 0 : index
    %32 = vector.load %arg11[%c16, %c0_35] : memref<144x32xf32, #tpu.memory_space<vmem>>, vector<112x32xf32>
    tpu.vector_store %arg11[%c16, %c0_35], %31 {strides = array<i32>} : memref<144x32xf32, #tpu.memory_space<vmem>>, vector<112x32xf32>,
    %c0_36 = arith.constant 0 : index
    %c0_37 = arith.constant 0 : index
    %33 = vector.load %arg3[%c0_36, %c0_37] : memref<1152x32xf32, #tpu.memory_space<vmem>>, vector<288x32xf32>
    %c288 = arith.constant 288 : index
    %c0_38 = arith.constant 0 : index
    %34 = vector.load %arg3[%c288, %c0_38] : memref<1152x32xf32, #tpu.memory_space<vmem>>, vector<288x32xf32>
    %c7 = arith.constant 7 : index
    %c0_39 = arith.constant 0 : index
    %35 = vector.load %arg11[%c7, %c0_39] : memref<144x32xf32, #tpu.memory_space<vmem>>, vector<112x32xf32>
    %c0_40 = arith.constant 0 : index
    %c0_41 = arith.constant 0 : index
    %36 = vector.load %arg13[%c0_40, %c0_41] : memref<112x288xf32, #tpu.memory_space<vmem>>, vector<112x32xf32>
    tpu.vector_store %arg13[%c0_40, %c0_41], %35 {strides = array<i32>} : memref<112x288xf32, #tpu.memory_space<vmem>>, vector<112x32xf32>,
    %c8 = arith.constant 8 : index
    %c0_42 = arith.constant 0 : index
    %37 = vector.load %arg11[%c8, %c0_42] : memref<144x32xf32, #tpu.memory_space<vmem>>, vector<112x32xf32>
    %c0_43 = arith.constant 0 : index
    %c32_44 = arith.constant 32 : index
    %38 = vector.load %arg13[%c0_43, %c32_44] : memref<112x288xf32, #tpu.memory_space<vmem>>, vector<112x32xf32>
    tpu.vector_store %arg13[%c0_43, %c32_44], %37 {strides = array<i32>} : memref<112x288xf32, #tpu.memory_space<vmem>>, vector<112x32xf32>,
    %c9 = arith.constant 9 : index
    %c0_45 = arith.constant 0 : index
    %39 = vector.load %arg11[%c9, %c0_45] : memref<144x32xf32, #tpu.memory_space<vmem>>, vector<112x32xf32>
    %c0_46 = arith.constant 0 : index
    %c64_47 = arith.constant 64 : index
    %40 = vector.load %arg13[%c0_46, %c64_47] : memref<112x288xf32, #tpu.memory_space<vmem>>, vector<112x32xf32>
    tpu.vector_store %arg13[%c0_46, %c64_47], %39 {strides = array<i32>} : memref<112x288xf32, #tpu.memory_space<vmem>>, vector<112x32xf32>,
    %c15 = arith.constant 15 : index
    %c0_48 = arith.constant 0 : index
    %41 = vector.load %arg11[%c15, %c0_48] : memref<144x32xf32, #tpu.memory_space<vmem>>, vector<112x32xf32>
    %c0_49 = arith.constant 0 : index
    %c96_50 = arith.constant 96 : index
    %42 = vector.load %arg13[%c0_49, %c96_50] : memref<112x288xf32, #tpu.memory_space<vmem>>, vector<112x32xf32>
    tpu.vector_store %arg13[%c0_49, %c96_50], %41 {strides = array<i32>} : memref<112x288xf32, #tpu.memory_space<vmem>>, vector<112x32xf32>,
    %c16_51 = arith.constant 16 : index
    %c0_52 = arith.constant 0 : index
    %43 = vector.load %arg11[%c16_51, %c0_52] : memref<144x32xf32, #tpu.memory_space<vmem>>, vector<112x32xf32>
    %c0_53 = arith.constant 0 : index
    %c128_54 = arith.constant 128 : index
    %44 = vector.load %arg13[%c0_53, %c128_54] : memref<112x288xf32, #tpu.memory_space<vmem>>, vector<112x32xf32>
    tpu.vector_store %arg13[%c0_53, %c128_54], %43 {strides = array<i32>} : memref<112x288xf32, #tpu.memory_space<vmem>>, vector<112x32xf32>,
    %c17 = arith.constant 17 : index
    %c0_55 = arith.constant 0 : index
    %45 = vector.load %arg11[%c17, %c0_55] : memref<144x32xf32, #tpu.memory_space<vmem>>, vector<112x32xf32>
    %c0_56 = arith.constant 0 : index
    %c160_57 = arith.constant 160 : index
    %46 = vector.load %arg13[%c0_56, %c160_57] : memref<112x288xf32, #tpu.memory_space<vmem>>, vector<112x32xf32>
    tpu.vector_store %arg13[%c0_56, %c160_57], %45 {strides = array<i32>} : memref<112x288xf32, #tpu.memory_space<vmem>>, vector<112x32xf32>,
    %c23 = arith.constant 23 : index
    %c0_58 = arith.constant 0 : index
    %47 = vector.load %arg11[%c23, %c0_58] : memref<144x32xf32, #tpu.memory_space<vmem>>, vector<112x32xf32>
    %c0_59 = arith.constant 0 : index
    %c192_60 = arith.constant 192 : index
    %48 = vector.load %arg13[%c0_59, %c192_60] : memref<112x288xf32, #tpu.memory_space<vmem>>, vector<112x32xf32>
    tpu.vector_store %arg13[%c0_59, %c192_60], %47 {strides = array<i32>} : memref<112x288xf32, #tpu.memory_space<vmem>>, vector<112x32xf32>,
    %c24 = arith.constant 24 : index
    %c0_61 = arith.constant 0 : index
    %49 = vector.load %arg11[%c24, %c0_61] : memref<144x32xf32, #tpu.memory_space<vmem>>, vector<112x32xf32>
    %c0_62 = arith.constant 0 : index
    %c224_63 = arith.constant 224 : index
    %50 = vector.load %arg13[%c0_62, %c224_63] : memref<112x288xf32, #tpu.memory_space<vmem>>, vector<112x32xf32>
    tpu.vector_store %arg13[%c0_62, %c224_63], %49 {strides = array<i32>} : memref<112x288xf32, #tpu.memory_space<vmem>>, vector<112x32xf32>,
    %c25 = arith.constant 25 : index
    %c0_64 = arith.constant 0 : index
    %51 = vector.load %arg11[%c25, %c0_64] : memref<144x32xf32, #tpu.memory_space<vmem>>, vector<112x32xf32>
    %c0_65 = arith.constant 0 : index
    %c256_66 = arith.constant 256 : index
    %52 = vector.load %arg13[%c0_65, %c256_66] : memref<112x288xf32, #tpu.memory_space<vmem>>, vector<112x32xf32>
    tpu.vector_store %arg13[%c0_65, %c256_66], %51 {strides = array<i32>} : memref<112x288xf32, #tpu.memory_space<vmem>>, vector<112x32xf32>,
    %c0_67 = arith.constant 0 : index
    %c0_68 = arith.constant 0 : index
    %53 = vector.load %arg13[%c0_67, %c0_68] : memref<112x288xf32, #tpu.memory_space<vmem>>, vector<112x288xf32>
    %cst_69 = arith.constant dense<0.000000e+00> : vector<112x32xf32>
    %54 = tpu.matmul %53, %33, %cst_69 {dimension_numbers = #tpu.dot_dimension_numbers<[1], [0], [0], [1], [0, 0, 1, 1], [], []>} : vector<112x288xf32>, vector<288x32xf32>, vector<112x32xf32> -> vector<112x32xf32>
    %cst_70 = arith.constant 0.000000e+00 : f32
    %55 = vector.broadcast %cst_70 : f32 to vector<112x32xf32>
    %56 = arith.maximumf %54, %55 : vector<112x32xf32>
    %57 = arith.mulf %56, %7 : vector<112x32xf32>
    %c16_71 = arith.constant 16 : index
    %c0_72 = arith.constant 0 : index
    %58 = vector.load %arg12[%c16_71, %c0_72] : memref<144x32xf32, #tpu.memory_space<vmem>>, vector<112x32xf32>
    tpu.vector_store %arg12[%c16_71, %c0_72], %57 {strides = array<i32>} : memref<144x32xf32, #tpu.memory_space<vmem>>, vector<112x32xf32>,
    %c7_73 = arith.constant 7 : index
    %c0_74 = arith.constant 0 : index
    %59 = vector.load %arg12[%c7_73, %c0_74] : memref<144x32xf32, #tpu.memory_space<vmem>>, vector<112x32xf32>
    %c0_75 = arith.constant 0 : index
    %c0_76 = arith.constant 0 : index
    %60 = vector.load %arg13[%c0_75, %c0_76] : memref<112x288xf32, #tpu.memory_space<vmem>>, vector<112x32xf32>
    tpu.vector_store %arg13[%c0_75, %c0_76], %59 {strides = array<i32>} : memref<112x288xf32, #tpu.memory_space<vmem>>, vector<112x32xf32>,
    %c8_77 = arith.constant 8 : index
    %c0_78 = arith.constant 0 : index
    %61 = vector.load %arg12[%c8_77, %c0_78] : memref<144x32xf32, #tpu.memory_space<vmem>>, vector<112x32xf32>
    %c0_79 = arith.constant 0 : index
    %c32_80 = arith.constant 32 : index
    %62 = vector.load %arg13[%c0_79, %c32_80] : memref<112x288xf32, #tpu.memory_space<vmem>>, vector<112x32xf32>
    tpu.vector_store %arg13[%c0_79, %c32_80], %61 {strides = array<i32>} : memref<112x288xf32, #tpu.memory_space<vmem>>, vector<112x32xf32>,
    %c9_81 = arith.constant 9 : index
    %c0_82 = arith.constant 0 : index
    %63 = vector.load %arg12[%c9_81, %c0_82] : memref<144x32xf32, #tpu.memory_space<vmem>>, vector<112x32xf32>
    %c0_83 = arith.constant 0 : index
    %c64_84 = arith.constant 64 : index
    %64 = vector.load %arg13[%c0_83, %c64_84] : memref<112x288xf32, #tpu.memory_space<vmem>>, vector<112x32xf32>
    tpu.vector_store %arg13[%c0_83, %c64_84], %63 {strides = array<i32>} : memref<112x288xf32, #tpu.memory_space<vmem>>, vector<112x32xf32>,
    %c15_85 = arith.constant 15 : index
    %c0_86 = arith.constant 0 : index
    %65 = vector.load %arg12[%c15_85, %c0_86] : memref<144x32xf32, #tpu.memory_space<vmem>>, vector<112x32xf32>
    %c0_87 = arith.constant 0 : index
    %c96_88 = arith.constant 96 : index
    %66 = vector.load %arg13[%c0_87, %c96_88] : memref<112x288xf32, #tpu.memory_space<vmem>>, vector<112x32xf32>
    tpu.vector_store %arg13[%c0_87, %c96_88], %65 {strides = array<i32>} : memref<112x288xf32, #tpu.memory_space<vmem>>, vector<112x32xf32>,
    %c16_89 = arith.constant 16 : index
    %c0_90 = arith.constant 0 : index
    %67 = vector.load %arg12[%c16_89, %c0_90] : memref<144x32xf32, #tpu.memory_space<vmem>>, vector<112x32xf32>
    %c0_91 = arith.constant 0 : index
    %c128_92 = arith.constant 128 : index
    %68 = vector.load %arg13[%c0_91, %c128_92] : memref<112x288xf32, #tpu.memory_space<vmem>>, vector<112x32xf32>
    tpu.vector_store %arg13[%c0_91, %c128_92], %67 {strides = array<i32>} : memref<112x288xf32, #tpu.memory_space<vmem>>, vector<112x32xf32>,
    %c17_93 = arith.constant 17 : index
    %c0_94 = arith.constant 0 : index
    %69 = vector.load %arg12[%c17_93, %c0_94] : memref<144x32xf32, #tpu.memory_space<vmem>>, vector<112x32xf32>
    %c0_95 = arith.constant 0 : index
    %c160_96 = arith.constant 160 : index
    %70 = vector.load %arg13[%c0_95, %c160_96] : memref<112x288xf32, #tpu.memory_space<vmem>>, vector<112x32xf32>
    tpu.vector_store %arg13[%c0_95, %c160_96], %69 {strides = array<i32>} : memref<112x288xf32, #tpu.memory_space<vmem>>, vector<112x32xf32>,
    %c23_97 = arith.constant 23 : index
    %c0_98 = arith.constant 0 : index
    %71 = vector.load %arg12[%c23_97, %c0_98] : memref<144x32xf32, #tpu.memory_space<vmem>>, vector<112x32xf32>
    %c0_99 = arith.constant 0 : index
    %c192_100 = arith.constant 192 : index
    %72 = vector.load %arg13[%c0_99, %c192_100] : memref<112x288xf32, #tpu.memory_space<vmem>>, vector<112x32xf32>
    tpu.vector_store %arg13[%c0_99, %c192_100], %71 {strides = array<i32>} : memref<112x288xf32, #tpu.memory_space<vmem>>, vector<112x32xf32>,
    %c24_101 = arith.constant 24 : index
    %c0_102 = arith.constant 0 : index
    %73 = vector.load %arg12[%c24_101, %c0_102] : memref<144x32xf32, #tpu.memory_space<vmem>>, vector<112x32xf32>
    %c0_103 = arith.constant 0 : index
    %c224_104 = arith.constant 224 : index
    %74 = vector.load %arg13[%c0_103, %c224_104] : memref<112x288xf32, #tpu.memory_space<vmem>>, vector<112x32xf32>
    tpu.vector_store %arg13[%c0_103, %c224_104], %73 {strides = array<i32>} : memref<112x288xf32, #tpu.memory_space<vmem>>, vector<112x32xf32>,
    %c25_105 = arith.constant 25 : index
    %c0_106 = arith.constant 0 : index
    %75 = vector.load %arg12[%c25_105, %c0_106] : memref<144x32xf32, #tpu.memory_space<vmem>>, vector<112x32xf32>
    %c0_107 = arith.constant 0 : index
    %c256_108 = arith.constant 256 : index
    %76 = vector.load %arg13[%c0_107, %c256_108] : memref<112x288xf32, #tpu.memory_space<vmem>>, vector<112x32xf32>
    tpu.vector_store %arg13[%c0_107, %c256_108], %75 {strides = array<i32>} : memref<112x288xf32, #tpu.memory_space<vmem>>, vector<112x32xf32>,
    %c0_109 = arith.constant 0 : index
    %c0_110 = arith.constant 0 : index
    %77 = vector.load %arg13[%c0_109, %c0_110] : memref<112x288xf32, #tpu.memory_space<vmem>>, vector<112x288xf32>
    %cst_111 = arith.constant dense<0.000000e+00> : vector<112x32xf32>
    %78 = tpu.matmul %77, %34, %cst_111 {dimension_numbers = #tpu.dot_dimension_numbers<[1], [0], [0], [1], [0, 0, 1, 1], [], []>} : vector<112x288xf32>, vector<288x32xf32>, vector<112x32xf32> -> vector<112x32xf32>
    %c16_112 = arith.constant 16 : index
    %c0_113 = arith.constant 0 : index
    %79 = vector.load %arg11[%c16_112, %c0_113] : memref<144x32xf32, #tpu.memory_space<vmem>>, vector<112x32xf32>
    %80 = arith.addf %78, %79 : vector<112x32xf32>
    %cst_114 = arith.constant 0.000000e+00 : f32
    %81 = vector.broadcast %cst_114 : f32 to vector<112x32xf32>
    %82 = arith.maximumf %80, %81 : vector<112x32xf32>
    %83 = arith.mulf %82, %7 : vector<112x32xf32>
    %c16_115 = arith.constant 16 : index
    %c0_116 = arith.constant 0 : index
    %84 = vector.load %arg11[%c16_115, %c0_116] : memref<144x32xf32, #tpu.memory_space<vmem>>, vector<112x32xf32>
    tpu.vector_store %arg11[%c16_115, %c0_116], %83 {strides = array<i32>} : memref<144x32xf32, #tpu.memory_space<vmem>>, vector<112x32xf32>,
    %c576 = arith.constant 576 : index
    %c0_117 = arith.constant 0 : index
    %85 = vector.load %arg3[%c576, %c0_117] : memref<1152x32xf32, #tpu.memory_space<vmem>>, vector<288x32xf32>
    %c864 = arith.constant 864 : index
    %c0_118 = arith.constant 0 : index
    %86 = vector.load %arg3[%c864, %c0_118] : memref<1152x32xf32, #tpu.memory_space<vmem>>, vector<288x32xf32>
    %c7_119 = arith.constant 7 : index
    %c0_120 = arith.constant 0 : index
    %87 = vector.load %arg11[%c7_119, %c0_120] : memref<144x32xf32, #tpu.memory_space<vmem>>, vector<112x32xf32>
    %c0_121 = arith.constant 0 : index
    %c0_122 = arith.constant 0 : index
    %88 = vector.load %arg13[%c0_121, %c0_122] : memref<112x288xf32, #tpu.memory_space<vmem>>, vector<112x32xf32>
    tpu.vector_store %arg13[%c0_121, %c0_122], %87 {strides = array<i32>} : memref<112x288xf32, #tpu.memory_space<vmem>>, vector<112x32xf32>,
    %c8_123 = arith.constant 8 : index
    %c0_124 = arith.constant 0 : index
    %89 = vector.load %arg11[%c8_123, %c0_124] : memref<144x32xf32, #tpu.memory_space<vmem>>, vector<112x32xf32>
    %c0_125 = arith.constant 0 : index
    %c32_126 = arith.constant 32 : index
    %90 = vector.load %arg13[%c0_125, %c32_126] : memref<112x288xf32, #tpu.memory_space<vmem>>, vector<112x32xf32>
    tpu.vector_store %arg13[%c0_125, %c32_126], %89 {strides = array<i32>} : memref<112x288xf32, #tpu.memory_space<vmem>>, vector<112x32xf32>,
    %c9_127 = arith.constant 9 : index
    %c0_128 = arith.constant 0 : index
    %91 = vector.load %arg11[%c9_127, %c0_128] : memref<144x32xf32, #tpu.memory_space<vmem>>, vector<112x32xf32>
    %c0_129 = arith.constant 0 : index
    %c64_130 = arith.constant 64 : index
    %92 = vector.load %arg13[%c0_129, %c64_130] : memref<112x288xf32, #tpu.memory_space<vmem>>, vector<112x32xf32>
    tpu.vector_store %arg13[%c0_129, %c64_130], %91 {strides = array<i32>} : memref<112x288xf32, #tpu.memory_space<vmem>>, vector<112x32xf32>,
    %c15_131 = arith.constant 15 : index
    %c0_132 = arith.constant 0 : index
    %93 = vector.load %arg11[%c15_131, %c0_132] : memref<144x32xf32, #tpu.memory_space<vmem>>, vector<112x32xf32>
    %c0_133 = arith.constant 0 : index
    %c96_134 = arith.constant 96 : index
    %94 = vector.load %arg13[%c0_133, %c96_134] : memref<112x288xf32, #tpu.memory_space<vmem>>, vector<112x32xf32>
    tpu.vector_store %arg13[%c0_133, %c96_134], %93 {strides = array<i32>} : memref<112x288xf32, #tpu.memory_space<vmem>>, vector<112x32xf32>,
    %c16_135 = arith.constant 16 : index
    %c0_136 = arith.constant 0 : index
    %95 = vector.load %arg11[%c16_135, %c0_136] : memref<144x32xf32, #tpu.memory_space<vmem>>, vector<112x32xf32>
    %c0_137 = arith.constant 0 : index
    %c128_138 = arith.constant 128 : index
    %96 = vector.load %arg13[%c0_137, %c128_138] : memref<112x288xf32, #tpu.memory_space<vmem>>, vector<112x32xf32>
    tpu.vector_store %arg13[%c0_137, %c128_138], %95 {strides = array<i32>} : memref<112x288xf32, #tpu.memory_space<vmem>>, vector<112x32xf32>,
    %c17_139 = arith.constant 17 : index
    %c0_140 = arith.constant 0 : index
    %97 = vector.load %arg11[%c17_139, %c0_140] : memref<144x32xf32, #tpu.memory_space<vmem>>, vector<112x32xf32>
    %c0_141 = arith.constant 0 : index
    %c160_142 = arith.constant 160 : index
    %98 = vector.load %arg13[%c0_141, %c160_142] : memref<112x288xf32, #tpu.memory_space<vmem>>, vector<112x32xf32>
    tpu.vector_store %arg13[%c0_141, %c160_142], %97 {strides = array<i32>} : memref<112x288xf32, #tpu.memory_space<vmem>>, vector<112x32xf32>,
    %c23_143 = arith.constant 23 : index
    %c0_144 = arith.constant 0 : index
    %99 = vector.load %arg11[%c23_143, %c0_144] : memref<144x32xf32, #tpu.memory_space<vmem>>, vector<112x32xf32>
    %c0_145 = arith.constant 0 : index
    %c192_146 = arith.constant 192 : index
    %100 = vector.load %arg13[%c0_145, %c192_146] : memref<112x288xf32, #tpu.memory_space<vmem>>, vector<112x32xf32>
    tpu.vector_store %arg13[%c0_145, %c192_146], %99 {strides = array<i32>} : memref<112x288xf32, #tpu.memory_space<vmem>>, vector<112x32xf32>,
    %c24_147 = arith.constant 24 : index
    %c0_148 = arith.constant 0 : index
    %101 = vector.load %arg11[%c24_147, %c0_148] : memref<144x32xf32, #tpu.memory_space<vmem>>, vector<112x32xf32>
    %c0_149 = arith.constant 0 : index
    %c224_150 = arith.constant 224 : index
    %102 = vector.load %arg13[%c0_149, %c224_150] : memref<112x288xf32, #tpu.memory_space<vmem>>, vector<112x32xf32>
    tpu.vector_store %arg13[%c0_149, %c224_150], %101 {strides = array<i32>} : memref<112x288xf32, #tpu.memory_space<vmem>>, vector<112x32xf32>,
    %c25_151 = arith.constant 25 : index
    %c0_152 = arith.constant 0 : index
    %103 = vector.load %arg11[%c25_151, %c0_152] : memref<144x32xf32, #tpu.memory_space<vmem>>, vector<112x32xf32>
    %c0_153 = arith.constant 0 : index
    %c256_154 = arith.constant 256 : index
    %104 = vector.load %arg13[%c0_153, %c256_154] : memref<112x288xf32, #tpu.memory_space<vmem>>, vector<112x32xf32>
    tpu.vector_store %arg13[%c0_153, %c256_154], %103 {strides = array<i32>} : memref<112x288xf32, #tpu.memory_space<vmem>>, vector<112x32xf32>,
    %c0_155 = arith.constant 0 : index
    %c0_156 = arith.constant 0 : index
    %105 = vector.load %arg13[%c0_155, %c0_156] : memref<112x288xf32, #tpu.memory_space<vmem>>, vector<112x288xf32>
    %cst_157 = arith.constant dense<0.000000e+00> : vector<112x32xf32>
    %106 = tpu.matmul %105, %85, %cst_157 {dimension_numbers = #tpu.dot_dimension_numbers<[1], [0], [0], [1], [0, 0, 1, 1], [], []>} : vector<112x288xf32>, vector<288x32xf32>, vector<112x32xf32> -> vector<112x32xf32>
    %cst_158 = arith.constant 0.000000e+00 : f32
    %107 = vector.broadcast %cst_158 : f32 to vector<112x32xf32>
    %108 = arith.maximumf %106, %107 : vector<112x32xf32>
    %109 = arith.mulf %108, %7 : vector<112x32xf32>
    %c16_159 = arith.constant 16 : index
    %c0_160 = arith.constant 0 : index
    %110 = vector.load %arg12[%c16_159, %c0_160] : memref<144x32xf32, #tpu.memory_space<vmem>>, vector<112x32xf32>
    tpu.vector_store %arg12[%c16_159, %c0_160], %109 {strides = array<i32>} : memref<144x32xf32, #tpu.memory_space<vmem>>, vector<112x32xf32>,
    %c7_161 = arith.constant 7 : index
    %c0_162 = arith.constant 0 : index
    %111 = vector.load %arg12[%c7_161, %c0_162] : memref<144x32xf32, #tpu.memory_space<vmem>>, vector<112x32xf32>
    %c0_163 = arith.constant 0 : index
    %c0_164 = arith.constant 0 : index
    %112 = vector.load %arg13[%c0_163, %c0_164] : memref<112x288xf32, #tpu.memory_space<vmem>>, vector<112x32xf32>
    tpu.vector_store %arg13[%c0_163, %c0_164], %111 {strides = array<i32>} : memref<112x288xf32, #tpu.memory_space<vmem>>, vector<112x32xf32>,
    %c8_165 = arith.constant 8 : index
    %c0_166 = arith.constant 0 : index
    %113 = vector.load %arg12[%c8_165, %c0_166] : memref<144x32xf32, #tpu.memory_space<vmem>>, vector<112x32xf32>
    %c0_167 = arith.constant 0 : index
    %c32_168 = arith.constant 32 : index
    %114 = vector.load %arg13[%c0_167, %c32_168] : memref<112x288xf32, #tpu.memory_space<vmem>>, vector<112x32xf32>
    tpu.vector_store %arg13[%c0_167, %c32_168], %113 {strides = array<i32>} : memref<112x288xf32, #tpu.memory_space<vmem>>, vector<112x32xf32>,
    %c9_169 = arith.constant 9 : index
    %c0_170 = arith.constant 0 : index
    %115 = vector.load %arg12[%c9_169, %c0_170] : memref<144x32xf32, #tpu.memory_space<vmem>>, vector<112x32xf32>
    %c0_171 = arith.constant 0 : index
    %c64_172 = arith.constant 64 : index
    %116 = vector.load %arg13[%c0_171, %c64_172] : memref<112x288xf32, #tpu.memory_space<vmem>>, vector<112x32xf32>
    tpu.vector_store %arg13[%c0_171, %c64_172], %115 {strides = array<i32>} : memref<112x288xf32, #tpu.memory_space<vmem>>, vector<112x32xf32>,
    %c15_173 = arith.constant 15 : index
    %c0_174 = arith.constant 0 : index
    %117 = vector.load %arg12[%c15_173, %c0_174] : memref<144x32xf32, #tpu.memory_space<vmem>>, vector<112x32xf32>
    %c0_175 = arith.constant 0 : index
    %c96_176 = arith.constant 96 : index
    %118 = vector.load %arg13[%c0_175, %c96_176] : memref<112x288xf32, #tpu.memory_space<vmem>>, vector<112x32xf32>
    tpu.vector_store %arg13[%c0_175, %c96_176], %117 {strides = array<i32>} : memref<112x288xf32, #tpu.memory_space<vmem>>, vector<112x32xf32>,
    %c16_177 = arith.constant 16 : index
    %c0_178 = arith.constant 0 : index
    %119 = vector.load %arg12[%c16_177, %c0_178] : memref<144x32xf32, #tpu.memory_space<vmem>>, vector<112x32xf32>
    %c0_179 = arith.constant 0 : index
    %c128_180 = arith.constant 128 : index
    %120 = vector.load %arg13[%c0_179, %c128_180] : memref<112x288xf32, #tpu.memory_space<vmem>>, vector<112x32xf32>
    tpu.vector_store %arg13[%c0_179, %c128_180], %119 {strides = array<i32>} : memref<112x288xf32, #tpu.memory_space<vmem>>, vector<112x32xf32>,
    %c17_181 = arith.constant 17 : index
    %c0_182 = arith.constant 0 : index
    %121 = vector.load %arg12[%c17_181, %c0_182] : memref<144x32xf32, #tpu.memory_space<vmem>>, vector<112x32xf32>
    %c0_183 = arith.constant 0 : index
    %c160_184 = arith.constant 160 : index
    %122 = vector.load %arg13[%c0_183, %c160_184] : memref<112x288xf32, #tpu.memory_space<vmem>>, vector<112x32xf32>
    tpu.vector_store %arg13[%c0_183, %c160_184], %121 {strides = array<i32>} : memref<112x288xf32, #tpu.memory_space<vmem>>, vector<112x32xf32>,
    %c23_185 = arith.constant 23 : index
    %c0_186 = arith.constant 0 : index
    %123 = vector.load %arg12[%c23_185, %c0_186] : memref<144x32xf32, #tpu.memory_space<vmem>>, vector<112x32xf32>
    %c0_187 = arith.constant 0 : index
    %c192_188 = arith.constant 192 : index
    %124 = vector.load %arg13[%c0_187, %c192_188] : memref<112x288xf32, #tpu.memory_space<vmem>>, vector<112x32xf32>
    tpu.vector_store %arg13[%c0_187, %c192_188], %123 {strides = array<i32>} : memref<112x288xf32, #tpu.memory_space<vmem>>, vector<112x32xf32>,
    %c24_189 = arith.constant 24 : index
    %c0_190 = arith.constant 0 : index
    %125 = vector.load %arg12[%c24_189, %c0_190] : memref<144x32xf32, #tpu.memory_space<vmem>>, vector<112x32xf32>
    %c0_191 = arith.constant 0 : index
    %c224_192 = arith.constant 224 : index
    %126 = vector.load %arg13[%c0_191, %c224_192] : memref<112x288xf32, #tpu.memory_space<vmem>>, vector<112x32xf32>
    tpu.vector_store %arg13[%c0_191, %c224_192], %125 {strides = array<i32>} : memref<112x288xf32, #tpu.memory_space<vmem>>, vector<112x32xf32>,
    %c25_193 = arith.constant 25 : index
    %c0_194 = arith.constant 0 : index
    %127 = vector.load %arg12[%c25_193, %c0_194] : memref<144x32xf32, #tpu.memory_space<vmem>>, vector<112x32xf32>
    %c0_195 = arith.constant 0 : index
    %c256_196 = arith.constant 256 : index
    %128 = vector.load %arg13[%c0_195, %c256_196] : memref<112x288xf32, #tpu.memory_space<vmem>>, vector<112x32xf32>
    tpu.vector_store %arg13[%c0_195, %c256_196], %127 {strides = array<i32>} : memref<112x288xf32, #tpu.memory_space<vmem>>, vector<112x32xf32>,
    %c0_197 = arith.constant 0 : index
    %c0_198 = arith.constant 0 : index
    %129 = vector.load %arg13[%c0_197, %c0_198] : memref<112x288xf32, #tpu.memory_space<vmem>>, vector<112x288xf32>
    %cst_199 = arith.constant dense<0.000000e+00> : vector<112x32xf32>
    %130 = tpu.matmul %129, %86, %cst_199 {dimension_numbers = #tpu.dot_dimension_numbers<[1], [0], [0], [1], [0, 0, 1, 1], [], []>} : vector<112x288xf32>, vector<288x32xf32>, vector<112x32xf32> -> vector<112x32xf32>
    %c16_200 = arith.constant 16 : index
    %c0_201 = arith.constant 0 : index
    %131 = vector.load %arg11[%c16_200, %c0_201] : memref<144x32xf32, #tpu.memory_space<vmem>>, vector<112x32xf32>
    %132 = arith.addf %130, %131 : vector<112x32xf32>
    %cst_202 = arith.constant 0.000000e+00 : f32
    %133 = vector.broadcast %cst_202 : f32 to vector<112x32xf32>
    %134 = arith.maximumf %132, %133 : vector<112x32xf32>
    %135 = arith.mulf %134, %7 : vector<112x32xf32>
    %c16_203 = arith.constant 16 : index
    %c0_204 = arith.constant 0 : index
    %136 = vector.load %arg11[%c16_203, %c0_204] : memref<144x32xf32, #tpu.memory_space<vmem>>, vector<112x32xf32>
    tpu.vector_store %arg11[%c16_203, %c0_204], %135 {strides = array<i32>} : memref<144x32xf32, #tpu.memory_space<vmem>>, vector<112x32xf32>,
    %c16_205 = arith.constant 16 : index
    %c0_206 = arith.constant 0 : index
    %137 = vector.load %arg11[%c16_205, %c0_206] : memref<144x32xf32, #tpu.memory_space<vmem>>, vector<112x32xf32>
    %c0_207 = arith.constant 0 : index
    %c0_208 = arith.constant 0 : index
    %138 = vector.load %arg4[%c0_207, %c0_208] : memref<32x5xf32, #tpu.memory_space<vmem>>, vector<32x5xf32>
    %cst_209 = arith.constant dense<0.000000e+00> : vector<112x5xf32>
    %139 = tpu.matmul %137, %138, %cst_209 {dimension_numbers = #tpu.dot_dimension_numbers<[1], [0], [0], [1], [0, 0, 1, 1], [], []>} : vector<112x32xf32>, vector<32x5xf32>, vector<112x5xf32> -> vector<112x5xf32>
    %cst_210 = arith.constant 0.000000e+00 : f32
    %140 = vector.broadcast %cst_210 : f32 to vector<112x5xf32>
    %141 = arith.maximumf %139, %140 : vector<112x5xf32>
    %142 = vector.extract_strided_slice %141 {offsets = [0, 0], sizes = [56, 5], strides = [1, 1]} : vector<112x5xf32> to vector<56x5xf32>
    %cst_211 = arith.constant 0.000000e+00 : f32
    %143 = vector.broadcast %cst_211 : f32 to vector<56x48xf32>
    %144 = vector.extract_strided_slice %142 {offsets = [0, 0], sizes = [56, 1], strides = [1, 1]} : vector<56x5xf32> to vector<56x1xf32>
    %c0_212 = arith.constant 0 : index
    %c0_213 = arith.constant 0 : index
    %145 = vector.load %arg5[%c0_212, %c0_213] : memref<280x48xf32, #tpu.memory_space<vmem>>, vector<56x48xf32>
    %146 = vector.broadcast %144 : vector<56x1xf32> to vector<56x48xf32>
    %147 = arith.mulf %146, %145 : vector<56x48xf32>
    %148 = arith.addf %143, %147 : vector<56x48xf32>
    %149 = vector.extract_strided_slice %142 {offsets = [0, 1], sizes = [56, 1], strides = [1, 1]} : vector<56x5xf32> to vector<56x1xf32>
    %c56_214 = arith.constant 56 : index
    %c0_215 = arith.constant 0 : index
    %150 = vector.load %arg5[%c56_214, %c0_215] : memref<280x48xf32, #tpu.memory_space<vmem>>, vector<56x48xf32>
    %151 = vector.broadcast %149 : vector<56x1xf32> to vector<56x48xf32>
    %152 = arith.mulf %151, %150 : vector<56x48xf32>
    %153 = arith.addf %148, %152 : vector<56x48xf32>
    %154 = vector.extract_strided_slice %142 {offsets = [0, 2], sizes = [56, 1], strides = [1, 1]} : vector<56x5xf32> to vector<56x1xf32>
    %c112 = arith.constant 112 : index
    %c0_216 = arith.constant 0 : index
    %155 = vector.load %arg5[%c112, %c0_216] : memref<280x48xf32, #tpu.memory_space<vmem>>, vector<56x48xf32>
    %156 = vector.broadcast %154 : vector<56x1xf32> to vector<56x48xf32>
    %157 = arith.mulf %156, %155 : vector<56x48xf32>
    %158 = arith.addf %153, %157 : vector<56x48xf32>
    %159 = vector.extract_strided_slice %142 {offsets = [0, 3], sizes = [56, 1], strides = [1, 1]} : vector<56x5xf32> to vector<56x1xf32>
    %c168 = arith.constant 168 : index
    %c0_217 = arith.constant 0 : index
    %160 = vector.load %arg5[%c168, %c0_217] : memref<280x48xf32, #tpu.memory_space<vmem>>, vector<56x48xf32>
    %161 = vector.broadcast %159 : vector<56x1xf32> to vector<56x48xf32>
    %162 = arith.mulf %161, %160 : vector<56x48xf32>
    %163 = arith.addf %158, %162 : vector<56x48xf32>
    %164 = vector.extract_strided_slice %142 {offsets = [0, 4], sizes = [56, 1], strides = [1, 1]} : vector<56x5xf32> to vector<56x1xf32>
    %c224_218 = arith.constant 224 : index
    %c0_219 = arith.constant 0 : index
    %165 = vector.load %arg5[%c224_218, %c0_219] : memref<280x48xf32, #tpu.memory_space<vmem>>, vector<56x48xf32>
    %166 = vector.broadcast %164 : vector<56x1xf32> to vector<56x48xf32>
    %167 = arith.mulf %166, %165 : vector<56x48xf32>
    %168 = arith.addf %163, %167 : vector<56x48xf32>
    %cst_220 = arith.constant dense<0.000000e+00> : vector<48xf32>
    %169 = vector.multi_reduction <add>, %168, %cst_220 [0] : vector<56x48xf32> to vector<48xf32>
    %170 = vector.shape_cast %169 : vector<48xf32> to vector<1x48xf32>
    %171 = vector.extract_strided_slice %141 {offsets = [56, 0], sizes = [56, 5], strides = [1, 1]} : vector<112x5xf32> to vector<56x5xf32>
    %cst_221 = arith.constant 0.000000e+00 : f32
    %172 = vector.broadcast %cst_221 : f32 to vector<56x48xf32>
    %173 = vector.extract_strided_slice %171 {offsets = [0, 0], sizes = [56, 1], strides = [1, 1]} : vector<56x5xf32> to vector<56x1xf32>
    %c0_222 = arith.constant 0 : index
    %c0_223 = arith.constant 0 : index
    %174 = vector.load %arg5[%c0_222, %c0_223] : memref<280x48xf32, #tpu.memory_space<vmem>>, vector<56x48xf32>
    %175 = vector.broadcast %173 : vector<56x1xf32> to vector<56x48xf32>
    %176 = arith.mulf %175, %174 : vector<56x48xf32>
    %177 = arith.addf %172, %176 : vector<56x48xf32>
    %178 = vector.extract_strided_slice %171 {offsets = [0, 1], sizes = [56, 1], strides = [1, 1]} : vector<56x5xf32> to vector<56x1xf32>
    %c56_224 = arith.constant 56 : index
    %c0_225 = arith.constant 0 : index
    %179 = vector.load %arg5[%c56_224, %c0_225] : memref<280x48xf32, #tpu.memory_space<vmem>>, vector<56x48xf32>
    %180 = vector.broadcast %178 : vector<56x1xf32> to vector<56x48xf32>
    %181 = arith.mulf %180, %179 : vector<56x48xf32>
    %182 = arith.addf %177, %181 : vector<56x48xf32>
    %183 = vector.extract_strided_slice %171 {offsets = [0, 2], sizes = [56, 1], strides = [1, 1]} : vector<56x5xf32> to vector<56x1xf32>
    %c112_226 = arith.constant 112 : index
    %c0_227 = arith.constant 0 : index
    %184 = vector.load %arg5[%c112_226, %c0_227] : memref<280x48xf32, #tpu.memory_space<vmem>>, vector<56x48xf32>
    %185 = vector.broadcast %183 : vector<56x1xf32> to vector<56x48xf32>
    %186 = arith.mulf %185, %184 : vector<56x48xf32>
    %187 = arith.addf %182, %186 : vector<56x48xf32>
    %188 = vector.extract_strided_slice %171 {offsets = [0, 3], sizes = [56, 1], strides = [1, 1]} : vector<56x5xf32> to vector<56x1xf32>
    %c168_228 = arith.constant 168 : index
    %c0_229 = arith.constant 0 : index
    %189 = vector.load %arg5[%c168_228, %c0_229] : memref<280x48xf32, #tpu.memory_space<vmem>>, vector<56x48xf32>
    %190 = vector.broadcast %188 : vector<56x1xf32> to vector<56x48xf32>
    %191 = arith.mulf %190, %189 : vector<56x48xf32>
    %192 = arith.addf %187, %191 : vector<56x48xf32>
    %193 = vector.extract_strided_slice %171 {offsets = [0, 4], sizes = [56, 1], strides = [1, 1]} : vector<56x5xf32> to vector<56x1xf32>
    %c224_230 = arith.constant 224 : index
    %c0_231 = arith.constant 0 : index
    %194 = vector.load %arg5[%c224_230, %c0_231] : memref<280x48xf32, #tpu.memory_space<vmem>>, vector<56x48xf32>
    %195 = vector.broadcast %193 : vector<56x1xf32> to vector<56x48xf32>
    %196 = arith.mulf %195, %194 : vector<56x48xf32>
    %197 = arith.addf %192, %196 : vector<56x48xf32>
    %cst_232 = arith.constant dense<0.000000e+00> : vector<48xf32>
    %198 = vector.multi_reduction <add>, %197, %cst_232 [0] : vector<56x48xf32> to vector<48xf32>
    %199 = vector.shape_cast %198 : vector<48xf32> to vector<1x48xf32>
    %200 = tpu.concatenate %170, %199 in 0 : vector<1x48xf32>, vector<1x48xf32> -> vector<2x48xf32>
    %201 = vector.extract_strided_slice %200 {offsets = [0, 0], sizes = [2, 32], strides = [1, 1]} : vector<2x48xf32> to vector<2x32xf32>
    %c0_233 = arith.constant 0 : index
    %c0_234 = arith.constant 0 : index
    %202 = vector.load %arg6[%c0_233, %c0_234] : memref<1x32xf32, #tpu.memory_space<vmem>>, vector<1x32xf32>
    %203 = vector.broadcast %202 : vector<1x32xf32> to vector<2x32xf32>
    %204 = arith.addf %201, %203 : vector<2x32xf32>
    %cst_235 = arith.constant 0.000000e+00 : f32
    %205 = vector.broadcast %cst_235 : f32 to vector<2x32xf32>
    %206 = arith.maximumf %204, %205 : vector<2x32xf32>
    %c0_236 = arith.constant 0 : index
    %c0_237 = arith.constant 0 : index
    %207 = vector.load %arg7[%c0_236, %c0_237] : memref<1x32xf32, #tpu.memory_space<vmem>>, vector<1x32xf32>
    %208 = vector.broadcast %207 : vector<1x32xf32> to vector<2x32xf32>
    %209 = arith.mulf %206, %208 : vector<2x32xf32>
    %cst_238 = arith.constant dense<0.000000e+00> : vector<2xf32>
    %210 = vector.multi_reduction <add>, %209, %cst_238 [1] : vector<2x32xf32> to vector<2xf32>
    %211 = vector.shape_cast %210 : vector<2xf32> to vector<2x1xf32>
    %c0_239 = arith.constant 0 : index
    %c0_240 = arith.constant 0 : index
    %212 = vector.load %arg8[%c0_239, %c0_240] : memref<1x1xf32, #tpu.memory_space<vmem>>, vector<1x1xf32>
    %213 = vector.broadcast %212 : vector<1x1xf32> to vector<2x1xf32>
    %214 = arith.addf %211, %213 : vector<2x1xf32>
    %215 = vector.extract_strided_slice %200 {offsets = [0, 32], sizes = [2, 16], strides = [1, 1]} : vector<2x48xf32> to vector<2x16xf32>
    %c0_241 = arith.constant 0 : index
    %c0_242 = arith.constant 0 : index
    %216 = vector.load %arg9[%c0_241, %c0_242] : memref<1x16xf32, #tpu.memory_space<vmem>>, vector<1x16xf32>
    %217 = vector.broadcast %216 : vector<1x16xf32> to vector<2x16xf32>
    %218 = arith.addf %215, %217 : vector<2x16xf32>
    %219 = vector.extract_strided_slice %218 {offsets = [0, 0], sizes = [2, 8], strides = [1, 1]} : vector<2x16xf32> to vector<2x8xf32>
    %220 = vector.broadcast %214 : vector<2x1xf32> to vector<2x8xf32>
    %221 = arith.addf %220, %219 : vector<2x8xf32>
    %cst_243 = arith.constant dense<0.000000e+00> : vector<2xf32>
    %222 = vector.multi_reduction <add>, %219, %cst_243 [1] : vector<2x8xf32> to vector<2xf32>
    %223 = vector.shape_cast %222 : vector<2xf32> to vector<2x1xf32>
    %cst_244 = arith.constant 8.000000e+00 : f32
    %224 = vector.broadcast %cst_244 : f32 to vector<2x1xf32>
    %225 = arith.divf %223, %224 : vector<2x1xf32>
    %226 = vector.broadcast %225 : vector<2x1xf32> to vector<2x8xf32>
    %227 = arith.subf %221, %226 : vector<2x8xf32>
    %c0_245 = arith.constant 0 : index
    %c0_246 = arith.constant 0 : index
    %228 = vector.load %arg10[%c0_245, %c0_246] : memref<2x16xf32, #tpu.memory_space<vmem>>, vector<2x8xf32>
    tpu.vector_store %arg10[%c0_245, %c0_246], %227 {strides = array<i32>} : memref<2x16xf32, #tpu.memory_space<vmem>>, vector<2x8xf32>,
    %229 = vector.extract_strided_slice %218 {offsets = [0, 8], sizes = [2, 8], strides = [1, 1]} : vector<2x16xf32> to vector<2x8xf32>
    %230 = vector.broadcast %214 : vector<2x1xf32> to vector<2x8xf32>
    %231 = arith.addf %230, %229 : vector<2x8xf32>
    %cst_247 = arith.constant dense<0.000000e+00> : vector<2xf32>
    %232 = vector.multi_reduction <add>, %229, %cst_247 [1] : vector<2x8xf32> to vector<2xf32>
    %233 = vector.shape_cast %232 : vector<2xf32> to vector<2x1xf32>
    %cst_248 = arith.constant 8.000000e+00 : f32
    %234 = vector.broadcast %cst_248 : f32 to vector<2x1xf32>
    %235 = arith.divf %233, %234 : vector<2x1xf32>
    %236 = vector.broadcast %235 : vector<2x1xf32> to vector<2x8xf32>
    %237 = arith.subf %231, %236 : vector<2x8xf32>
    %c0_249 = arith.constant 0 : index
    %c8_250 = arith.constant 8 : index
    %238 = vector.load %arg10[%c0_249, %c8_250] : memref<2x16xf32, #tpu.memory_space<vmem>>, vector<2x8xf32>
    tpu.vector_store %arg10[%c0_249, %c8_250], %237 {strides = array<i32>} : memref<2x16xf32, #tpu.memory_space<vmem>>, vector<2x8xf32>,
    return
  }
}

</mosaic_0001>

<llo_original>
// kernel: ddqn_forward.1
$region0: #{ddqn_forward.1}
  #allocation0 [shape = 'u32[]', space=smem, size = 0x4, offset = 0x4, fixed_abs, tag = 'smem constant byte address 0x4 - core index']
  #allocation1 [shape = 'u32[72,128]{1,0:T(1,128)}', space=vmem, size = 0x9000, scoped, tag = 'internal scratch']
  #allocation2 [shape = 'f32[144,32]{1,0:T(8,128)}', space=vmem, size = 0x12000, scoped, tag = 'scratch operand']
  #allocation3 [shape = 'f32[144,32]{1,0:T(8,128)}', space=vmem, size = 0x12000, scoped, tag = 'scratch operand']
  #allocation4 [shape = 'f32[112,288]{1,0:T(8,128)}', space=vmem, size = 0x2a000, scoped, tag = 'scratch operand']
  #allocation5 [shape = 'f32[1,1]{1,0:T(1,128)S(1)}', space=vmem, size = 0x200, scoped, tag = 'scoped memory for ddqn_forward.1']
  %s0 = inlined_call_operand.vmem [shape: f32[224,32], index: 0, kind: input, shape index: {}]
  %s1 = inlined_call_operand.vmem [shape: f32[112,1], index: 1, kind: input, shape index: {}]
  %s2 = inlined_call_operand.vmem [shape: f32[288,32], index: 2, kind: input, shape index: {}]
  %s3 = inlined_call_operand.vmem [shape: f32[1152,32], index: 3, kind: input, shape index: {}]
  %s4 = inlined_call_operand.vmem [shape: f32[32,5], index: 4, kind: input, shape index: {}]
  %s5 = inlined_call_operand.vmem [shape: f32[280,48], index: 5, kind: input, shape index: {}]
  %s6 = inlined_call_operand.vmem [shape: f32[1,32], index: 6, kind: input, shape index: {}]
  %s7 = inlined_call_operand.vmem [shape: f32[1,32], index: 7, kind: input, shape index: {}]
  %s8 = inlined_call_operand.<no memory space> [shape: f32[1,1], index: 8, kind: input, shape index: {}]
  %s9 = inlined_call_operand.vmem [shape: f32[1,16], index: 9, kind: input, shape index: {}]
  %s10 = inlined_call_operand.vmem [shape: f32[2,16], index: 10, kind: output, shape index: {}]
  %s11 = sld [smem:[#allocation0]]
  $region50: #{ddqn_forward.1} parent=0
    _
  %s13 = ssub.s32 1, %s11
  %s14 = scalar_select 0, %s13, %s11
  %v15 = vstv %s8
  %16 = vst [vmem:[#allocation5] sm:$0x1] %v15
  // Predicated region
  $region2: #{ddqn_forward.1} parent=0 // pred_check
    _
  $region3: #{ddqn_forward.1} parent=0 // pred_check_branch
    %18 = sbr.rel (0) target = $region5
  $region4: #{ddqn_forward.1} parent=0 // pred_region
    _
  $region5: #{ddqn_forward.1} parent=0 // pred_fallthru
    _
  // Predicated region
  $region6: #{ddqn_forward.1} parent=0 // pred_check
    _
  $region7: #{ddqn_forward.1} parent=0 // pred_check_branch
    %20 = sbr.rel (0) target = $region9
  $region8: #{ddqn_forward.1} parent=0 // pred_region
    _
  $region9: #{ddqn_forward.1} parent=0 // pred_fallthru
    _
  // Predicated region
  $region10: #{ddqn_forward.1} parent=0 // pred_check
    _
  $region11: #{ddqn_forward.1} parent=0 // pred_check_branch
    %22 = sbr.rel (0) target = $region13
  $region12: #{ddqn_forward.1} parent=0 // pred_region
    _
  $region13: #{ddqn_forward.1} parent=0 // pred_fallthru
    _
  // Predicated region
  $region14: #{ddqn_forward.1} parent=0 // pred_check
    _
  $region15: #{ddqn_forward.1} parent=0 // pred_check_branch
    %24 = sbr.rel (0) target = $region17
  $region16: #{ddqn_forward.1} parent=0 // pred_region
    _
  $region17: #{ddqn_forward.1} parent=0 // pred_fallthru
    _
  // Predicated region
  $region18: #{ddqn_forward.1} parent=0 // pred_check
    _
  $region19: #{ddqn_forward.1} parent=0 // pred_check_branch
    %26 = sbr.rel (0) target = $region21
  $region20: #{ddqn_forward.1} parent=0 // pred_region
    _
  $region21: #{ddqn_forward.1} parent=0 // pred_fallthru
    _
  // Predicated region
  $region22: #{ddqn_forward.1} parent=0 // pred_check
    _
  $region23: #{ddqn_forward.1} parent=0 // pred_check_branch
    %28 = sbr.rel (0) target = $region25
  $region24: #{ddqn_forward.1} parent=0 // pred_region
    _
  $region25: #{ddqn_forward.1} parent=0 // pred_fallthru
    _
  // Predicated region
  $region26: #{ddqn_forward.1} parent=0 // pred_check
    _
  $region27: #{ddqn_forward.1} parent=0 // pred_check_branch
    %30 = sbr.rel (0) target = $region29
  $region28: #{ddqn_forward.1} parent=0 // pred_region
    _
  $region29: #{ddqn_forward.1} parent=0 // pred_fallthru
    _
  // Predicated region
  $region30: #{ddqn_forward.1} parent=0 // pred_check
    _
  $region31: #{ddqn_forward.1} parent=0 // pred_check_branch
    %32 = sbr.rel (0) target = $region33
  $region32: #{ddqn_forward.1} parent=0 // pred_region
    _
  $region33: #{ddqn_forward.1} parent=0 // pred_fallthru
    _
  // Predicated region
  $region34: #{ddqn_forward.1} parent=0 // pred_check
    _
  $region35: #{ddqn_forward.1} parent=0 // pred_check_branch
    %34 = sbr.rel (0) target = $region37
  $region36: #{ddqn_forward.1} parent=0 // pred_region
    _
  $region37: #{ddqn_forward.1} parent=0 // pred_fallthru
    _
  // Predicated region
  $region38: #{ddqn_forward.1} parent=0 // pred_check
    _
  $region39: #{ddqn_forward.1} parent=0 // pred_check_branch
    %36 = sbr.rel (0) target = $region41
  $region40: #{ddqn_forward.1} parent=0 // pred_region
    _
  $region41: #{ddqn_forward.1} parent=0 // pred_fallthru
    _
  %vm37 = vcmask 261120
  %38 = vst.msk [vmem:[#allocation2] sm:$0xff] %vm37, 0.0
  %39 = vst.msk [vmem:[#allocation2 + $0x8] sm:$0xff] %vm37, 0.0
  %40 = vst.msk [vmem:[#allocation2 + $0x80] sm:$0xff] %vm37, 0.0
  %41 = vst.msk [vmem:[#allocation2 + $0x88] sm:$0xff] %vm37, 0.0
  %42 = vst.msk [vmem:[#allocation3] sm:$0xff] %vm37, 0.0
  %43 = vst.msk [vmem:[#allocation3 + $0x8] sm:$0xff] %vm37, 0.0
  %44 = vst.msk [vmem:[#allocation3 + $0x80] sm:$0xff] %vm37, 0.0
  %45 = vst.msk [vmem:[#allocation3 + $0x88] sm:$0xff] %vm37, 0.0
  %v46 = vld [vmem:[%s1] sm:$0xff]
  %v47 = vld [vmem:[%s1 + $0x8] sm:$0xff]
  %v48 = vld [vmem:[%s1 + $0x10] sm:$0xff]
  %v49 = vld [vmem:[%s1 + $0x18] sm:$0xff]
  %v50 = vld [vmem:[%s1 + $0x20] sm:$0xff]
  %v51 = vld [vmem:[%s1 + $0x28] sm:$0xff]
  %v52 = vld [vmem:[%s1 + $0x30] sm:$0xff]
  %v53 = vld [vmem:[%s1 + $0x38] sm:$0xff]
  %v54 = vld [vmem:[%s1 + $0x40] sm:$0xff]
  %v55 = vld [vmem:[%s1 + $0x48] sm:$0xff]
  %v56 = vld [vmem:[%s1 + $0x50] sm:$0xff]
  %v57 = vld [vmem:[%s1 + $0x58] sm:$0xff]
  %v58 = vld [vmem:[%s1 + $0x60] sm:$0xff]
  %v59 = vld [vmem:[%s1 + $0x68] sm:$0xff]
  %61 = vset.pattern.permute.xlu0 0
  %62 = vperm.xlu0 %61, %v46
  %v63 = vpop.permute.xlu0 %62
  %66 = vset.pattern.permute.xlu0 0
  %67 = vperm.xlu0 %66, %v47
  %v68 = vpop.permute.xlu0 %67
  %71 = vset.pattern.permute.xlu0 0
  %72 = vperm.xlu0 %71, %v48
  %v73 = vpop.permute.xlu0 %72
  %76 = vset.pattern.permute.xlu0 0
  %77 = vperm.xlu0 %76, %v49
  %v78 = vpop.permute.xlu0 %77
  %81 = vset.pattern.permute.xlu0 0
  %82 = vperm.xlu0 %81, %v50
  %v83 = vpop.permute.xlu0 %82
  %86 = vset.pattern.permute.xlu0 0
  %87 = vperm.xlu0 %86, %v51
  %v88 = vpop.permute.xlu0 %87
  %91 = vset.pattern.permute.xlu0 0
  %92 = vperm.xlu0 %91, %v52
  %v93 = vpop.permute.xlu0 %92
  %96 = vset.pattern.permute.xlu0 0
  %97 = vperm.xlu0 %96, %v53
  %v98 = vpop.permute.xlu0 %97
  %101 = vset.pattern.permute.xlu0 0
  %102 = vperm.xlu0 %101, %v54
  %v103 = vpop.permute.xlu0 %102
  %106 = vset.pattern.permute.xlu0 0
  %107 = vperm.xlu0 %106, %v55
  %v108 = vpop.permute.xlu0 %107
  %111 = vset.pattern.permute.xlu0 0
  %112 = vperm.xlu0 %111, %v56
  %v113 = vpop.permute.xlu0 %112
  %116 = vset.pattern.permute.xlu0 0
  %117 = vperm.xlu0 %116, %v57
  %v118 = vpop.permute.xlu0 %117
  %121 = vset.pattern.permute.xlu0 0
  %122 = vperm.xlu0 %121, %v58
  %v123 = vpop.permute.xlu0 %122
  %126 = vset.pattern.permute.xlu0 0
  %127 = vperm.xlu0 %126, %v59
  %v128 = vpop.permute.xlu0 %127
  %v130 = vld [vmem:[%s2] sm:$0xff]
  %v131 = vld [vmem:[%s2 + $0x8] sm:$0xff]
  %v132 = vld [vmem:[%s2 + $0x10] sm:$0xff]
  %v133 = vld [vmem:[%s2 + $0x18] sm:$0xff]
  %v134 = vld [vmem:[%s2 + $0x20] sm:$0xff]
  %v135 = vld [vmem:[%s2 + $0x28] sm:$0xff]
  %v136 = vld [vmem:[%s2 + $0x30] sm:$0xff]
  %v137 = vld [vmem:[%s2 + $0x38] sm:$0xff]
  %v138 = vld [vmem:[%s2 + $0x40] sm:$0xff]
  %v139 = vld [vmem:[%s2 + $0x48] sm:$0xff]
  %v140 = vld [vmem:[%s2 + $0x50] sm:$0xff]
  %v141 = vld [vmem:[%s2 + $0x58] sm:$0xff]
  %v142 = vld [vmem:[%s2 + $0x60] sm:$0xff]
  %v143 = vld [vmem:[%s2 + $0x68] sm:$0xff]
  %v144 = vld [vmem:[%s2 + $0x70] sm:$0xff]
  %v145 = vld [vmem:[%s2 + $0x78] sm:$0xff]
  %v146 = vld [vmem:[%s2 + $0x80] sm:$0xff]
  %v147 = vld [vmem:[%s2 + $0x88] sm:$0xff]
  %v148 = vld [vmem:[%s2 + $0x90] sm:$0xff]
  %v149 = vld [vmem:[%s2 + $0x98] sm:$0xff]
  %v150 = vld [vmem:[%s2 + $0xa0] sm:$0xff]
  %v151 = vld [vmem:[%s2 + $0xa8] sm:$0xff]
  %v152 = vld [vmem:[%s2 + $0xb0] sm:$0xff]
  %v153 = vld [vmem:[%s2 + $0xb8] sm:$0xff]
  %v154 = vld [vmem:[%s2 + $0xc0] sm:$0xff]
  %v155 = vld [vmem:[%s2 + $0xc8] sm:$0xff]
  %v156 = vld [vmem:[%s2 + $0xd0] sm:$0xff]
  %v157 = vld [vmem:[%s2 + $0xd8] sm:$0xff]
  %v158 = vld [vmem:[%s2 + $0xe0] sm:$0xff]
  %v159 = vld [vmem:[%s2 + $0xe8] sm:$0xff]
  %v160 = vld [vmem:[%s2 + $0xf0] sm:$0xff]
  %v161 = vld [vmem:[%s2 + $0xf8] sm:$0xff]
  %v162 = vld [vmem:[%s2 + $0x100] sm:$0xff]
  %v163 = vld [vmem:[%s2 + $0x108] sm:$0xff]
  %v164 = vld [vmem:[%s2 + $0x110] sm:$0xff]
  %v165 = vld [vmem:[%s2 + $0x118] sm:$0xff]
  %v166 = vld [vmem:[%s0 + $0x2f] sm:$0xff]
  %v167 = vld [vmem:[%s0 + $0x37] sm:$0xff]
  %v168 = vld [vmem:[%s0 + $0x3f] sm:$0xff]
  %v169 = vld [vmem:[%s0 + $0x47] sm:$0xff]
  %v170 = vld [vmem:[%s0 + $0x4f] sm:$0xff]
  %v171 = vld [vmem:[%s0 + $0x57] sm:$0xff]
  %v172 = vld [vmem:[%s0 + $0x5f] sm:$0xff]
  %v173 = vld [vmem:[%s0 + $0x67] sm:$0xff]
  %v174 = vld [vmem:[%s0 + $0x6f] sm:$0xff]
  %v175 = vld [vmem:[%s0 + $0x77] sm:$0xff]
  %v176 = vld [vmem:[%s0 + $0x7f] sm:$0xff]
  %v177 = vld [vmem:[%s0 + $0x87] sm:$0xff]
  %v178 = vld [vmem:[%s0 + $0x8f] sm:$0xff]
  %v179 = vld [vmem:[%s0 + $0x97] sm:$0xff]
  %180 = vst.msk [vmem:[#allocation4] sm:$0xff] %vm37, %v166
  %181 = vst.msk [vmem:[#allocation4 + $0x18] sm:$0xff] %vm37, %v167
  %182 = vst.msk [vmem:[#allocation4 + $0x30] sm:$0xff] %vm37, %v168
  %183 = vst.msk [vmem:[#allocation4 + $0x48] sm:$0xff] %vm37, %v169
  %184 = vst.msk [vmem:[#allocation4 + $0x60] sm:$0xff] %vm37, %v170
  %185 = vst.msk [vmem:[#allocation4 + $0x78] sm:$0xff] %vm37, %v171
  %186 = vst.msk [vmem:[#allocation4 + $0x90] sm:$0xff] %vm37, %v172
  %187 = vst.msk [vmem:[#allocation4 + $0xa8] sm:$0xff] %vm37, %v173
  %188 = vst.msk [vmem:[#allocation4 + $0xc0] sm:$0xff] %vm37, %v174
  %189 = vst.msk [vmem:[#allocation4 + $0xd8] sm:$0xff] %vm37, %v175
  %190 = vst.msk [vmem:[#allocation4 + $0xf0] sm:$0xff] %vm37, %v176
  %191 = vst.msk [vmem:[#allocation4 + $0x108] sm:$0xff] %vm37, %v177
  %192 = vst.msk [vmem:[#allocation4 + $0x120] sm:$0xff] %vm37, %v178
  %193 = vst.msk [vmem:[#allocation4 + $0x138] sm:$0xff] %vm37, %v179
  %v194 = vld [vmem:[%s0 + $0x30] sm:$0xff]
  %v195 = vld [vmem:[%s0 + $0x38] sm:$0xff]
  %v196 = vld [vmem:[%s0 + $0x40] sm:$0xff]
  %v197 = vld [vmem:[%s0 + $0x48] sm:$0xff]
  %v198 = vld [vmem:[%s0 + $0x50] sm:$0xff]
  %v199 = vld [vmem:[%s0 + $0x58] sm:$0xff]
  %v200 = vld [vmem:[%s0 + $0x60] sm:$0xff]
  %v201 = vld [vmem:[%s0 + $0x68] sm:$0xff]
  %v202 = vld [vmem:[%s0 + $0x70] sm:$0xff]
  %v203 = vld [vmem:[%s0 + $0x78] sm:$0xff]
  %v204 = vld [vmem:[%s0 + $0x80] sm:$0xff]
  %v205 = vld [vmem:[%s0 + $0x88] sm:$0xff]
  %v206 = vld [vmem:[%s0 + $0x90] sm:$0xff]
  %v207 = vld [vmem:[%s0 + $0x98] sm:$0xff]
  %222 = vrot.lane.b32.xlu0 %v194, 32
  %v223 = vpop.permute.xlu0 %222
  %224 = vrot.lane.b32.xlu0 %v195, 32
  %v225 = vpop.permute.xlu0 %224
  %226 = vrot.lane.b32.xlu0 %v196, 32
  %v227 = vpop.permute.xlu0 %226
  %228 = vrot.lane.b32.xlu0 %v197, 32
  %v229 = vpop.permute.xlu0 %228
  %230 = vrot.lane.b32.xlu0 %v198, 32
  %v231 = vpop.permute.xlu0 %230
  %232 = vrot.lane.b32.xlu0 %v199, 32
  %v233 = vpop.permute.xlu0 %232
  %234 = vrot.lane.b32.xlu0 %v200, 32
  %v235 = vpop.permute.xlu0 %234
  %236 = vrot.lane.b32.xlu0 %v201, 32
  %v237 = vpop.permute.xlu0 %236
  %238 = vrot.lane.b32.xlu0 %v202, 32
  %v239 = vpop.permute.xlu0 %238
  %240 = vrot.lane.b32.xlu0 %v203, 32
  %v241 = vpop.permute.xlu0 %240
  %242 = vrot.lane.b32.xlu0 %v204, 32
  %v243 = vpop.permute.xlu0 %242
  %244 = vrot.lane.b32.xlu0 %v205, 32
  %v245 = vpop.permute.xlu0 %244
  %246 = vrot.lane.b32.xlu0 %v206, 32
  %v247 = vpop.permute.xlu0 %246
  %248 = vrot.lane.b32.xlu0 %v207, 32
  %v249 = vpop.permute.xlu0 %248
  %vm264 = vcmask 523520
  %265 = vst.msk [vmem:[#allocation4] sm:$0xff] %vm264, %v223
  %266 = vst.msk [vmem:[#allocation4 + $0x18] sm:$0xff] %vm264, %v225
  %267 = vst.msk [vmem:[#allocation4 + $0x30] sm:$0xff] %vm264, %v227
  %268 = vst.msk [vmem:[#allocation4 + $0x48] sm:$0xff] %vm264, %v229
  %269 = vst.msk [vmem:[#allocation4 + $0x60] sm:$0xff] %vm264, %v231
  %270 = vst.msk [vmem:[#allocation4 + $0x78] sm:$0xff] %vm264, %v233
  %271 = vst.msk [vmem:[#allocation4 + $0x90] sm:$0xff] %vm264, %v235
  %272 = vst.msk [vmem:[#allocation4 + $0xa8] sm:$0xff] %vm264, %v237
  %273 = vst.msk [vmem:[#allocation4 + $0xc0] sm:$0xff] %vm264, %v239
  %274 = vst.msk [vmem:[#allocation4 + $0xd8] sm:$0xff] %vm264, %v241
  %275 = vst.msk [vmem:[#allocation4 + $0xf0] sm:$0xff] %vm264, %v243
  %276 = vst.msk [vmem:[#allocation4 + $0x108] sm:$0xff] %vm264, %v245
  %277 = vst.msk [vmem:[#allocation4 + $0x120] sm:$0xff] %vm264, %v247
  %278 = vst.msk [vmem:[#allocation4 + $0x138] sm:$0xff] %vm264, %v249
  %v279 = vld [vmem:[%s0 + $0x31] sm:$0xff]
  %v280 = vld [vmem:[%s0 + $0x39] sm:$0xff]
  %v281 = vld [vmem:[%s0 + $0x41] sm:$0xff]
  %v282 = vld [vmem:[%s0 + $0x49] sm:$0xff]
  %v283 = vld [vmem:[%s0 + $0x51] sm:$0xff]
  %v284 = vld [vmem:[%s0 + $0x59] sm:$0xff]
  %v285 = vld [vmem:[%s0 + $0x61] sm:$0xff]
  %v286 = vld [vmem:[%s0 + $0x69] sm:$0xff]
  %v287 = vld [vmem:[%s0 + $0x71] sm:$0xff]
  %v288 = vld [vmem:[%s0 + $0x79] sm:$0xff]
  %v289 = vld [vmem:[%s0 + $0x81] sm:$0xff]
  %v290 = vld [vmem:[%s0 + $0x89] sm:$0xff]
  %v291 = vld [vmem:[%s0 + $0x91] sm:$0xff]
  %v292 = vld [vmem:[%s0 + $0x99] sm:$0xff]
  %307 = vrot.lane.b32.xlu0 %v279, 64
  %v308 = vpop.permute.xlu0 %307
  %309 = vrot.lane.b32.xlu0 %v280, 64
  %v310 = vpop.permute.xlu0 %309
  %311 = vrot.lane.b32.xlu0 %v281, 64
  %v312 = vpop.permute.xlu0 %311
  %313 = vrot.lane.b32.xlu0 %v282, 64
  %v314 = vpop.permute.xlu0 %313
  %315 = vrot.lane.b32.xlu0 %v283, 64
  %v316 = vpop.permute.xlu0 %315
  %317 = vrot.lane.b32.xlu0 %v284, 64
  %v318 = vpop.permute.xlu0 %317
  %319 = vrot.lane.b32.xlu0 %v285, 64
  %v320 = vpop.permute.xlu0 %319
  %321 = vrot.lane.b32.xlu0 %v286, 64
  %v322 = vpop.permute.xlu0 %321
  %323 = vrot.lane.b32.xlu0 %v287, 64
  %v324 = vpop.permute.xlu0 %323
  %325 = vrot.lane.b32.xlu0 %v288, 64
  %v326 = vpop.permute.xlu0 %325
  %327 = vrot.lane.b32.xlu0 %v289, 64
  %v328 = vpop.permute.xlu0 %327
  %329 = vrot.lane.b32.xlu0 %v290, 64
  %v330 = vpop.permute.xlu0 %329
  %331 = vrot.lane.b32.xlu0 %v291, 64
  %v332 = vpop.permute.xlu0 %331
  %333 = vrot.lane.b32.xlu0 %v292, 64
  %v334 = vpop.permute.xlu0 %333
  %vm349 = vcmask 785920
  %350 = vst.msk [vmem:[#allocation4] sm:$0xff] %vm349, %v308
  %351 = vst.msk [vmem:[#allocation4 + $0x18] sm:$0xff] %vm349, %v310
  %352 = vst.msk [vmem:[#allocation4 + $0x30] sm:$0xff] %vm349, %v312
  %353 = vst.msk [vmem:[#allocation4 + $0x48] sm:$0xff] %vm349, %v314
  %354 = vst.msk [vmem:[#allocation4 + $0x60] sm:$0xff] %vm349, %v316
  %355 = vst.msk [vmem:[#allocation4 + $0x78] sm:$0xff] %vm349, %v318
  %356 = vst.msk [vmem:[#allocation4 + $0x90] sm:$0xff] %vm349, %v320
  %357 = vst.msk [vmem:[#allocation4 + $0xa8] sm:$0xff] %vm349, %v322
  %358 = vst.msk [vmem:[#allocation4 + $0xc0] sm:$0xff] %vm349, %v324
  %359 = vst.msk [vmem:[#allocation4 + $0xd8] sm:$0xff] %vm349, %v326
  %360 = vst.msk [vmem:[#allocation4 + $0xf0] sm:$0xff] %vm349, %v328
  %361 = vst.msk [vmem:[#allocation4 + $0x108] sm:$0xff] %vm349, %v330
  %362 = vst.msk [vmem:[#allocation4 + $0x120] sm:$0xff] %vm349, %v332
  %363 = vst.msk [vmem:[#allocation4 + $0x138] sm:$0xff] %vm349, %v334
  %v364 = vld [vmem:[%s0 + $0x37] sm:$0xff]
  %v365 = vld [vmem:[%s0 + $0x3f] sm:$0xff]
  %v366 = vld [vmem:[%s0 + $0x47] sm:$0xff]
  %v367 = vld [vmem:[%s0 + $0x4f] sm:$0xff]
  %v368 = vld [vmem:[%s0 + $0x57] sm:$0xff]
  %v369 = vld [vmem:[%s0 + $0x5f] sm:$0xff]
  %v370 = vld [vmem:[%s0 + $0x67] sm:$0xff]
  %v371 = vld [vmem:[%s0 + $0x6f] sm:$0xff]
  %v372 = vld [vmem:[%s0 + $0x77] sm:$0xff]
  %v373 = vld [vmem:[%s0 + $0x7f] sm:$0xff]
  %v374 = vld [vmem:[%s0 + $0x87] sm:$0xff]
  %v375 = vld [vmem:[%s0 + $0x8f] sm:$0xff]
  %v376 = vld [vmem:[%s0 + $0x97] sm:$0xff]
  %v377 = vld [vmem:[%s0 + $0x9f] sm:$0xff]
  %392 = vrot.lane.b32.xlu0 %v364, 96
  %v393 = vpop.permute.xlu0 %392
  %394 = vrot.lane.b32.xlu0 %v365, 96
  %v395 = vpop.permute.xlu0 %394
  %396 = vrot.lane.b32.xlu0 %v366, 96
  %v397 = vpop.permute.xlu0 %396
  %398 = vrot.lane.b32.xlu0 %v367, 96
  %v399 = vpop.permute.xlu0 %398
  %400 = vrot.lane.b32.xlu0 %v368, 96
  %v401 = vpop.permute.xlu0 %400
  %402 = vrot.lane.b32.xlu0 %v369, 96
  %v403 = vpop.permute.xlu0 %402
  %404 = vrot.lane.b32.xlu0 %v370, 96
  %v405 = vpop.permute.xlu0 %404
  %406 = vrot.lane.b32.xlu0 %v371, 96
  %v407 = vpop.permute.xlu0 %406
  %408 = vrot.lane.b32.xlu0 %v372, 96
  %v409 = vpop.permute.xlu0 %408
  %410 = vrot.lane.b32.xlu0 %v373, 96
  %v411 = vpop.permute.xlu0 %410
  %412 = vrot.lane.b32.xlu0 %v374, 96
  %v413 = vpop.permute.xlu0 %412
  %414 = vrot.lane.b32.xlu0 %v375, 96
  %v415 = vpop.permute.xlu0 %414
  %416 = vrot.lane.b32.xlu0 %v376, 96
  %v417 = vpop.permute.xlu0 %416
  %418 = vrot.lane.b32.xlu0 %v377, 96
  %v419 = vpop.permute.xlu0 %418
  %vm434 = vcmask 1048320
  %435 = vst.msk [vmem:[#allocation4] sm:$0xff] %vm434, %v393
  %436 = vst.msk [vmem:[#allocation4 + $0x18] sm:$0xff] %vm434, %v395
  %437 = vst.msk [vmem:[#allocation4 + $0x30] sm:$0xff] %vm434, %v397
  %438 = vst.msk [vmem:[#allocation4 + $0x48] sm:$0xff] %vm434, %v399
  %439 = vst.msk [vmem:[#allocation4 + $0x60] sm:$0xff] %vm434, %v401
  %440 = vst.msk [vmem:[#allocation4 + $0x78] sm:$0xff] %vm434, %v403
  %441 = vst.msk [vmem:[#allocation4 + $0x90] sm:$0xff] %vm434, %v405
  %442 = vst.msk [vmem:[#allocation4 + $0xa8] sm:$0xff] %vm434, %v407
  %443 = vst.msk [vmem:[#allocation4 + $0xc0] sm:$0xff] %vm434, %v409
  %444 = vst.msk [vmem:[#allocation4 + $0xd8] sm:$0xff] %vm434, %v411
  %445 = vst.msk [vmem:[#allocation4 + $0xf0] sm:$0xff] %vm434, %v413
  %446 = vst.msk [vmem:[#allocation4 + $0x108] sm:$0xff] %vm434, %v415
  %447 = vst.msk [vmem:[#allocation4 + $0x120] sm:$0xff] %vm434, %v417
  %448 = vst.msk [vmem:[#allocation4 + $0x138] sm:$0xff] %vm434, %v419
  %v449 = vld [vmem:[%s0 + $0x38] sm:$0xff]
  %v450 = vld [vmem:[%s0 + $0x40] sm:$0xff]
  %v451 = vld [vmem:[%s0 + $0x48] sm:$0xff]
  %v452 = vld [vmem:[%s0 + $0x50] sm:$0xff]
  %v453 = vld [vmem:[%s0 + $0x58] sm:$0xff]
  %v454 = vld [vmem:[%s0 + $0x60] sm:$0xff]
  %v455 = vld [vmem:[%s0 + $0x68] sm:$0xff]
  %v456 = vld [vmem:[%s0 + $0x70] sm:$0xff]
  %v457 = vld [vmem:[%s0 + $0x78] sm:$0xff]
  %v458 = vld [vmem:[%s0 + $0x80] sm:$0xff]
  %v459 = vld [vmem:[%s0 + $0x88] sm:$0xff]
  %v460 = vld [vmem:[%s0 + $0x90] sm:$0xff]
  %v461 = vld [vmem:[%s0 + $0x98] sm:$0xff]
  %v462 = vld [vmem:[%s0 + $0xa0] sm:$0xff]
  %463 = vst.msk [vmem:[#allocation4 + $0x8] sm:$0xff] %vm37, %v449
  %464 = vst.msk [vmem:[#allocation4 + $0x20] sm:$0xff] %vm37, %v450
  %465 = vst.msk [vmem:[#allocation4 + $0x38] sm:$0xff] %vm37, %v451
  %466 = vst.msk [vmem:[#allocation4 + $0x50] sm:$0xff] %vm37, %v452
  %467 = vst.msk [vmem:[#allocation4 + $0x68] sm:$0xff] %vm37, %v453
  %468 = vst.msk [vmem:[#allocation4 + $0x80] sm:$0xff] %vm37, %v454
  %469 = vst.msk [vmem:[#allocation4 + $0x98] sm:$0xff] %vm37, %v455
  %470 = vst.msk [vmem:[#allocation4 + $0xb0] sm:$0xff] %vm37, %v456
  %471 = vst.msk [vmem:[#allocation4 + $0xc8] sm:$0xff] %vm37, %v457
  %472 = vst.msk [vmem:[#allocation4 + $0xe0] sm:$0xff] %vm37, %v458
  %473 = vst.msk [vmem:[#allocation4 + $0xf8] sm:$0xff] %vm37, %v459
  %474 = vst.msk [vmem:[#allocation4 + $0x110] sm:$0xff] %vm37, %v460
  %475 = vst.msk [vmem:[#allocation4 + $0x128] sm:$0xff] %vm37, %v461
  %476 = vst.msk [vmem:[#allocation4 + $0x140] sm:$0xff] %vm37, %v462
  %v477 = vld [vmem:[%s0 + $0x39] sm:$0xff]
  %v478 = vld [vmem:[%s0 + $0x41] sm:$0xff]
  %v479 = vld [vmem:[%s0 + $0x49] sm:$0xff]
  %v480 = vld [vmem:[%s0 + $0x51] sm:$0xff]
  %v481 = vld [vmem:[%s0 + $0x59] sm:$0xff]
  %v482 = vld [vmem:[%s0 + $0x61] sm:$0xff]
  %v483 = vld [vmem:[%s0 + $0x69] sm:$0xff]
  %v484 = vld [vmem:[%s0 + $0x71] sm:$0xff]
  %v485 = vld [vmem:[%s0 + $0x79] sm:$0xff]
  %v486 = vld [vmem:[%s0 + $0x81] sm:$0xff]
  %v487 = vld [vmem:[%s0 + $0x89] sm:$0xff]
  %v488 = vld [vmem:[%s0 + $0x91] sm:$0xff]
  %v489 = vld [vmem:[%s0 + $0x99] sm:$0xff]
  %v490 = vld [vmem:[%s0 + $0xa1] sm:$0xff]
  %505 = vrot.lane.b32.xlu0 %v477, 32
  %v506 = vpop.permute.xlu0 %505
  %507 = vrot.lane.b32.xlu0 %v478, 32
  %v508 = vpop.permute.xlu0 %507
  %509 = vrot.lane.b32.xlu0 %v479, 32
  %v510 = vpop.permute.xlu0 %509
  %511 = vrot.lane.b32.xlu0 %v480, 32
  %v512 = vpop.permute.xlu0 %511
  %513 = vrot.lane.b32.xlu0 %v481, 32
  %v514 = vpop.permute.xlu0 %513
  %515 = vrot.lane.b32.xlu0 %v482, 32
  %v516 = vpop.permute.xlu0 %515
  %517 = vrot.lane.b32.xlu0 %v483, 32
  %v518 = vpop.permute.xlu0 %517
  %519 = vrot.lane.b32.xlu0 %v484, 32
  %v520 = vpop.permute.xlu0 %519
  %521 = vrot.lane.b32.xlu0 %v485, 32
  %v522 = vpop.permute.xlu0 %521
  %523 = vrot.lane.b32.xlu0 %v486, 32
  %v524 = vpop.permute.xlu0 %523
  %525 = vrot.lane.b32.xlu0 %v487, 32
  %v526 = vpop.permute.xlu0 %525
  %527 = vrot.lane.b32.xlu0 %v488, 32
  %v528 = vpop.permute.xlu0 %527
  %529 = vrot.lane.b32.xlu0 %v489, 32
  %v530 = vpop.permute.xlu0 %529
  %531 = vrot.lane.b32.xlu0 %v490, 32
  %v532 = vpop.permute.xlu0 %531
  %547 = vst.msk [vmem:[#allocation4 + $0x8] sm:$0xff] %vm264, %v506
  %548 = vst.msk [vmem:[#allocation4 + $0x20] sm:$0xff] %vm264, %v508
  %549 = vst.msk [vmem:[#allocation4 + $0x38] sm:$0xff] %vm264, %v510
  %550 = vst.msk [vmem:[#allocation4 + $0x50] sm:$0xff] %vm264, %v512
  %551 = vst.msk [vmem:[#allocation4 + $0x68] sm:$0xff] %vm264, %v514
  %552 = vst.msk [vmem:[#allocation4 + $0x80] sm:$0xff] %vm264, %v516
  %553 = vst.msk [vmem:[#allocation4 + $0x98] sm:$0xff] %vm264, %v518
  %554 = vst.msk [vmem:[#allocation4 + $0xb0] sm:$0xff] %vm264, %v520
  %555 = vst.msk [vmem:[#allocation4 + $0xc8] sm:$0xff] %vm264, %v522
  %556 = vst.msk [vmem:[#allocation4 + $0xe0] sm:$0xff] %vm264, %v524
  %557 = vst.msk [vmem:[#allocation4 + $0xf8] sm:$0xff] %vm264, %v526
  %558 = vst.msk [vmem:[#allocation4 + $0x110] sm:$0xff] %vm264, %v528
  %559 = vst.msk [vmem:[#allocation4 + $0x128] sm:$0xff] %vm264, %v530
  %560 = vst.msk [vmem:[#allocation4 + $0x140] sm:$0xff] %vm264, %v532
  %v561 = vld [vmem:[%s0 + $0x3f] sm:$0xff]
  %v562 = vld [vmem:[%s0 + $0x47] sm:$0xff]
  %v563 = vld [vmem:[%s0 + $0x4f] sm:$0xff]
  %v564 = vld [vmem:[%s0 + $0x57] sm:$0xff]
  %v565 = vld [vmem:[%s0 + $0x5f] sm:$0xff]
  %v566 = vld [vmem:[%s0 + $0x67] sm:$0xff]
  %v567 = vld [vmem:[%s0 + $0x6f] sm:$0xff]
  %v568 = vld [vmem:[%s0 + $0x77] sm:$0xff]
  %v569 = vld [vmem:[%s0 + $0x7f] sm:$0xff]
  %v570 = vld [vmem:[%s0 + $0x87] sm:$0xff]
  %v571 = vld [vmem:[%s0 + $0x8f] sm:$0xff]
  %v572 = vld [vmem:[%s0 + $0x97] sm:$0xff]
  %v573 = vld [vmem:[%s0 + $0x9f] sm:$0xff]
  %v574 = vld [vmem:[%s0 + $0xa7] sm:$0xff]
  %589 = vrot.lane.b32.xlu0 %v561, 64
  %v590 = vpop.permute.xlu0 %589
  %591 = vrot.lane.b32.xlu0 %v562, 64
  %v592 = vpop.permute.xlu0 %591
  %593 = vrot.lane.b32.xlu0 %v563, 64
  %v594 = vpop.permute.xlu0 %593
  %595 = vrot.lane.b32.xlu0 %v564, 64
  %v596 = vpop.permute.xlu0 %595
  %597 = vrot.lane.b32.xlu0 %v565, 64
  %v598 = vpop.permute.xlu0 %597
  %599 = vrot.lane.b32.xlu0 %v566, 64
  %v600 = vpop.permute.xlu0 %599
  %601 = vrot.lane.b32.xlu0 %v567, 64
  %v602 = vpop.permute.xlu0 %601
  %603 = vrot.lane.b32.xlu0 %v568, 64
  %v604 = vpop.permute.xlu0 %603
  %605 = vrot.lane.b32.xlu0 %v569, 64
  %v606 = vpop.permute.xlu0 %605
  %607 = vrot.lane.b32.xlu0 %v570, 64
  %v608 = vpop.permute.xlu0 %607
  %609 = vrot.lane.b32.xlu0 %v571, 64
  %v610 = vpop.permute.xlu0 %609
  %611 = vrot.lane.b32.xlu0 %v572, 64
  %v612 = vpop.permute.xlu0 %611
  %613 = vrot.lane.b32.xlu0 %v573, 64
  %v614 = vpop.permute.xlu0 %613
  %615 = vrot.lane.b32.xlu0 %v574, 64
  %v616 = vpop.permute.xlu0 %615
  %631 = vst.msk [vmem:[#allocation4 + $0x8] sm:$0xff] %vm349, %v590
  %632 = vst.msk [vmem:[#allocation4 + $0x20] sm:$0xff] %vm349, %v592
  %633 = vst.msk [vmem:[#allocation4 + $0x38] sm:$0xff] %vm349, %v594
  %634 = vst.msk [vmem:[#allocation4 + $0x50] sm:$0xff] %vm349, %v596
  %635 = vst.msk [vmem:[#allocation4 + $0x68] sm:$0xff] %vm349, %v598
  %636 = vst.msk [vmem:[#allocation4 + $0x80] sm:$0xff] %vm349, %v600
  %637 = vst.msk [vmem:[#allocation4 + $0x98] sm:$0xff] %vm349, %v602
  %638 = vst.msk [vmem:[#allocation4 + $0xb0] sm:$0xff] %vm349, %v604
  %639 = vst.msk [vmem:[#allocation4 + $0xc8] sm:$0xff] %vm349, %v606
  %640 = vst.msk [vmem:[#allocation4 + $0xe0] sm:$0xff] %vm349, %v608
  %641 = vst.msk [vmem:[#allocation4 + $0xf8] sm:$0xff] %vm349, %v610
  %642 = vst.msk [vmem:[#allocation4 + $0x110] sm:$0xff] %vm349, %v612
  %643 = vst.msk [vmem:[#allocation4 + $0x128] sm:$0xff] %vm349, %v614
  %644 = vst.msk [vmem:[#allocation4 + $0x140] sm:$0xff] %vm349, %v616
  %v645 = vld [vmem:[%s0 + $0x40] sm:$0xff]
  %v646 = vld [vmem:[%s0 + $0x48] sm:$0xff]
  %v647 = vld [vmem:[%s0 + $0x50] sm:$0xff]
  %v648 = vld [vmem:[%s0 + $0x58] sm:$0xff]
  %v649 = vld [vmem:[%s0 + $0x60] sm:$0xff]
  %v650 = vld [vmem:[%s0 + $0x68] sm:$0xff]
  %v651 = vld [vmem:[%s0 + $0x70] sm:$0xff]
  %v652 = vld [vmem:[%s0 + $0x78] sm:$0xff]
  %v653 = vld [vmem:[%s0 + $0x80] sm:$0xff]
  %v654 = vld [vmem:[%s0 + $0x88] sm:$0xff]
  %v655 = vld [vmem:[%s0 + $0x90] sm:$0xff]
  %v656 = vld [vmem:[%s0 + $0x98] sm:$0xff]
  %v657 = vld [vmem:[%s0 + $0xa0] sm:$0xff]
  %v658 = vld [vmem:[%s0 + $0xa8] sm:$0xff]
  %673 = vrot.lane.b32.xlu0 %v645, 96
  %v674 = vpop.permute.xlu0 %673
  %675 = vrot.lane.b32.xlu0 %v646, 96
  %v676 = vpop.permute.xlu0 %675
  %677 = vrot.lane.b32.xlu0 %v647, 96
  %v678 = vpop.permute.xlu0 %677
  %679 = vrot.lane.b32.xlu0 %v648, 96
  %v680 = vpop.permute.xlu0 %679
  %681 = vrot.lane.b32.xlu0 %v649, 96
  %v682 = vpop.permute.xlu0 %681
  %683 = vrot.lane.b32.xlu0 %v650, 96
  %v684 = vpop.permute.xlu0 %683
  %685 = vrot.lane.b32.xlu0 %v651, 96
  %v686 = vpop.permute.xlu0 %685
  %687 = vrot.lane.b32.xlu0 %v652, 96
  %v688 = vpop.permute.xlu0 %687
  %689 = vrot.lane.b32.xlu0 %v653, 96
  %v690 = vpop.permute.xlu0 %689
  %691 = vrot.lane.b32.xlu0 %v654, 96
  %v692 = vpop.permute.xlu0 %691
  %693 = vrot.lane.b32.xlu0 %v655, 96
  %v694 = vpop.permute.xlu0 %693
  %695 = vrot.lane.b32.xlu0 %v656, 96
  %v696 = vpop.permute.xlu0 %695
  %697 = vrot.lane.b32.xlu0 %v657, 96
  %v698 = vpop.permute.xlu0 %697
  %699 = vrot.lane.b32.xlu0 %v658, 96
  %v700 = vpop.permute.xlu0 %699
  %715 = vst.msk [vmem:[#allocation4 + $0x8] sm:$0xff] %vm434, %v674
  %716 = vst.msk [vmem:[#allocation4 + $0x20] sm:$0xff] %vm434, %v676
  %717 = vst.msk [vmem:[#allocation4 + $0x38] sm:$0xff] %vm434, %v678
  %718 = vst.msk [vmem:[#allocation4 + $0x50] sm:$0xff] %vm434, %v680
  %719 = vst.msk [vmem:[#allocation4 + $0x68] sm:$0xff] %vm434, %v682
  %720 = vst.msk [vmem:[#allocation4 + $0x80] sm:$0xff] %vm434, %v684
  %721 = vst.msk [vmem:[#allocation4 + $0x98] sm:$0xff] %vm434, %v686
  %722 = vst.msk [vmem:[#allocation4 + $0xb0] sm:$0xff] %vm434, %v688
  %723 = vst.msk [vmem:[#allocation4 + $0xc8] sm:$0xff] %vm434, %v690
  %724 = vst.msk [vmem:[#allocation4 + $0xe0] sm:$0xff] %vm434, %v692
  %725 = vst.msk [vmem:[#allocation4 + $0xf8] sm:$0xff] %vm434, %v694
  %726 = vst.msk [vmem:[#allocation4 + $0x110] sm:$0xff] %vm434, %v696
  %727 = vst.msk [vmem:[#allocation4 + $0x128] sm:$0xff] %vm434, %v698
  %728 = vst.msk [vmem:[#allocation4 + $0x140] sm:$0xff] %vm434, %v700
  %v729 = vld [vmem:[%s0 + $0x41] sm:$0xff]
  %v730 = vld [vmem:[%s0 + $0x49] sm:$0xff]
  %v731 = vld [vmem:[%s0 + $0x51] sm:$0xff]
  %v732 = vld [vmem:[%s0 + $0x59] sm:$0xff]
  %v733 = vld [vmem:[%s0 + $0x61] sm:$0xff]
  %v734 = vld [vmem:[%s0 + $0x69] sm:$0xff]
  %v735 = vld [vmem:[%s0 + $0x71] sm:$0xff]
  %v736 = vld [vmem:[%s0 + $0x79] sm:$0xff]
  %v737 = vld [vmem:[%s0 + $0x81] sm:$0xff]
  %v738 = vld [vmem:[%s0 + $0x89] sm:$0xff]
  %v739 = vld [vmem:[%s0 + $0x91] sm:$0xff]
  %v740 = vld [vmem:[%s0 + $0x99] sm:$0xff]
  %v741 = vld [vmem:[%s0 + $0xa1] sm:$0xff]
  %v742 = vld [vmem:[%s0 + $0xa9] sm:$0xff]
  %743 = vst.msk [vmem:[#allocation4 + $0x10] sm:$0xff] %vm37, %v729
  %744 = vst.msk [vmem:[#allocation4 + $0x28] sm:$0xff] %vm37, %v730
  %745 = vst.msk [vmem:[#allocation4 + $0x40] sm:$0xff] %vm37, %v731
  %746 = vst.msk [vmem:[#allocation4 + $0x58] sm:$0xff] %vm37, %v732
  %747 = vst.msk [vmem:[#allocation4 + $0x70] sm:$0xff] %vm37, %v733
  %748 = vst.msk [vmem:[#allocation4 + $0x88] sm:$0xff] %vm37, %v734
  %749 = vst.msk [vmem:[#allocation4 + $0xa0] sm:$0xff] %vm37, %v735
  %750 = vst.msk [vmem:[#allocation4 + $0xb8] sm:$0xff] %vm37, %v736
  %751 = vst.msk [vmem:[#allocation4 + $0xd0] sm:$0xff] %vm37, %v737
  %752 = vst.msk [vmem:[#allocation4 + $0xe8] sm:$0xff] %vm37, %v738
  %753 = vst.msk [vmem:[#allocation4 + $0x100] sm:$0xff] %vm37, %v739
  %754 = vst.msk [vmem:[#allocation4 + $0x118] sm:$0xff] %vm37, %v740
  %755 = vst.msk [vmem:[#allocation4 + $0x130] sm:$0xff] %vm37, %v741
  %756 = vst.msk [vmem:[#allocation4 + $0x148] sm:$0xff] %vm37, %v742
  %v757 = vld [vmem:[#allocation4] sm:$0xff]
  %v758 = vld [vmem:[#allocation4 + $0x8] sm:$0xff]
  %v759 = vld [vmem:[#allocation4 + $0x10] sm:$0xff]
  %v760 = vld [vmem:[#allocation4 + $0x18] sm:$0xff]
  %v761 = vld [vmem:[#allocation4 + $0x20] sm:$0xff]
  %v762 = vld [vmem:[#allocation4 + $0x28] sm:$0xff]
  %v763 = vld [vmem:[#allocation4 + $0x30] sm:$0xff]
  %v764 = vld [vmem:[#allocation4 + $0x38] sm:$0xff]
  %v765 = vld [vmem:[#allocation4 + $0x40] sm:$0xff]
  %v766 = vld [vmem:[#allocation4 + $0x48] sm:$0xff]
  %v767 = vld [vmem:[#allocation4 + $0x50] sm:$0xff]
  %v768 = vld [vmem:[#allocation4 + $0x58] sm:$0xff]
  %v769 = vld [vmem:[#allocation4 + $0x60] sm:$0xff]
  %v770 = vld [vmem:[#allocation4 + $0x68] sm:$0xff]
  %v771 = vld [vmem:[#allocation4 + $0x70] sm:$0xff]
  %v772 = vld [vmem:[#allocation4 + $0x78] sm:$0xff]
  %v773 = vld [vmem:[#allocation4 + $0x80] sm:$0xff]
  %v774 = vld [vmem:[#allocation4 + $0x88] sm:$0xff]
  %v775 = vld [vmem:[#allocation4 + $0x90] sm:$0xff]
  %v776 = vld [vmem:[#allocation4 + $0x98] sm:$0xff]
  %v777 = vld [vmem:[#allocation4 + $0xa0] sm:$0xff]
  %v778 = vld [vmem:[#allocation4 + $0xa8] sm:$0xff]
  %v779 = vld [vmem:[#allocation4 + $0xb0] sm:$0xff]
  %v780 = vld [vmem:[#allocation4 + $0xb8] sm:$0xff]
  %v781 = vld [vmem:[#allocation4 + $0xc0] sm:$0xff]
  %v782 = vld [vmem:[#allocation4 + $0xc8] sm:$0xff]
  %v783 = vld [vmem:[#allocation4 + $0xd0] sm:$0xff]
  %v784 = vld [vmem:[#allocation4 + $0xd8] sm:$0xff]
  %v785 = vld [vmem:[#allocation4 + $0xe0] sm:$0xff]
  %v786 = vld [vmem:[#allocation4 + $0xe8] sm:$0xff]
  %v787 = vld [vmem:[#allocation4 + $0xf0] sm:$0xff]
  %v788 = vld [vmem:[#allocation4 + $0xf8] sm:$0xff]
  %v789 = vld [vmem:[#allocation4 + $0x100] sm:$0xff]
  %v790 = vld [vmem:[#allocation4 + $0x108] sm:$0xff]
  %v791 = vld [vmem:[#allocation4 + $0x110] sm:$0xff]
  %v792 = vld [vmem:[#allocation4 + $0x118] sm:$0xff]
  %v793 = vld [vmem:[#allocation4 + $0x120] sm:$0xff]
  %v794 = vld [vmem:[#allocation4 + $0x128] sm:$0xff]
  %v795 = vld [vmem:[#allocation4 + $0x130] sm:$0xff]
  %v796 = vld [vmem:[#allocation4 + $0x138] sm:$0xff]
  %v797 = vld [vmem:[#allocation4 + $0x140] sm:$0xff]
  %v798 = vld [vmem:[#allocation4 + $0x148] sm:$0xff]
  %v800 = vsel %vm37, %v759, 0
  %v803 = vsel %vm37, %v762, 0
  %v806 = vsel %vm37, %v765, 0
  %v809 = vsel %vm37, %v768, 0
  %v812 = vsel %vm37, %v771, 0
  %v815 = vsel %vm37, %v774, 0
  %v818 = vsel %vm37, %v777, 0
  %v821 = vsel %vm37, %v780, 0
  %v824 = vsel %vm37, %v783, 0
  %v827 = vsel %vm37, %v786, 0
  %v830 = vsel %vm37, %v789, 0
  %v833 = vsel %vm37, %v792, 0
  %v836 = vsel %vm37, %v795, 0
  %v839 = vsel %vm37, %v798, 0
  %841 = vmatpush.msra.mxu0 %v145
  %842 = vmatpush.msra.mxu0 %v144
  %843 = vmatpush.msra.mxu0 %v143
  %844 = vmatpush.msra.mxu0 %v142
  %845 = vmatpush.msra.mxu0 %v141
  %846 = vmatpush.msra.mxu0 %v140
  %847 = vmatpush.msra.mxu0 %v139
  %848 = vmatpush.msra.mxu0 %v138
  %849 = vmatpush.msra.mxu0 %v137
  %850 = vmatpush.msra.mxu0 %v136
  %851 = vmatpush.msra.mxu0 %v135
  %852 = vmatpush.msra.mxu0 %v134
  %853 = vmatpush.msra.mxu0 %v133
  %854 = vmatpush.msra.mxu0 %v132
  %855 = vmatpush.msra.mxu0 %v131
  %856 = vmatpush.msra.mxu0 %v130
  %857 = vmatmul.f32.gmra.mxu0 %v757
  %v858 = vpop.f32.mrf.mxu0
  %v859 = vadd.f32 0.0, %v858
  %860 = vmatmul.f32.gmra.mxu0 %v760
  %v861 = vpop.f32.mrf.mxu0
  %v862 = vadd.f32 0.0, %v861
  %863 = vmatmul.f32.gmra.mxu0 %v763
  %v864 = vpop.f32.mrf.mxu0
  %v865 = vadd.f32 0.0, %v864
  %866 = vmatmul.f32.gmra.mxu0 %v766
  %v867 = vpop.f32.mrf.mxu0
  %v868 = vadd.f32 0.0, %v867
  %869 = vmatmul.f32.gmra.mxu0 %v769
  %v870 = vpop.f32.mrf.mxu0
  %v871 = vadd.f32 0.0, %v870
  %872 = vmatmul.f32.gmra.mxu0 %v772
  %v873 = vpop.f32.mrf.mxu0
  %v874 = vadd.f32 0.0, %v873
  %875 = vmatmul.f32.gmra.mxu0 %v775
  %v876 = vpop.f32.mrf.mxu0
  %v877 = vadd.f32 0.0, %v876
  %878 = vmatmul.f32.gmra.mxu0 %v778
  %v879 = vpop.f32.mrf.mxu0
  %v880 = vadd.f32 0.0, %v879
  %881 = vmatmul.f32.gmra.mxu0 %v781
  %v882 = vpop.f32.mrf.mxu0
  %v883 = vadd.f32 0.0, %v882
  %884 = vmatmul.f32.gmra.mxu0 %v784
  %v885 = vpop.f32.mrf.mxu0
  %v886 = vadd.f32 0.0, %v885
  %887 = vmatmul.f32.gmra.mxu0 %v787
  %v888 = vpop.f32.mrf.mxu0
  %v889 = vadd.f32 0.0, %v888
  %890 = vmatmul.f32.gmra.mxu0 %v790
  %v891 = vpop.f32.mrf.mxu0
  %v892 = vadd.f32 0.0, %v891
  %893 = vmatmul.f32.gmra.mxu0 %v793
  %v894 = vpop.f32.mrf.mxu0
  %v895 = vadd.f32 0.0, %v894
  %896 = vmatmul.f32.gmra.mxu0 %v796
  %v897 = vpop.f32.mrf.mxu0
  %v898 = vadd.f32 0.0, %v897
  %899 = vdwg.mxu0
  %900 = vmatpush.msra.mxu0 %v161
  %901 = vmatpush.msra.mxu0 %v160
  %902 = vmatpush.msra.mxu0 %v159
  %903 = vmatpush.msra.mxu0 %v158
  %904 = vmatpush.msra.mxu0 %v157
  %905 = vmatpush.msra.mxu0 %v156
  %906 = vmatpush.msra.mxu0 %v155
  %907 = vmatpush.msra.mxu0 %v154
  %908 = vmatpush.msra.mxu0 %v153
  %909 = vmatpush.msra.mxu0 %v152
  %910 = vmatpush.msra.mxu0 %v151
  %911 = vmatpush.msra.mxu0 %v150
  %912 = vmatpush.msra.mxu0 %v149
  %913 = vmatpush.msra.mxu0 %v148
  %914 = vmatpush.msra.mxu0 %v147
  %915 = vmatpush.msra.mxu0 %v146
  %916 = vmatmul.f32.gmra.mxu0 %v758
  %v917 = vpop.f32.mrf.mxu0
  %v918 = vadd.f32 %v859, %v917
  %919 = vmatmul.f32.gmra.mxu0 %v761
  %v920 = vpop.f32.mrf.mxu0
  %v921 = vadd.f32 %v862, %v920
  %922 = vmatmul.f32.gmra.mxu0 %v764
  %v923 = vpop.f32.mrf.mxu0
  %v924 = vadd.f32 %v865, %v923
  %925 = vmatmul.f32.gmra.mxu0 %v767
  %v926 = vpop.f32.mrf.mxu0
  %v927 = vadd.f32 %v868, %v926
  %928 = vmatmul.f32.gmra.mxu0 %v770
  %v929 = vpop.f32.mrf.mxu0
  %v930 = vadd.f32 %v871, %v929
  %931 = vmatmul.f32.gmra.mxu0 %v773
  %v932 = vpop.f32.mrf.mxu0
  %v933 = vadd.f32 %v874, %v932
  %934 = vmatmul.f32.gmra.mxu0 %v776
  %v935 = vpop.f32.mrf.mxu0
  %v936 = vadd.f32 %v877, %v935
  %937 = vmatmul.f32.gmra.mxu0 %v779
  %v938 = vpop.f32.mrf.mxu0
  %v939 = vadd.f32 %v880, %v938
  %940 = vmatmul.f32.gmra.mxu0 %v782
  %v941 = vpop.f32.mrf.mxu0
  %v942 = vadd.f32 %v883, %v941
  %943 = vmatmul.f32.gmra.mxu0 %v785
  %v944 = vpop.f32.mrf.mxu0
  %v945 = vadd.f32 %v886, %v944
  %946 = vmatmul.f32.gmra.mxu0 %v788
  %v947 = vpop.f32.mrf.mxu0
  %v948 = vadd.f32 %v889, %v947
  %949 = vmatmul.f32.gmra.mxu0 %v791
  %v950 = vpop.f32.mrf.mxu0
  %v951 = vadd.f32 %v892, %v950
  %952 = vmatmul.f32.gmra.mxu0 %v794
  %v953 = vpop.f32.mrf.mxu0
  %v954 = vadd.f32 %v895, %v953
  %955 = vmatmul.f32.gmra.mxu0 %v797
  %v956 = vpop.f32.mrf.mxu0
  %v957 = vadd.f32 %v898, %v956
  %958 = vdwg.mxu0
  %959 = vmatpush.msra.mxu0 0.0
  %960 = vmatpush.msra.mxu0 0.0
  %961 = vmatpush.msra.mxu0 0.0
  %962 = vmatpush.msra.mxu0 0.0
  %963 = vmatpush.msra.mxu0 0.0
  %964 = vmatpush.msra.mxu0 0.0
  %965 = vmatpush.msra.mxu0 0.0
  %966 = vmatpush.msra.mxu0 0.0
  %967 = vmatpush.msra.mxu0 0.0
  %968 = vmatpush.msra.mxu0 0.0
  %969 = vmatpush.msra.mxu0 0.0
  %970 = vmatpush.msra.mxu0 0.0
  %971 = vmatpush.msra.mxu0 %v165
  %972 = vmatpush.msra.mxu0 %v164
  %973 = vmatpush.msra.mxu0 %v163
  %974 = vmatpush.msra.mxu0 %v162
  %975 = vmatmul.f32.gmra.mxu0 %v800
  %v976 = vpop.f32.mrf.mxu0
  %v977 = vadd.f32 %v918, %v976
  %978 = vmatmul.f32.gmra.mxu0 %v803
  %v979 = vpop.f32.mrf.mxu0
  %v980 = vadd.f32 %v921, %v979
  %981 = vmatmul.f32.gmra.mxu0 %v806
  %v982 = vpop.f32.mrf.mxu0
  %v983 = vadd.f32 %v924, %v982
  %984 = vmatmul.f32.gmra.mxu0 %v809
  %v985 = vpop.f32.mrf.mxu0
  %v986 = vadd.f32 %v927, %v985
  %987 = vmatmul.f32.gmra.mxu0 %v812
  %v988 = vpop.f32.mrf.mxu0
  %v989 = vadd.f32 %v930, %v988
  %990 = vmatmul.f32.gmra.mxu0 %v815
  %v991 = vpop.f32.mrf.mxu0
  %v992 = vadd.f32 %v933, %v991
  %993 = vmatmul.f32.gmra.mxu0 %v818
  %v994 = vpop.f32.mrf.mxu0
  %v995 = vadd.f32 %v936, %v994
  %996 = vmatmul.f32.gmra.mxu0 %v821
  %v997 = vpop.f32.mrf.mxu0
  %v998 = vadd.f32 %v939, %v997
  %999 = vmatmul.f32.gmra.mxu0 %v824
  %v1000 = vpop.f32.mrf.mxu0
  %v1001 = vadd.f32 %v942, %v1000
  %1002 = vmatmul.f32.gmra.mxu0 %v827
  %v1003 = vpop.f32.mrf.mxu0
  %v1004 = vadd.f32 %v945, %v1003
  %1005 = vmatmul.f32.gmra.mxu0 %v830
  %v1006 = vpop.f32.mrf.mxu0
  %v1007 = vadd.f32 %v948, %v1006
  %1008 = vmatmul.f32.gmra.mxu0 %v833
  %v1009 = vpop.f32.mrf.mxu0
  %v1010 = vadd.f32 %v951, %v1009
  %1011 = vmatmul.f32.gmra.mxu0 %v836
  %v1012 = vpop.f32.mrf.mxu0
  %v1013 = vadd.f32 %v954, %v1012
  %1014 = vmatmul.f32.gmra.mxu0 %v839
  %v1015 = vpop.f32.mrf.mxu0
  %v1016 = vadd.f32 %v957, %v1015
  %1017 = vdwg.mxu0
  %v1018 = vmax.f32 %v977, 0.0
  %v1019 = vmax.f32 %v980, 0.0
  %v1020 = vmax.f32 %v983, 0.0
  %v1021 = vmax.f32 %v986, 0.0
  %v1022 = vmax.f32 %v989, 0.0
  %v1023 = vmax.f32 %v992, 0.0
  %v1024 = vmax.f32 %v995, 0.0
  %v1025 = vmax.f32 %v998, 0.0
  %v1026 = vmax.f32 %v1001, 0.0
  %v1027 = vmax.f32 %v1004, 0.0
  %v1028 = vmax.f32 %v1007, 0.0
  %v1029 = vmax.f32 %v1010, 0.0
  %v1030 = vmax.f32 %v1013, 0.0
  %v1031 = vmax.f32 %v1016, 0.0
  %v1032 = vmul.f32 %v1018, %v63
  %v1033 = vmul.f32 %v1019, %v68
  %v1034 = vmul.f32 %v1020, %v73
  %v1035 = vmul.f32 %v1021, %v78
  %v1036 = vmul.f32 %v1022, %v83
  %v1037 = vmul.f32 %v1023, %v88
  %v1038 = vmul.f32 %v1024, %v93
  %v1039 = vmul.f32 %v1025, %v98
  %v1040 = vmul.f32 %v1026, %v103
  %v1041 = vmul.f32 %v1027, %v108
  %v1042 = vmul.f32 %v1028, %v113
  %v1043 = vmul.f32 %v1029, %v118
  %v1044 = vmul.f32 %v1030, %v123
  %v1045 = vmul.f32 %v1031, %v128
  %1046 = vst.msk [vmem:[#allocation2 + $0x10] sm:$0xff] %vm37, %v1032
  %1047 = vst.msk [vmem:[#allocation2 + $0x18] sm:$0xff] %vm37, %v1033
  %1048 = vst.msk [vmem:[#allocation2 + $0x20] sm:$0xff] %vm37, %v1034
  %1049 = vst.msk [vmem:[#allocation2 + $0x28] sm:$0xff] %vm37, %v1035
  %1050 = vst.msk [vmem:[#allocation2 + $0x30] sm:$0xff] %vm37, %v1036
  %1051 = vst.msk [vmem:[#allocation2 + $0x38] sm:$0xff] %vm37, %v1037
  %1052 = vst.msk [vmem:[#allocation2 + $0x40] sm:$0xff] %vm37, %v1038
  %1053 = vst.msk [vmem:[#allocation2 + $0x48] sm:$0xff] %vm37, %v1039
  %1054 = vst.msk [vmem:[#allocation2 + $0x50] sm:$0xff] %vm37, %v1040
  %1055 = vst.msk [vmem:[#allocation2 + $0x58] sm:$0xff] %vm37, %v1041
  %1056 = vst.msk [vmem:[#allocation2 + $0x60] sm:$0xff] %vm37, %v1042
  %1057 = vst.msk [vmem:[#allocation2 + $0x68] sm:$0xff] %vm37, %v1043
  %1058 = vst.msk [vmem:[#allocation2 + $0x70] sm:$0xff] %vm37, %v1044
  %1059 = vst.msk [vmem:[#allocation2 + $0x78] sm:$0xff] %vm37, %v1045
  %v1060 = vld [vmem:[%s3] sm:$0xff]
  %v1061 = vld [vmem:[%s3 + $0x8] sm:$0xff]
  %v1062 = vld [vmem:[%s3 + $0x10] sm:$0xff]
  %v1063 = vld [vmem:[%s3 + $0x18] sm:$0xff]
  %v1064 = vld [vmem:[%s3 + $0x20] sm:$0xff]
  %v1065 = vld [vmem:[%s3 + $0x28] sm:$0xff]
  %v1066 = vld [vmem:[%s3 + $0x30] sm:$0xff]
  %v1067 = vld [vmem:[%s3 + $0x38] sm:$0xff]
  %v1068 = vld [vmem:[%s3 + $0x40] sm:$0xff]
  %v1069 = vld [vmem:[%s3 + $0x48] sm:$0xff]
  %v1070 = vld [vmem:[%s3 + $0x50] sm:$0xff]
  %v1071 = vld [vmem:[%s3 + $0x58] sm:$0xff]
  %v1072 = vld [vmem:[%s3 + $0x60] sm:$0xff]
  %v1073 = vld [vmem:[%s3 + $0x68] sm:$0xff]
  %v1074 = vld [vmem:[%s3 + $0x70] sm:$0xff]
  %v1075 = vld [vmem:[%s3 + $0x78] sm:$0xff]
  %v1076 = vld [vmem:[%s3 + $0x80] sm:$0xff]
  %v1077 = vld [vmem:[%s3 + $0x88] sm:$0xff]
  %v1078 = vld [vmem:[%s3 + $0x90] sm:$0xff]
  %v1079 = vld [vmem:[%s3 + $0x98] sm:$0xff]
  %v1080 = vld [vmem:[%s3 + $0xa0] sm:$0xff]
  %v1081 = vld [vmem:[%s3 + $0xa8] sm:$0xff]
  %v1082 = vld [vmem:[%s3 + $0xb0] sm:$0xff]
  %v1083 = vld [vmem:[%s3 + $0xb8] sm:$0xff]
  %v1084 = vld [vmem:[%s3 + $0xc0] sm:$0xff]
  %v1085 = vld [vmem:[%s3 + $0xc8] sm:$0xff]
  %v1086 = vld [vmem:[%s3 + $0xd0] sm:$0xff]
  %v1087 = vld [vmem:[%s3 + $0xd8] sm:$0xff]
  %v1088 = vld [vmem:[%s3 + $0xe0] sm:$0xff]
  %v1089 = vld [vmem:[%s3 + $0xe8] sm:$0xff]
  %v1090 = vld [vmem:[%s3 + $0xf0] sm:$0xff]
  %v1091 = vld [vmem:[%s3 + $0xf8] sm:$0xff]
  %v1092 = vld [vmem:[%s3 + $0x100] sm:$0xff]
  %v1093 = vld [vmem:[%s3 + $0x108] sm:$0xff]
  %v1094 = vld [vmem:[%s3 + $0x110] sm:$0xff]
  %v1095 = vld [vmem:[%s3 + $0x118] sm:$0xff]
  %v1096 = vld [vmem:[%s3 + $0x120] sm:$0xff]
  %v1097 = vld [vmem:[%s3 + $0x128] sm:$0xff]
  %v1098 = vld [vmem:[%s3 + $0x130] sm:$0xff]
  %v1099 = vld [vmem:[%s3 + $0x138] sm:$0xff]
  %v1100 = vld [vmem:[%s3 + $0x140] sm:$0xff]
  %v1101 = vld [vmem:[%s3 + $0x148] sm:$0xff]
  %v1102 = vld [vmem:[%s3 + $0x150] sm:$0xff]
  %v1103 = vld [vmem:[%s3 + $0x158] sm:$0xff]
  %v1104 = vld [vmem:[%s3 + $0x160] sm:$0xff]
  %v1105 = vld [vmem:[%s3 + $0x168] sm:$0xff]
  %v1106 = vld [vmem:[%s3 + $0x170] sm:$0xff]
  %v1107 = vld [vmem:[%s3 + $0x178] sm:$0xff]
  %v1108 = vld [vmem:[%s3 + $0x180] sm:$0xff]
  %v1109 = vld [vmem:[%s3 + $0x188] sm:$0xff]
  %v1110 = vld [vmem:[%s3 + $0x190] sm:$0xff]
  %v1111 = vld [vmem:[%s3 + $0x198] sm:$0xff]
  %v1112 = vld [vmem:[%s3 + $0x1a0] sm:$0xff]
  %v1113 = vld [vmem:[%s3 + $0x1a8] sm:$0xff]
  %v1114 = vld [vmem:[%s3 + $0x1b0] sm:$0xff]
  %v1115 = vld [vmem:[%s3 + $0x1b8] sm:$0xff]
  %v1116 = vld [vmem:[%s3 + $0x1c0] sm:$0xff]
  %v1117 = vld [vmem:[%s3 + $0x1c8] sm:$0xff]
  %v1118 = vld [vmem:[%s3 + $0x1d0] sm:$0xff]
  %v1119 = vld [vmem:[%s3 + $0x1d8] sm:$0xff]
  %v1120 = vld [vmem:[%s3 + $0x1e0] sm:$0xff]
  %v1121 = vld [vmem:[%s3 + $0x1e8] sm:$0xff]
  %v1122 = vld [vmem:[%s3 + $0x1f0] sm:$0xff]
  %v1123 = vld [vmem:[%s3 + $0x1f8] sm:$0xff]
  %v1124 = vld [vmem:[%s3 + $0x200] sm:$0xff]
  %v1125 = vld [vmem:[%s3 + $0x208] sm:$0xff]
  %v1126 = vld [vmem:[%s3 + $0x210] sm:$0xff]
  %v1127 = vld [vmem:[%s3 + $0x218] sm:$0xff]
  %v1128 = vld [vmem:[%s3 + $0x220] sm:$0xff]
  %v1129 = vld [vmem:[%s3 + $0x228] sm:$0xff]
  %v1130 = vld [vmem:[%s3 + $0x230] sm:$0xff]
  %v1131 = vld [vmem:[%s3 + $0x238] sm:$0xff]
  %v1132 = vld [vmem:[#allocation2 + $0x7] sm:$0xff]
  %v1133 = vld [vmem:[#allocation2 + $0xf] sm:$0xff]
  %v1134 = vld [vmem:[#allocation2 + $0x17] sm:$0xff]
  %v1135 = vld [vmem:[#allocation2 + $0x1f] sm:$0xff]
  %v1136 = vld [vmem:[#allocation2 + $0x27] sm:$0xff]
  %v1137 = vld [vmem:[#allocation2 + $0x2f] sm:$0xff]
  %v1138 = vld [vmem:[#allocation2 + $0x37] sm:$0xff]
  %v1139 = vld [vmem:[#allocation2 + $0x3f] sm:$0xff]
  %v1140 = vld [vmem:[#allocation2 + $0x47] sm:$0xff]
  %v1141 = vld [vmem:[#allocation2 + $0x4f] sm:$0xff]
  %v1142 = vld [vmem:[#allocation2 + $0x57] sm:$0xff]
  %v1143 = vld [vmem:[#allocation2 + $0x5f] sm:$0xff]
  %v1144 = vld [vmem:[#allocation2 + $0x67] sm:$0xff]
  %v1145 = vld [vmem:[#allocation2 + $0x6f] sm:$0xff]
  %1146 = vst.msk [vmem:[#allocation4] sm:$0xff] %vm37, %v1132
  %1147 = vst.msk [vmem:[#allocation4 + $0x18] sm:$0xff] %vm37, %v1133
  %1148 = vst.msk [vmem:[#allocation4 + $0x30] sm:$0xff] %vm37, %v1134
  %1149 = vst.msk [vmem:[#allocation4 + $0x48] sm:$0xff] %vm37, %v1135
  %1150 = vst.msk [vmem:[#allocation4 + $0x60] sm:$0xff] %vm37, %v1136
  %1151 = vst.msk [vmem:[#allocation4 + $0x78] sm:$0xff] %vm37, %v1137
  %1152 = vst.msk [vmem:[#allocation4 + $0x90] sm:$0xff] %vm37, %v1138
  %1153 = vst.msk [vmem:[#allocation4 + $0xa8] sm:$0xff] %vm37, %v1139
  %1154 = vst.msk [vmem:[#allocation4 + $0xc0] sm:$0xff] %vm37, %v1140
  %1155 = vst.msk [vmem:[#allocation4 + $0xd8] sm:$0xff] %vm37, %v1141
  %1156 = vst.msk [vmem:[#allocation4 + $0xf0] sm:$0xff] %vm37, %v1142
  %1157 = vst.msk [vmem:[#allocation4 + $0x108] sm:$0xff] %vm37, %v1143
  %1158 = vst.msk [vmem:[#allocation4 + $0x120] sm:$0xff] %vm37, %v1144
  %1159 = vst.msk [vmem:[#allocation4 + $0x138] sm:$0xff] %vm37, %v1145
  %v1160 = vld [vmem:[#allocation2 + $0x8] sm:$0xff]
  %v1161 = vld [vmem:[#allocation2 + $0x10] sm:$0xff]
  %v1162 = vld [vmem:[#allocation2 + $0x18] sm:$0xff]
  %v1163 = vld [vmem:[#allocation2 + $0x20] sm:$0xff]
  %v1164 = vld [vmem:[#allocation2 + $0x28] sm:$0xff]
  %v1165 = vld [vmem:[#allocation2 + $0x30] sm:$0xff]
  %v1166 = vld [vmem:[#allocation2 + $0x38] sm:$0xff]
  %v1167 = vld [vmem:[#allocation2 + $0x40] sm:$0xff]
  %v1168 = vld [vmem:[#allocation2 + $0x48] sm:$0xff]
  %v1169 = vld [vmem:[#allocation2 + $0x50] sm:$0xff]
  %v1170 = vld [vmem:[#allocation2 + $0x58] sm:$0xff]
  %v1171 = vld [vmem:[#allocation2 + $0x60] sm:$0xff]
  %v1172 = vld [vmem:[#allocation2 + $0x68] sm:$0xff]
  %v1173 = vld [vmem:[#allocation2 + $0x70] sm:$0xff]
  %1188 = vrot.lane.b32.xlu0 %v1160, 32
  %v1189 = vpop.permute.xlu0 %1188
  %1190 = vrot.lane.b32.xlu0 %v1161, 32
  %v1191 = vpop.permute.xlu0 %1190
  %1192 = vrot.lane.b32.xlu0 %v1162, 32
  %v1193 = vpop.permute.xlu0 %1192
  %1194 = vrot.lane.b32.xlu0 %v1163, 32
  %v1195 = vpop.permute.xlu0 %1194
  %1196 = vrot.lane.b32.xlu0 %v1164, 32
  %v1197 = vpop.permute.xlu0 %1196
  %1198 = vrot.lane.b32.xlu0 %v1165, 32
  %v1199 = vpop.permute.xlu0 %1198
  %1200 = vrot.lane.b32.xlu0 %v1166, 32
  %v1201 = vpop.permute.xlu0 %1200
  %1202 = vrot.lane.b32.xlu0 %v1167, 32
  %v1203 = vpop.permute.xlu0 %1202
  %1204 = vrot.lane.b32.xlu0 %v1168, 32
  %v1205 = vpop.permute.xlu0 %1204
  %1206 = vrot.lane.b32.xlu0 %v1169, 32
  %v1207 = vpop.permute.xlu0 %1206
  %1208 = vrot.lane.b32.xlu0 %v1170, 32
  %v1209 = vpop.permute.xlu0 %1208
  %1210 = vrot.lane.b32.xlu0 %v1171, 32
  %v1211 = vpop.permute.xlu0 %1210
  %1212 = vrot.lane.b32.xlu0 %v1172, 32
  %v1213 = vpop.permute.xlu0 %1212
  %1214 = vrot.lane.b32.xlu0 %v1173, 32
  %v1215 = vpop.permute.xlu0 %1214
  %1230 = vst.msk [vmem:[#allocation4] sm:$0xff] %vm264, %v1189
  %1231 = vst.msk [vmem:[#allocation4 + $0x18] sm:$0xff] %vm264, %v1191
  %1232 = vst.msk [vmem:[#allocation4 + $0x30] sm:$0xff] %vm264, %v1193
  %1233 = vst.msk [vmem:[#allocation4 + $0x48] sm:$0xff] %vm264, %v1195
  %1234 = vst.msk [vmem:[#allocation4 + $0x60] sm:$0xff] %vm264, %v1197
  %1235 = vst.msk [vmem:[#allocation4 + $0x78] sm:$0xff] %vm264, %v1199
  %1236 = vst.msk [vmem:[#allocation4 + $0x90] sm:$0xff] %vm264, %v1201
  %1237 = vst.msk [vmem:[#allocation4 + $0xa8] sm:$0xff] %vm264, %v1203
  %1238 = vst.msk [vmem:[#allocation4 + $0xc0] sm:$0xff] %vm264, %v1205
  %1239 = vst.msk [vmem:[#allocation4 + $0xd8] sm:$0xff] %vm264, %v1207
  %1240 = vst.msk [vmem:[#allocation4 + $0xf0] sm:$0xff] %vm264, %v1209
  %1241 = vst.msk [vmem:[#allocation4 + $0x108] sm:$0xff] %vm264, %v1211
  %1242 = vst.msk [vmem:[#allocation4 + $0x120] sm:$0xff] %vm264, %v1213
  %1243 = vst.msk [vmem:[#allocation4 + $0x138] sm:$0xff] %vm264, %v1215
  %v1244 = vld [vmem:[#allocation2 + $0x9] sm:$0xff]
  %v1245 = vld [vmem:[#allocation2 + $0x11] sm:$0xff]
  %v1246 = vld [vmem:[#allocation2 + $0x19] sm:$0xff]
  %v1247 = vld [vmem:[#allocation2 + $0x21] sm:$0xff]
  %v1248 = vld [vmem:[#allocation2 + $0x29] sm:$0xff]
  %v1249 = vld [vmem:[#allocation2 + $0x31] sm:$0xff]
  %v1250 = vld [vmem:[#allocation2 + $0x39] sm:$0xff]
  %v1251 = vld [vmem:[#allocation2 + $0x41] sm:$0xff]
  %v1252 = vld [vmem:[#allocation2 + $0x49] sm:$0xff]
  %v1253 = vld [vmem:[#allocation2 + $0x51] sm:$0xff]
  %v1254 = vld [vmem:[#allocation2 + $0x59] sm:$0xff]
  %v1255 = vld [vmem:[#allocation2 + $0x61] sm:$0xff]
  %v1256 = vld [vmem:[#allocation2 + $0x69] sm:$0xff]
  %v1257 = vld [vmem:[#allocation2 + $0x71] sm:$0xff]
  %1272 = vrot.lane.b32.xlu0 %v1244, 64
  %v1273 = vpop.permute.xlu0 %1272
  %1274 = vrot.lane.b32.xlu0 %v1245, 64
  %v1275 = vpop.permute.xlu0 %1274
  %1276 = vrot.lane.b32.xlu0 %v1246, 64
  %v1277 = vpop.permute.xlu0 %1276
  %1278 = vrot.lane.b32.xlu0 %v1247, 64
  %v1279 = vpop.permute.xlu0 %1278
  %1280 = vrot.lane.b32.xlu0 %v1248, 64
  %v1281 = vpop.permute.xlu0 %1280
  %1282 = vrot.lane.b32.xlu0 %v1249, 64
  %v1283 = vpop.permute.xlu0 %1282
  %1284 = vrot.lane.b32.xlu0 %v1250, 64
  %v1285 = vpop.permute.xlu0 %1284
  %1286 = vrot.lane.b32.xlu0 %v1251, 64
  %v1287 = vpop.permute.xlu0 %1286
  %1288 = vrot.lane.b32.xlu0 %v1252, 64
  %v1289 = vpop.permute.xlu0 %1288
  %1290 = vrot.lane.b32.xlu0 %v1253, 64
  %v1291 = vpop.permute.xlu0 %1290
  %1292 = vrot.lane.b32.xlu0 %v1254, 64
  %v1293 = vpop.permute.xlu0 %1292
  %1294 = vrot.lane.b32.xlu0 %v1255, 64
  %v1295 = vpop.permute.xlu0 %1294
  %1296 = vrot.lane.b32.xlu0 %v1256, 64
  %v1297 = vpop.permute.xlu0 %1296
  %1298 = vrot.lane.b32.xlu0 %v1257, 64
  %v1299 = vpop.permute.xlu0 %1298
  %1314 = vst.msk [vmem:[#allocation4] sm:$0xff] %vm349, %v1273
  %1315 = vst.msk [vmem:[#allocation4 + $0x18] sm:$0xff] %vm349, %v1275
  %1316 = vst.msk [vmem:[#allocation4 + $0x30] sm:$0xff] %vm349, %v1277
  %1317 = vst.msk [vmem:[#allocation4 + $0x48] sm:$0xff] %vm349, %v1279
  %1318 = vst.msk [vmem:[#allocation4 + $0x60] sm:$0xff] %vm349, %v1281
  %1319 = vst.msk [vmem:[#allocation4 + $0x78] sm:$0xff] %vm349, %v1283
  %1320 = vst.msk [vmem:[#allocation4 + $0x90] sm:$0xff] %vm349, %v1285
  %1321 = vst.msk [vmem:[#allocation4 + $0xa8] sm:$0xff] %vm349, %v1287
  %1322 = vst.msk [vmem:[#allocation4 + $0xc0] sm:$0xff] %vm349, %v1289
  %1323 = vst.msk [vmem:[#allocation4 + $0xd8] sm:$0xff] %vm349, %v1291
  %1324 = vst.msk [vmem:[#allocation4 + $0xf0] sm:$0xff] %vm349, %v1293
  %1325 = vst.msk [vmem:[#allocation4 + $0x108] sm:$0xff] %vm349, %v1295
  %1326 = vst.msk [vmem:[#allocation4 + $0x120] sm:$0xff] %vm349, %v1297
  %1327 = vst.msk [vmem:[#allocation4 + $0x138] sm:$0xff] %vm349, %v1299
  %v1328 = vld [vmem:[#allocation2 + $0xf] sm:$0xff]
  %v1329 = vld [vmem:[#allocation2 + $0x17] sm:$0xff]
  %v1330 = vld [vmem:[#allocation2 + $0x1f] sm:$0xff]
  %v1331 = vld [vmem:[#allocation2 + $0x27] sm:$0xff]
  %v1332 = vld [vmem:[#allocation2 + $0x2f] sm:$0xff]
  %v1333 = vld [vmem:[#allocation2 + $0x37] sm:$0xff]
  %v1334 = vld [vmem:[#allocation2 + $0x3f] sm:$0xff]
  %v1335 = vld [vmem:[#allocation2 + $0x47] sm:$0xff]
  %v1336 = vld [vmem:[#allocation2 + $0x4f] sm:$0xff]
  %v1337 = vld [vmem:[#allocation2 + $0x57] sm:$0xff]
  %v1338 = vld [vmem:[#allocation2 + $0x5f] sm:$0xff]
  %v1339 = vld [vmem:[#allocation2 + $0x67] sm:$0xff]
  %v1340 = vld [vmem:[#allocation2 + $0x6f] sm:$0xff]
  %v1341 = vld [vmem:[#allocation2 + $0x77] sm:$0xff]
  %1356 = vrot.lane.b32.xlu0 %v1328, 96
  %v1357 = vpop.permute.xlu0 %1356
  %1358 = vrot.lane.b32.xlu0 %v1329, 96
  %v1359 = vpop.permute.xlu0 %1358
  %1360 = vrot.lane.b32.xlu0 %v1330, 96
  %v1361 = vpop.permute.xlu0 %1360
  %1362 = vrot.lane.b32.xlu0 %v1331, 96
  %v1363 = vpop.permute.xlu0 %1362
  %1364 = vrot.lane.b32.xlu0 %v1332, 96
  %v1365 = vpop.permute.xlu0 %1364
  %1366 = vrot.lane.b32.xlu0 %v1333, 96
  %v1367 = vpop.permute.xlu0 %1366
  %1368 = vrot.lane.b32.xlu0 %v1334, 96
  %v1369 = vpop.permute.xlu0 %1368
  %1370 = vrot.lane.b32.xlu0 %v1335, 96
  %v1371 = vpop.permute.xlu0 %1370
  %1372 = vrot.lane.b32.xlu0 %v1336, 96
  %v1373 = vpop.permute.xlu0 %1372
  %1374 = vrot.lane.b32.xlu0 %v1337, 96
  %v1375 = vpop.permute.xlu0 %1374
  %1376 = vrot.lane.b32.xlu0 %v1338, 96
  %v1377 = vpop.permute.xlu0 %1376
  %1378 = vrot.lane.b32.xlu0 %v1339, 96
  %v1379 = vpop.permute.xlu0 %1378
  %1380 = vrot.lane.b32.xlu0 %v1340, 96
  %v1381 = vpop.permute.xlu0 %1380
  %1382 = vrot.lane.b32.xlu0 %v1341, 96
  %v1383 = vpop.permute.xlu0 %1382
  %1398 = vst.msk [vmem:[#allocation4] sm:$0xff] %vm434, %v1357
  %1399 = vst.msk [vmem:[#allocation4 + $0x18] sm:$0xff] %vm434, %v1359
  %1400 = vst.msk [vmem:[#allocation4 + $0x30] sm:$0xff] %vm434, %v1361
  %1401 = vst.msk [vmem:[#allocation4 + $0x48] sm:$0xff] %vm434, %v1363
  %1402 = vst.msk [vmem:[#allocation4 + $0x60] sm:$0xff] %vm434, %v1365
  %1403 = vst.msk [vmem:[#allocation4 + $0x78] sm:$0xff] %vm434, %v1367
  %1404 = vst.msk [vmem:[#allocation4 + $0x90] sm:$0xff] %vm434, %v1369
  %1405 = vst.msk [vmem:[#allocation4 + $0xa8] sm:$0xff] %vm434, %v1371
  %1406 = vst.msk [vmem:[#allocation4 + $0xc0] sm:$0xff] %vm434, %v1373
  %1407 = vst.msk [vmem:[#allocation4 + $0xd8] sm:$0xff] %vm434, %v1375
  %1408 = vst.msk [vmem:[#allocation4 + $0xf0] sm:$0xff] %vm434, %v1377
  %1409 = vst.msk [vmem:[#allocation4 + $0x108] sm:$0xff] %vm434, %v1379
  %1410 = vst.msk [vmem:[#allocation4 + $0x120] sm:$0xff] %vm434, %v1381
  %1411 = vst.msk [vmem:[#allocation4 + $0x138] sm:$0xff] %vm434, %v1383
  %v1412 = vld [vmem:[#allocation2 + $0x10] sm:$0xff]
  %v1413 = vld [vmem:[#allocation2 + $0x18] sm:$0xff]
  %v1414 = vld [vmem:[#allocation2 + $0x20] sm:$0xff]
  %v1415 = vld [vmem:[#allocation2 + $0x28] sm:$0xff]
  %v1416 = vld [vmem:[#allocation2 + $0x30] sm:$0xff]
  %v1417 = vld [vmem:[#allocation2 + $0x38] sm:$0xff]
  %v1418 = vld [vmem:[#allocation2 + $0x40] sm:$0xff]
  %v1419 = vld [vmem:[#allocation2 + $0x48] sm:$0xff]
  %v1420 = vld [vmem:[#allocation2 + $0x50] sm:$0xff]
  %v1421 = vld [vmem:[#allocation2 + $0x58] sm:$0xff]
  %v1422 = vld [vmem:[#allocation2 + $0x60] sm:$0xff]
  %v1423 = vld [vmem:[#allocation2 + $0x68] sm:$0xff]
  %v1424 = vld [vmem:[#allocation2 + $0x70] sm:$0xff]
  %v1425 = vld [vmem:[#allocation2 + $0x78] sm:$0xff]
  %1426 = vst.msk [vmem:[#allocation4 + $0x8] sm:$0xff] %vm37, %v1412
  %1427 = vst.msk [vmem:[#allocation4 + $0x20] sm:$0xff] %vm37, %v1413
  %1428 = vst.msk [vmem:[#allocation4 + $0x38] sm:$0xff] %vm37, %v1414
  %1429 = vst.msk [vmem:[#allocation4 + $0x50] sm:$0xff] %vm37, %v1415
  %1430 = vst.msk [vmem:[#allocation4 + $0x68] sm:$0xff] %vm37, %v1416
  %1431 = vst.msk [vmem:[#allocation4 + $0x80] sm:$0xff] %vm37, %v1417
  %1432 = vst.msk [vmem:[#allocation4 + $0x98] sm:$0xff] %vm37, %v1418
  %1433 = vst.msk [vmem:[#allocation4 + $0xb0] sm:$0xff] %vm37, %v1419
  %1434 = vst.msk [vmem:[#allocation4 + $0xc8] sm:$0xff] %vm37, %v1420
  %1435 = vst.msk [vmem:[#allocation4 + $0xe0] sm:$0xff] %vm37, %v1421
  %1436 = vst.msk [vmem:[#allocation4 + $0xf8] sm:$0xff] %vm37, %v1422
  %1437 = vst.msk [vmem:[#allocation4 + $0x110] sm:$0xff] %vm37, %v1423
  %1438 = vst.msk [vmem:[#allocation4 + $0x128] sm:$0xff] %vm37, %v1424
  %1439 = vst.msk [vmem:[#allocation4 + $0x140] sm:$0xff] %vm37, %v1425
  %v1440 = vld [vmem:[#allocation2 + $0x11] sm:$0xff]
  %v1441 = vld [vmem:[#allocation2 + $0x19] sm:$0xff]
  %v1442 = vld [vmem:[#allocation2 + $0x21] sm:$0xff]
  %v1443 = vld [vmem:[#allocation2 + $0x29] sm:$0xff]
  %v1444 = vld [vmem:[#allocation2 + $0x31] sm:$0xff]
  %v1445 = vld [vmem:[#allocation2 + $0x39] sm:$0xff]
  %v1446 = vld [vmem:[#allocation2 + $0x41] sm:$0xff]
  %v1447 = vld [vmem:[#allocation2 + $0x49] sm:$0xff]
  %v1448 = vld [vmem:[#allocation2 + $0x51] sm:$0xff]
  %v1449 = vld [vmem:[#allocation2 + $0x59] sm:$0xff]
  %v1450 = vld [vmem:[#allocation2 + $0x61] sm:$0xff]
  %v1451 = vld [vmem:[#allocation2 + $0x69] sm:$0xff]
  %v1452 = vld [vmem:[#allocation2 + $0x71] sm:$0xff]
  %v1453 = vld [vmem:[#allocation2 + $0x79] sm:$0xff]
  %1468 = vrot.lane.b32.xlu0 %v1440, 32
  %v1469 = vpop.permute.xlu0 %1468
  %1470 = vrot.lane.b32.xlu0 %v1441, 32
  %v1471 = vpop.permute.xlu0 %1470
  %1472 = vrot.lane.b32.xlu0 %v1442, 32
  %v1473 = vpop.permute.xlu0 %1472
  %1474 = vrot.lane.b32.xlu0 %v1443, 32
  %v1475 = vpop.permute.xlu0 %1474
  %1476 = vrot.lane.b32.xlu0 %v1444, 32
  %v1477 = vpop.permute.xlu0 %1476
  %1478 = vrot.lane.b32.xlu0 %v1445, 32
  %v1479 = vpop.permute.xlu0 %1478
  %1480 = vrot.lane.b32.xlu0 %v1446, 32
  %v1481 = vpop.permute.xlu0 %1480
  %1482 = vrot.lane.b32.xlu0 %v1447, 32
  %v1483 = vpop.permute.xlu0 %1482
  %1484 = vrot.lane.b32.xlu0 %v1448, 32
  %v1485 = vpop.permute.xlu0 %1484
  %1486 = vrot.lane.b32.xlu0 %v1449, 32
  %v1487 = vpop.permute.xlu0 %1486
  %1488 = vrot.lane.b32.xlu0 %v1450, 32
  %v1489 = vpop.permute.xlu0 %1488
  %1490 = vrot.lane.b32.xlu0 %v1451, 32
  %v1491 = vpop.permute.xlu0 %1490
  %1492 = vrot.lane.b32.xlu0 %v1452, 32
  %v1493 = vpop.permute.xlu0 %1492
  %1494 = vrot.lane.b32.xlu0 %v1453, 32
  %v1495 = vpop.permute.xlu0 %1494
  %1510 = vst.msk [vmem:[#allocation4 + $0x8] sm:$0xff] %vm264, %v1469
  %1511 = vst.msk [vmem:[#allocation4 + $0x20] sm:$0xff] %vm264, %v1471
  %1512 = vst.msk [vmem:[#allocation4 + $0x38] sm:$0xff] %vm264, %v1473
  %1513 = vst.msk [vmem:[#allocation4 + $0x50] sm:$0xff] %vm264, %v1475
  %1514 = vst.msk [vmem:[#allocation4 + $0x68] sm:$0xff] %vm264, %v1477
  %1515 = vst.msk [vmem:[#allocation4 + $0x80] sm:$0xff] %vm264, %v1479
  %1516 = vst.msk [vmem:[#allocation4 + $0x98] sm:$0xff] %vm264, %v1481
  %1517 = vst.msk [vmem:[#allocation4 + $0xb0] sm:$0xff] %vm264, %v1483
  %1518 = vst.msk [vmem:[#allocation4 + $0xc8] sm:$0xff] %vm264, %v1485
  %1519 = vst.msk [vmem:[#allocation4 + $0xe0] sm:$0xff] %vm264, %v1487
  %1520 = vst.msk [vmem:[#allocation4 + $0xf8] sm:$0xff] %vm264, %v1489
  %1521 = vst.msk [vmem:[#allocation4 + $0x110] sm:$0xff] %vm264, %v1491
  %1522 = vst.msk [vmem:[#allocation4 + $0x128] sm:$0xff] %vm264, %v1493
  %1523 = vst.msk [vmem:[#allocation4 + $0x140] sm:$0xff] %vm264, %v1495
  %v1524 = vld [vmem:[#allocation2 + $0x17] sm:$0xff]
  %v1525 = vld [vmem:[#allocation2 + $0x1f] sm:$0xff]
  %v1526 = vld [vmem:[#allocation2 + $0x27] sm:$0xff]
  %v1527 = vld [vmem:[#allocation2 + $0x2f] sm:$0xff]
  %v1528 = vld [vmem:[#allocation2 + $0x37] sm:$0xff]
  %v1529 = vld [vmem:[#allocation2 + $0x3f] sm:$0xff]
  %v1530 = vld [vmem:[#allocation2 + $0x47] sm:$0xff]
  %v1531 = vld [vmem:[#allocation2 + $0x4f] sm:$0xff]
  %v1532 = vld [vmem:[#allocation2 + $0x57] sm:$0xff]
  %v1533 = vld [vmem:[#allocation2 + $0x5f] sm:$0xff]
  %v1534 = vld [vmem:[#allocation2 + $0x67] sm:$0xff]
  %v1535 = vld [vmem:[#allocation2 + $0x6f] sm:$0xff]
  %v1536 = vld [vmem:[#allocation2 + $0x77] sm:$0xff]
  %v1537 = vld [vmem:[#allocation2 + $0x7f] sm:$0xff]
  %1552 = vrot.lane.b32.xlu0 %v1524, 64
  %v1553 = vpop.permute.xlu0 %1552
  %1554 = vrot.lane.b32.xlu0 %v1525, 64
  %v1555 = vpop.permute.xlu0 %1554
  %1556 = vrot.lane.b32.xlu0 %v1526, 64
  %v1557 = vpop.permute.xlu0 %1556
  %1558 = vrot.lane.b32.xlu0 %v1527, 64
  %v1559 = vpop.permute.xlu0 %1558
  %1560 = vrot.lane.b32.xlu0 %v1528, 64
  %v1561 = vpop.permute.xlu0 %1560
  %1562 = vrot.lane.b32.xlu0 %v1529, 64
  %v1563 = vpop.permute.xlu0 %1562
  %1564 = vrot.lane.b32.xlu0 %v1530, 64
  %v1565 = vpop.permute.xlu0 %1564
  %1566 = vrot.lane.b32.xlu0 %v1531, 64
  %v1567 = vpop.permute.xlu0 %1566
  %1568 = vrot.lane.b32.xlu0 %v1532, 64
  %v1569 = vpop.permute.xlu0 %1568
  %1570 = vrot.lane.b32.xlu0 %v1533, 64
  %v1571 = vpop.permute.xlu0 %1570
  %1572 = vrot.lane.b32.xlu0 %v1534, 64
  %v1573 = vpop.permute.xlu0 %1572
  %1574 = vrot.lane.b32.xlu0 %v1535, 64
  %v1575 = vpop.permute.xlu0 %1574
  %1576 = vrot.lane.b32.xlu0 %v1536, 64
  %v1577 = vpop.permute.xlu0 %1576
  %1578 = vrot.lane.b32.xlu0 %v1537, 64
  %v1579 = vpop.permute.xlu0 %1578
  %1594 = vst.msk [vmem:[#allocation4 + $0x8] sm:$0xff] %vm349, %v1553
  %1595 = vst.msk [vmem:[#allocation4 + $0x20] sm:$0xff] %vm349, %v1555
  %1596 = vst.msk [vmem:[#allocation4 + $0x38] sm:$0xff] %vm349, %v1557
  %1597 = vst.msk [vmem:[#allocation4 + $0x50] sm:$0xff] %vm349, %v1559
  %1598 = vst.msk [vmem:[#allocation4 + $0x68] sm:$0xff] %vm349, %v1561
  %1599 = vst.msk [vmem:[#allocation4 + $0x80] sm:$0xff] %vm349, %v1563
  %1600 = vst.msk [vmem:[#allocation4 + $0x98] sm:$0xff] %vm349, %v1565
  %1601 = vst.msk [vmem:[#allocation4 + $0xb0] sm:$0xff] %vm349, %v1567
  %1602 = vst.msk [vmem:[#allocation4 + $0xc8] sm:$0xff] %vm349, %v1569
  %1603 = vst.msk [vmem:[#allocation4 + $0xe0] sm:$0xff] %vm349, %v1571
  %1604 = vst.msk [vmem:[#allocation4 + $0xf8] sm:$0xff] %vm349, %v1573
  %1605 = vst.msk [vmem:[#allocation4 + $0x110] sm:$0xff] %vm349, %v1575
  %1606 = vst.msk [vmem:[#allocation4 + $0x128] sm:$0xff] %vm349, %v1577
  %1607 = vst.msk [vmem:[#allocation4 + $0x140] sm:$0xff] %vm349, %v1579
  %v1608 = vld [vmem:[#allocation2 + $0x18] sm:$0xff]
  %v1609 = vld [vmem:[#allocation2 + $0x20] sm:$0xff]
  %v1610 = vld [vmem:[#allocation2 + $0x28] sm:$0xff]
  %v1611 = vld [vmem:[#allocation2 + $0x30] sm:$0xff]
  %v1612 = vld [vmem:[#allocation2 + $0x38] sm:$0xff]
  %v1613 = vld [vmem:[#allocation2 + $0x40] sm:$0xff]
  %v1614 = vld [vmem:[#allocation2 + $0x48] sm:$0xff]
  %v1615 = vld [vmem:[#allocation2 + $0x50] sm:$0xff]
  %v1616 = vld [vmem:[#allocation2 + $0x58] sm:$0xff]
  %v1617 = vld [vmem:[#allocation2 + $0x60] sm:$0xff]
  %v1618 = vld [vmem:[#allocation2 + $0x68] sm:$0xff]
  %v1619 = vld [vmem:[#allocation2 + $0x70] sm:$0xff]
  %v1620 = vld [vmem:[#allocation2 + $0x78] sm:$0xff]
  %v1621 = vld [vmem:[#allocation2 + $0x80] sm:$0xff]
  %1636 = vrot.lane.b32.xlu0 %v1608, 96
  %v1637 = vpop.permute.xlu0 %1636
  %1638 = vrot.lane.b32.xlu0 %v1609, 96
  %v1639 = vpop.permute.xlu0 %1638
  %1640 = vrot.lane.b32.xlu0 %v1610, 96
  %v1641 = vpop.permute.xlu0 %1640
  %1642 = vrot.lane.b32.xlu0 %v1611, 96
  %v1643 = vpop.permute.xlu0 %1642
  %1644 = vrot.lane.b32.xlu0 %v1612, 96
  %v1645 = vpop.permute.xlu0 %1644
  %1646 = vrot.lane.b32.xlu0 %v1613, 96
  %v1647 = vpop.permute.xlu0 %1646
  %1648 = vrot.lane.b32.xlu0 %v1614, 96
  %v1649 = vpop.permute.xlu0 %1648
  %1650 = vrot.lane.b32.xlu0 %v1615, 96
  %v1651 = vpop.permute.xlu0 %1650
  %1652 = vrot.lane.b32.xlu0 %v1616, 96
  %v1653 = vpop.permute.xlu0 %1652
  %1654 = vrot.lane.b32.xlu0 %v1617, 96
  %v1655 = vpop.permute.xlu0 %1654
  %1656 = vrot.lane.b32.xlu0 %v1618, 96
  %v1657 = vpop.permute.xlu0 %1656
  %1658 = vrot.lane.b32.xlu0 %v1619, 96
  %v1659 = vpop.permute.xlu0 %1658
  %1660 = vrot.lane.b32.xlu0 %v1620, 96
  %v1661 = vpop.permute.xlu0 %1660
  %1662 = vrot.lane.b32.xlu0 %v1621, 96
  %v1663 = vpop.permute.xlu0 %1662
  %1678 = vst.msk [vmem:[#allocation4 + $0x8] sm:$0xff] %vm434, %v1637
  %1679 = vst.msk [vmem:[#allocation4 + $0x20] sm:$0xff] %vm434, %v1639
  %1680 = vst.msk [vmem:[#allocation4 + $0x38] sm:$0xff] %vm434, %v1641
  %1681 = vst.msk [vmem:[#allocation4 + $0x50] sm:$0xff] %vm434, %v1643
  %1682 = vst.msk [vmem:[#allocation4 + $0x68] sm:$0xff] %vm434, %v1645
  %1683 = vst.msk [vmem:[#allocation4 + $0x80] sm:$0xff] %vm434, %v1647
  %1684 = vst.msk [vmem:[#allocation4 + $0x98] sm:$0xff] %vm434, %v1649
  %1685 = vst.msk [vmem:[#allocation4 + $0xb0] sm:$0xff] %vm434, %v1651
  %1686 = vst.msk [vmem:[#allocation4 + $0xc8] sm:$0xff] %vm434, %v1653
  %1687 = vst.msk [vmem:[#allocation4 + $0xe0] sm:$0xff] %vm434, %v1655
  %1688 = vst.msk [vmem:[#allocation4 + $0xf8] sm:$0xff] %vm434, %v1657
  %1689 = vst.msk [vmem:[#allocation4 + $0x110] sm:$0xff] %vm434, %v1659
  %1690 = vst.msk [vmem:[#allocation4 + $0x128] sm:$0xff] %vm434, %v1661
  %1691 = vst.msk [vmem:[#allocation4 + $0x140] sm:$0xff] %vm434, %v1663
  %v1692 = vld [vmem:[#allocation2 + $0x19] sm:$0xff]
  %v1693 = vld [vmem:[#allocation2 + $0x21] sm:$0xff]
  %v1694 = vld [vmem:[#allocation2 + $0x29] sm:$0xff]
  %v1695 = vld [vmem:[#allocation2 + $0x31] sm:$0xff]
  %v1696 = vld [vmem:[#allocation2 + $0x39] sm:$0xff]
  %v1697 = vld [vmem:[#allocation2 + $0x41] sm:$0xff]
  %v1698 = vld [vmem:[#allocation2 + $0x49] sm:$0xff]
  %v1699 = vld [vmem:[#allocation2 + $0x51] sm:$0xff]
  %v1700 = vld [vmem:[#allocation2 + $0x59] sm:$0xff]
  %v1701 = vld [vmem:[#allocation2 + $0x61] sm:$0xff]
  %v1702 = vld [vmem:[#allocation2 + $0x69] sm:$0xff]
  %v1703 = vld [vmem:[#allocation2 + $0x71] sm:$0xff]
  %v1704 = vld [vmem:[#allocation2 + $0x79] sm:$0xff]
  %v1705 = vld [vmem:[#allocation2 + $0x81] sm:$0xff]
  %1706 = vst.msk [vmem:[#allocation4 + $0x10] sm:$0xff] %vm37, %v1692
  %1707 = vst.msk [vmem:[#allocation4 + $0x28] sm:$0xff] %vm37, %v1693
  %1708 = vst.msk [vmem:[#allocation4 + $0x40] sm:$0xff] %vm37, %v1694
  %1709 = vst.msk [vmem:[#allocation4 + $0x58] sm:$0xff] %vm37, %v1695
  %1710 = vst.msk [vmem:[#allocation4 + $0x70] sm:$0xff] %vm37, %v1696
  %1711 = vst.msk [vmem:[#allocation4 + $0x88] sm:$0xff] %vm37, %v1697
  %1712 = vst.msk [vmem:[#allocation4 + $0xa0] sm:$0xff] %vm37, %v1698
  %1713 = vst.msk [vmem:[#allocation4 + $0xb8] sm:$0xff] %vm37, %v1699
  %1714 = vst.msk [vmem:[#allocation4 + $0xd0] sm:$0xff] %vm37, %v1700
  %1715 = vst.msk [vmem:[#allocation4 + $0xe8] sm:$0xff] %vm37, %v1701
  %1716 = vst.msk [vmem:[#allocation4 + $0x100] sm:$0xff] %vm37, %v1702
  %1717 = vst.msk [vmem:[#allocation4 + $0x118] sm:$0xff] %vm37, %v1703
  %1718 = vst.msk [vmem:[#allocation4 + $0x130] sm:$0xff] %vm37, %v1704
  %1719 = vst.msk [vmem:[#allocation4 + $0x148] sm:$0xff] %vm37, %v1705
  %v1720 = vld [vmem:[#allocation4] sm:$0xff]
  %v1721 = vld [vmem:[#allocation4 + $0x8] sm:$0xff]
  %v1722 = vld [vmem:[#allocation4 + $0x10] sm:$0xff]
  %v1723 = vld [vmem:[#allocation4 + $0x18] sm:$0xff]
  %v1724 = vld [vmem:[#allocation4 + $0x20] sm:$0xff]
  %v1725 = vld [vmem:[#allocation4 + $0x28] sm:$0xff]
  %v1726 = vld [vmem:[#allocation4 + $0x30] sm:$0xff]
  %v1727 = vld [vmem:[#allocation4 + $0x38] sm:$0xff]
  %v1728 = vld [vmem:[#allocation4 + $0x40] sm:$0xff]
  %v1729 = vld [vmem:[#allocation4 + $0x48] sm:$0xff]
  %v1730 = vld [vmem:[#allocation4 + $0x50] sm:$0xff]
  %v1731 = vld [vmem:[#allocation4 + $0x58] sm:$0xff]
  %v1732 = vld [vmem:[#allocation4 + $0x60] sm:$0xff]
  %v1733 = vld [vmem:[#allocation4 + $0x68] sm:$0xff]
  %v1734 = vld [vmem:[#allocation4 + $0x70] sm:$0xff]
  %v1735 = vld [vmem:[#allocation4 + $0x78] sm:$0xff]
  %v1736 = vld [vmem:[#allocation4 + $0x80] sm:$0xff]
  %v1737 = vld [vmem:[#allocation4 + $0x88] sm:$0xff]
  %v1738 = vld [vmem:[#allocation4 + $0x90] sm:$0xff]
  %v1739 = vld [vmem:[#allocation4 + $0x98] sm:$0xff]
  %v1740 = vld [vmem:[#allocation4 + $0xa0] sm:$0xff]
  %v1741 = vld [vmem:[#allocation4 + $0xa8] sm:$0xff]
  %v1742 = vld [vmem:[#allocation4 + $0xb0] sm:$0xff]
  %v1743 = vld [vmem:[#allocation4 + $0xb8] sm:$0xff]
  %v1744 = vld [vmem:[#allocation4 + $0xc0] sm:$0xff]
  %v1745 = vld [vmem:[#allocation4 + $0xc8] sm:$0xff]
  %v1746 = vld [vmem:[#allocation4 + $0xd0] sm:$0xff]
  %v1747 = vld [vmem:[#allocation4 + $0xd8] sm:$0xff]
  %v1748 = vld [vmem:[#allocation4 + $0xe0] sm:$0xff]
  %v1749 = vld [vmem:[#allocation4 + $0xe8] sm:$0xff]
  %v1750 = vld [vmem:[#allocation4 + $0xf0] sm:$0xff]
  %v1751 = vld [vmem:[#allocation4 + $0xf8] sm:$0xff]
  %v1752 = vld [vmem:[#allocation4 + $0x100] sm:$0xff]
  %v1753 = vld [vmem:[#allocation4 + $0x108] sm:$0xff]
  %v1754 = vld [vmem:[#allocation4 + $0x110] sm:$0xff]
  %v1755 = vld [vmem:[#allocation4 + $0x118] sm:$0xff]
  %v1756 = vld [vmem:[#allocation4 + $0x120] sm:$0xff]
  %v1757 = vld [vmem:[#allocation4 + $0x128] sm:$0xff]
  %v1758 = vld [vmem:[#allocation4 + $0x130] sm:$0xff]
  %v1759 = vld [vmem:[#allocation4 + $0x138] sm:$0xff]
  %v1760 = vld [vmem:[#allocation4 + $0x140] sm:$0xff]
  %v1761 = vld [vmem:[#allocation4 + $0x148] sm:$0xff]
  %v1763 = vsel %vm37, %v1722, 0
  %v1766 = vsel %vm37, %v1725, 0
  %v1769 = vsel %vm37, %v1728, 0
  %v1772 = vsel %vm37, %v1731, 0
  %v1775 = vsel %vm37, %v1734, 0
  %v1778 = vsel %vm37, %v1737, 0
  %v1781 = vsel %vm37, %v1740, 0
  %v1784 = vsel %vm37, %v1743, 0
  %v1787 = vsel %vm37, %v1746, 0
  %v1790 = vsel %vm37, %v1749, 0
  %v1793 = vsel %vm37, %v1752, 0
  %v1796 = vsel %vm37, %v1755, 0
  %v1799 = vsel %vm37, %v1758, 0
  %v1802 = vsel %vm37, %v1761, 0
  %1804 = vmatpush.msra.mxu0 %v1075
  %1805 = vmatpush.msra.mxu0 %v1074
  %1806 = vmatpush.msra.mxu0 %v1073
  %1807 = vmatpush.msra.mxu0 %v1072
  %1808 = vmatpush.msra.mxu0 %v1071
  %1809 = vmatpush.msra.mxu0 %v1070
  %1810 = vmatpush.msra.mxu0 %v1069
  %1811 = vmatpush.msra.mxu0 %v1068
  %1812 = vmatpush.msra.mxu0 %v1067
  %1813 = vmatpush.msra.mxu0 %v1066
  %1814 = vmatpush.msra.mxu0 %v1065
  %1815 = vmatpush.msra.mxu0 %v1064
  %1816 = vmatpush.msra.mxu0 %v1063
  %1817 = vmatpush.msra.mxu0 %v1062
  %1818 = vmatpush.msra.mxu0 %v1061
  %1819 = vmatpush.msra.mxu0 %v1060
  %1820 = vmatmul.f32.gmra.mxu0 %v1720
  %v1821 = vpop.f32.mrf.mxu0
  %v1822 = vadd.f32 0.0, %v1821
  %1823 = vmatmul.f32.gmra.mxu0 %v1723
  %v1824 = vpop.f32.mrf.mxu0
  %v1825 = vadd.f32 0.0, %v1824
  %1826 = vmatmul.f32.gmra.mxu0 %v1726
  %v1827 = vpop.f32.mrf.mxu0
  %v1828 = vadd.f32 0.0, %v1827
  %1829 = vmatmul.f32.gmra.mxu0 %v1729
  %v1830 = vpop.f32.mrf.mxu0
  %v1831 = vadd.f32 0.0, %v1830
  %1832 = vmatmul.f32.gmra.mxu0 %v1732
  %v1833 = vpop.f32.mrf.mxu0
  %v1834 = vadd.f32 0.0, %v1833
  %1835 = vmatmul.f32.gmra.mxu0 %v1735
  %v1836 = vpop.f32.mrf.mxu0
  %v1837 = vadd.f32 0.0, %v1836
  %1838 = vmatmul.f32.gmra.mxu0 %v1738
  %v1839 = vpop.f32.mrf.mxu0
  %v1840 = vadd.f32 0.0, %v1839
  %1841 = vmatmul.f32.gmra.mxu0 %v1741
  %v1842 = vpop.f32.mrf.mxu0
  %v1843 = vadd.f32 0.0, %v1842
  %1844 = vmatmul.f32.gmra.mxu0 %v1744
  %v1845 = vpop.f32.mrf.mxu0
  %v1846 = vadd.f32 0.0, %v1845
  %1847 = vmatmul.f32.gmra.mxu0 %v1747
  %v1848 = vpop.f32.mrf.mxu0
  %v1849 = vadd.f32 0.0, %v1848
  %1850 = vmatmul.f32.gmra.mxu0 %v1750
  %v1851 = vpop.f32.mrf.mxu0
  %v1852 = vadd.f32 0.0, %v1851
  %1853 = vmatmul.f32.gmra.mxu0 %v1753
  %v1854 = vpop.f32.mrf.mxu0
  %v1855 = vadd.f32 0.0, %v1854
  %1856 = vmatmul.f32.gmra.mxu0 %v1756
  %v1857 = vpop.f32.mrf.mxu0
  %v1858 = vadd.f32 0.0, %v1857
  %1859 = vmatmul.f32.gmra.mxu0 %v1759
  %v1860 = vpop.f32.mrf.mxu0
  %v1861 = vadd.f32 0.0, %v1860
  %1862 = vdwg.mxu0
  %1863 = vmatpush.msra.mxu0 %v1091
  %1864 = vmatpush.msra.mxu0 %v1090
  %1865 = vmatpush.msra.mxu0 %v1089
  %1866 = vmatpush.msra.mxu0 %v1088
  %1867 = vmatpush.msra.mxu0 %v1087
  %1868 = vmatpush.msra.mxu0 %v1086
  %1869 = vmatpush.msra.mxu0 %v1085
  %1870 = vmatpush.msra.mxu0 %v1084
  %1871 = vmatpush.msra.mxu0 %v1083
  %1872 = vmatpush.msra.mxu0 %v1082
  %1873 = vmatpush.msra.mxu0 %v1081
  %1874 = vmatpush.msra.mxu0 %v1080
  %1875 = vmatpush.msra.mxu0 %v1079
  %1876 = vmatpush.msra.mxu0 %v1078
  %1877 = vmatpush.msra.mxu0 %v1077
  %1878 = vmatpush.msra.mxu0 %v1076
  %1879 = vmatmul.f32.gmra.mxu0 %v1721
  %v1880 = vpop.f32.mrf.mxu0
  %v1881 = vadd.f32 %v1822, %v1880
  %1882 = vmatmul.f32.gmra.mxu0 %v1724
  %v1883 = vpop.f32.mrf.mxu0
  %v1884 = vadd.f32 %v1825, %v1883
  %1885 = vmatmul.f32.gmra.mxu0 %v1727
  %v1886 = vpop.f32.mrf.mxu0
  %v1887 = vadd.f32 %v1828, %v1886
  %1888 = vmatmul.f32.gmra.mxu0 %v1730
  %v1889 = vpop.f32.mrf.mxu0
  %v1890 = vadd.f32 %v1831, %v1889
  %1891 = vmatmul.f32.gmra.mxu0 %v1733
  %v1892 = vpop.f32.mrf.mxu0
  %v1893 = vadd.f32 %v1834, %v1892
  %1894 = vmatmul.f32.gmra.mxu0 %v1736
  %v1895 = vpop.f32.mrf.mxu0
  %v1896 = vadd.f32 %v1837, %v1895
  %1897 = vmatmul.f32.gmra.mxu0 %v1739
  %v1898 = vpop.f32.mrf.mxu0
  %v1899 = vadd.f32 %v1840, %v1898
  %1900 = vmatmul.f32.gmra.mxu0 %v1742
  %v1901 = vpop.f32.mrf.mxu0
  %v1902 = vadd.f32 %v1843, %v1901
  %1903 = vmatmul.f32.gmra.mxu0 %v1745
  %v1904 = vpop.f32.mrf.mxu0
  %v1905 = vadd.f32 %v1846, %v1904
  %1906 = vmatmul.f32.gmra.mxu0 %v1748
  %v1907 = vpop.f32.mrf.mxu0
  %v1908 = vadd.f32 %v1849, %v1907
  %1909 = vmatmul.f32.gmra.mxu0 %v1751
  %v1910 = vpop.f32.mrf.mxu0
  %v1911 = vadd.f32 %v1852, %v1910
  %1912 = vmatmul.f32.gmra.mxu0 %v1754
  %v1913 = vpop.f32.mrf.mxu0
  %v1914 = vadd.f32 %v1855, %v1913
  %1915 = vmatmul.f32.gmra.mxu0 %v1757
  %v1916 = vpop.f32.mrf.mxu0
  %v1917 = vadd.f32 %v1858, %v1916
  %1918 = vmatmul.f32.gmra.mxu0 %v1760
  %v1919 = vpop.f32.mrf.mxu0
  %v1920 = vadd.f32 %v1861, %v1919
  %1921 = vdwg.mxu0
  %1922 = vmatpush.msra.mxu0 0.0
  %1923 = vmatpush.msra.mxu0 0.0
  %1924 = vmatpush.msra.mxu0 0.0
  %1925 = vmatpush.msra.mxu0 0.0
  %1926 = vmatpush.msra.mxu0 0.0
  %1927 = vmatpush.msra.mxu0 0.0
  %1928 = vmatpush.msra.mxu0 0.0
  %1929 = vmatpush.msra.mxu0 0.0
  %1930 = vmatpush.msra.mxu0 0.0
  %1931 = vmatpush.msra.mxu0 0.0
  %1932 = vmatpush.msra.mxu0 0.0
  %1933 = vmatpush.msra.mxu0 0.0
  %1934 = vmatpush.msra.mxu0 %v1095
  %1935 = vmatpush.msra.mxu0 %v1094
  %1936 = vmatpush.msra.mxu0 %v1093
  %1937 = vmatpush.msra.mxu0 %v1092
  %1938 = vmatmul.f32.gmra.mxu0 %v1763
  %v1939 = vpop.f32.mrf.mxu0
  %v1940 = vadd.f32 %v1881, %v1939
  %1941 = vmatmul.f32.gmra.mxu0 %v1766
  %v1942 = vpop.f32.mrf.mxu0
  %v1943 = vadd.f32 %v1884, %v1942
  %1944 = vmatmul.f32.gmra.mxu0 %v1769
  %v1945 = vpop.f32.mrf.mxu0
  %v1946 = vadd.f32 %v1887, %v1945
  %1947 = vmatmul.f32.gmra.mxu0 %v1772
  %v1948 = vpop.f32.mrf.mxu0
  %v1949 = vadd.f32 %v1890, %v1948
  %1950 = vmatmul.f32.gmra.mxu0 %v1775
  %v1951 = vpop.f32.mrf.mxu0
  %v1952 = vadd.f32 %v1893, %v1951
  %1953 = vmatmul.f32.gmra.mxu0 %v1778
  %v1954 = vpop.f32.mrf.mxu0
  %v1955 = vadd.f32 %v1896, %v1954
  %1956 = vmatmul.f32.gmra.mxu0 %v1781
  %v1957 = vpop.f32.mrf.mxu0
  %v1958 = vadd.f32 %v1899, %v1957
  %1959 = vmatmul.f32.gmra.mxu0 %v1784
  %v1960 = vpop.f32.mrf.mxu0
  %v1961 = vadd.f32 %v1902, %v1960
  %1962 = vmatmul.f32.gmra.mxu0 %v1787
  %v1963 = vpop.f32.mrf.mxu0
  %v1964 = vadd.f32 %v1905, %v1963
  %1965 = vmatmul.f32.gmra.mxu0 %v1790
  %v1966 = vpop.f32.mrf.mxu0
  %v1967 = vadd.f32 %v1908, %v1966
  %1968 = vmatmul.f32.gmra.mxu0 %v1793
  %v1969 = vpop.f32.mrf.mxu0
  %v1970 = vadd.f32 %v1911, %v1969
  %1971 = vmatmul.f32.gmra.mxu0 %v1796
  %v1972 = vpop.f32.mrf.mxu0
  %v1973 = vadd.f32 %v1914, %v1972
  %1974 = vmatmul.f32.gmra.mxu0 %v1799
  %v1975 = vpop.f32.mrf.mxu0
  %v1976 = vadd.f32 %v1917, %v1975
  %1977 = vmatmul.f32.gmra.mxu0 %v1802
  %v1978 = vpop.f32.mrf.mxu0
  %v1979 = vadd.f32 %v1920, %v1978
  %1980 = vdwg.mxu0
  %v1981 = vmax.f32 %v1940, 0.0
  %v1982 = vmax.f32 %v1943, 0.0
  %v1983 = vmax.f32 %v1946, 0.0
  %v1984 = vmax.f32 %v1949, 0.0
  %v1985 = vmax.f32 %v1952, 0.0
  %v1986 = vmax.f32 %v1955, 0.0
  %v1987 = vmax.f32 %v1958, 0.0
  %v1988 = vmax.f32 %v1961, 0.0
  %v1989 = vmax.f32 %v1964, 0.0
  %v1990 = vmax.f32 %v1967, 0.0
  %v1991 = vmax.f32 %v1970, 0.0
  %v1992 = vmax.f32 %v1973, 0.0
  %v1993 = vmax.f32 %v1976, 0.0
  %v1994 = vmax.f32 %v1979, 0.0
  %v1995 = vmul.f32 %v1981, %v63
  %v1996 = vmul.f32 %v1982, %v68
  %v1997 = vmul.f32 %v1983, %v73
  %v1998 = vmul.f32 %v1984, %v78
  %v1999 = vmul.f32 %v1985, %v83
  %v2000 = vmul.f32 %v1986, %v88
  %v2001 = vmul.f32 %v1987, %v93
  %v2002 = vmul.f32 %v1988, %v98
  %v2003 = vmul.f32 %v1989, %v103
  %v2004 = vmul.f32 %v1990, %v108
  %v2005 = vmul.f32 %v1991, %v113
  %v2006 = vmul.f32 %v1992, %v118
  %v2007 = vmul.f32 %v1993, %v123
  %v2008 = vmul.f32 %v1994, %v128
  %2009 = vst.msk [vmem:[#allocation3 + $0x10] sm:$0xff] %vm37, %v1995
  %2010 = vst.msk [vmem:[#allocation3 + $0x18] sm:$0xff] %vm37, %v1996
  %2011 = vst.msk [vmem:[#allocation3 + $0x20] sm:$0xff] %vm37, %v1997
  %2012 = vst.msk [vmem:[#allocation3 + $0x28] sm:$0xff] %vm37, %v1998
  %2013 = vst.msk [vmem:[#allocation3 + $0x30] sm:$0xff] %vm37, %v1999
  %2014 = vst.msk [vmem:[#allocation3 + $0x38] sm:$0xff] %vm37, %v2000
  %2015 = vst.msk [vmem:[#allocation3 + $0x40] sm:$0xff] %vm37, %v2001
  %2016 = vst.msk [vmem:[#allocation3 + $0x48] sm:$0xff] %vm37, %v2002
  %2017 = vst.msk [vmem:[#allocation3 + $0x50] sm:$0xff] %vm37, %v2003
  %2018 = vst.msk [vmem:[#allocation3 + $0x58] sm:$0xff] %vm37, %v2004
  %2019 = vst.msk [vmem:[#allocation3 + $0x60] sm:$0xff] %vm37, %v2005
  %2020 = vst.msk [vmem:[#allocation3 + $0x68] sm:$0xff] %vm37, %v2006
  %2021 = vst.msk [vmem:[#allocation3 + $0x70] sm:$0xff] %vm37, %v2007
  %2022 = vst.msk [vmem:[#allocation3 + $0x78] sm:$0xff] %vm37, %v2008
  %v2023 = vld [vmem:[#allocation3 + $0x7] sm:$0xff]
  %v2024 = vld [vmem:[#allocation3 + $0xf] sm:$0xff]
  %v2025 = vld [vmem:[#allocation3 + $0x17] sm:$0xff]
  %v2026 = vld [vmem:[#allocation3 + $0x1f] sm:$0xff]
  %v2027 = vld [vmem:[#allocation3 + $0x27] sm:$0xff]
  %v2028 = vld [vmem:[#allocation3 + $0x2f] sm:$0xff]
  %v2029 = vld [vmem:[#allocation3 + $0x37] sm:$0xff]
  %v2030 = vld [vmem:[#allocation3 + $0x3f] sm:$0xff]
  %v2031 = vld [vmem:[#allocation3 + $0x47] sm:$0xff]
  %v2032 = vld [vmem:[#allocation3 + $0x4f] sm:$0xff]
  %v2033 = vld [vmem:[#allocation3 + $0x57] sm:$0xff]
  %v2034 = vld [vmem:[#allocation3 + $0x5f] sm:$0xff]
  %v2035 = vld [vmem:[#allocation3 + $0x67] sm:$0xff]
  %v2036 = vld [vmem:[#allocation3 + $0x6f] sm:$0xff]
  %2037 = vst.msk [vmem:[#allocation4] sm:$0xff] %vm37, %v2023
  %2038 = vst.msk [vmem:[#allocation4 + $0x18] sm:$0xff] %vm37, %v2024
  %2039 = vst.msk [vmem:[#allocation4 + $0x30] sm:$0xff] %vm37, %v2025
  %2040 = vst.msk [vmem:[#allocation4 + $0x48] sm:$0xff] %vm37, %v2026
  %2041 = vst.msk [vmem:[#allocation4 + $0x60] sm:$0xff] %vm37, %v2027
  %2042 = vst.msk [vmem:[#allocation4 + $0x78] sm:$0xff] %vm37, %v2028
  %2043 = vst.msk [vmem:[#allocation4 + $0x90] sm:$0xff] %vm37, %v2029
  %2044 = vst.msk [vmem:[#allocation4 + $0xa8] sm:$0xff] %vm37, %v2030
  %2045 = vst.msk [vmem:[#allocation4 + $0xc0] sm:$0xff] %vm37, %v2031
  %2046 = vst.msk [vmem:[#allocation4 + $0xd8] sm:$0xff] %vm37, %v2032
  %2047 = vst.msk [vmem:[#allocation4 + $0xf0] sm:$0xff] %vm37, %v2033
  %2048 = vst.msk [vmem:[#allocation4 + $0x108] sm:$0xff] %vm37, %v2034
  %2049 = vst.msk [vmem:[#allocation4 + $0x120] sm:$0xff] %vm37, %v2035
  %2050 = vst.msk [vmem:[#allocation4 + $0x138] sm:$0xff] %vm37, %v2036
  %v2051 = vld [vmem:[#allocation3 + $0x8] sm:$0xff]
  %v2052 = vld [vmem:[#allocation3 + $0x10] sm:$0xff]
  %v2053 = vld [vmem:[#allocation3 + $0x18] sm:$0xff]
  %v2054 = vld [vmem:[#allocation3 + $0x20] sm:$0xff]
  %v2055 = vld [vmem:[#allocation3 + $0x28] sm:$0xff]
  %v2056 = vld [vmem:[#allocation3 + $0x30] sm:$0xff]
  %v2057 = vld [vmem:[#allocation3 + $0x38] sm:$0xff]
  %v2058 = vld [vmem:[#allocation3 + $0x40] sm:$0xff]
  %v2059 = vld [vmem:[#allocation3 + $0x48] sm:$0xff]
  %v2060 = vld [vmem:[#allocation3 + $0x50] sm:$0xff]
  %v2061 = vld [vmem:[#allocation3 + $0x58] sm:$0xff]
  %v2062 = vld [vmem:[#allocation3 + $0x60] sm:$0xff]
  %v2063 = vld [vmem:[#allocation3 + $0x68] sm:$0xff]
  %v2064 = vld [vmem:[#allocation3 + $0x70] sm:$0xff]
  %2079 = vrot.lane.b32.xlu0 %v2051, 32
  %v2080 = vpop.permute.xlu0 %2079
  %2081 = vrot.lane.b32.xlu0 %v2052, 32
  %v2082 = vpop.permute.xlu0 %2081
  %2083 = vrot.lane.b32.xlu0 %v2053, 32
  %v2084 = vpop.permute.xlu0 %2083
  %2085 = vrot.lane.b32.xlu0 %v2054, 32
  %v2086 = vpop.permute.xlu0 %2085
  %2087 = vrot.lane.b32.xlu0 %v2055, 32
  %v2088 = vpop.permute.xlu0 %2087
  %2089 = vrot.lane.b32.xlu0 %v2056, 32
  %v2090 = vpop.permute.xlu0 %2089
  %2091 = vrot.lane.b32.xlu0 %v2057, 32
  %v2092 = vpop.permute.xlu0 %2091
  %2093 = vrot.lane.b32.xlu0 %v2058, 32
  %v2094 = vpop.permute.xlu0 %2093
  %2095 = vrot.lane.b32.xlu0 %v2059, 32
  %v2096 = vpop.permute.xlu0 %2095
  %2097 = vrot.lane.b32.xlu0 %v2060, 32
  %v2098 = vpop.permute.xlu0 %2097
  %2099 = vrot.lane.b32.xlu0 %v2061, 32
  %v2100 = vpop.permute.xlu0 %2099
  %2101 = vrot.lane.b32.xlu0 %v2062, 32
  %v2102 = vpop.permute.xlu0 %2101
  %2103 = vrot.lane.b32.xlu0 %v2063, 32
  %v2104 = vpop.permute.xlu0 %2103
  %2105 = vrot.lane.b32.xlu0 %v2064, 32
  %v2106 = vpop.permute.xlu0 %2105
  %2121 = vst.msk [vmem:[#allocation4] sm:$0xff] %vm264, %v2080
  %2122 = vst.msk [vmem:[#allocation4 + $0x18] sm:$0xff] %vm264, %v2082
  %2123 = vst.msk [vmem:[#allocation4 + $0x30] sm:$0xff] %vm264, %v2084
  %2124 = vst.msk [vmem:[#allocation4 + $0x48] sm:$0xff] %vm264, %v2086
  %2125 = vst.msk [vmem:[#allocation4 + $0x60] sm:$0xff] %vm264, %v2088
  %2126 = vst.msk [vmem:[#allocation4 + $0x78] sm:$0xff] %vm264, %v2090
  %2127 = vst.msk [vmem:[#allocation4 + $0x90] sm:$0xff] %vm264, %v2092
  %2128 = vst.msk [vmem:[#allocation4 + $0xa8] sm:$0xff] %vm264, %v2094
  %2129 = vst.msk [vmem:[#allocation4 + $0xc0] sm:$0xff] %vm264, %v2096
  %2130 = vst.msk [vmem:[#allocation4 + $0xd8] sm:$0xff] %vm264, %v2098
  %2131 = vst.msk [vmem:[#allocation4 + $0xf0] sm:$0xff] %vm264, %v2100
  %2132 = vst.msk [vmem:[#allocation4 + $0x108] sm:$0xff] %vm264, %v2102
  %2133 = vst.msk [vmem:[#allocation4 + $0x120] sm:$0xff] %vm264, %v2104
  %2134 = vst.msk [vmem:[#allocation4 + $0x138] sm:$0xff] %vm264, %v2106
  %v2135 = vld [vmem:[#allocation3 + $0x9] sm:$0xff]
  %v2136 = vld [vmem:[#allocation3 + $0x11] sm:$0xff]
  %v2137 = vld [vmem:[#allocation3 + $0x19] sm:$0xff]
  %v2138 = vld [vmem:[#allocation3 + $0x21] sm:$0xff]
  %v2139 = vld [vmem:[#allocation3 + $0x29] sm:$0xff]
  %v2140 = vld [vmem:[#allocation3 + $0x31] sm:$0xff]
  %v2141 = vld [vmem:[#allocation3 + $0x39] sm:$0xff]
  %v2142 = vld [vmem:[#allocation3 + $0x41] sm:$0xff]
  %v2143 = vld [vmem:[#allocation3 + $0x49] sm:$0xff]
  %v2144 = vld [vmem:[#allocation3 + $0x51] sm:$0xff]
  %v2145 = vld [vmem:[#allocation3 + $0x59] sm:$0xff]
  %v2146 = vld [vmem:[#allocation3 + $0x61] sm:$0xff]
  %v2147 = vld [vmem:[#allocation3 + $0x69] sm:$0xff]
  %v2148 = vld [vmem:[#allocation3 + $0x71] sm:$0xff]
  %2163 = vrot.lane.b32.xlu0 %v2135, 64
  %v2164 = vpop.permute.xlu0 %2163
  %2165 = vrot.lane.b32.xlu0 %v2136, 64
  %v2166 = vpop.permute.xlu0 %2165
  %2167 = vrot.lane.b32.xlu0 %v2137, 64
  %v2168 = vpop.permute.xlu0 %2167
  %2169 = vrot.lane.b32.xlu0 %v2138, 64
  %v2170 = vpop.permute.xlu0 %2169
  %2171 = vrot.lane.b32.xlu0 %v2139, 64
  %v2172 = vpop.permute.xlu0 %2171
  %2173 = vrot.lane.b32.xlu0 %v2140, 64
  %v2174 = vpop.permute.xlu0 %2173
  %2175 = vrot.lane.b32.xlu0 %v2141, 64
  %v2176 = vpop.permute.xlu0 %2175
  %2177 = vrot.lane.b32.xlu0 %v2142, 64
  %v2178 = vpop.permute.xlu0 %2177
  %2179 = vrot.lane.b32.xlu0 %v2143, 64
  %v2180 = vpop.permute.xlu0 %2179
  %2181 = vrot.lane.b32.xlu0 %v2144, 64
  %v2182 = vpop.permute.xlu0 %2181
  %2183 = vrot.lane.b32.xlu0 %v2145, 64
  %v2184 = vpop.permute.xlu0 %2183
  %2185 = vrot.lane.b32.xlu0 %v2146, 64
  %v2186 = vpop.permute.xlu0 %2185
  %2187 = vrot.lane.b32.xlu0 %v2147, 64
  %v2188 = vpop.permute.xlu0 %2187
  %2189 = vrot.lane.b32.xlu0 %v2148, 64
  %v2190 = vpop.permute.xlu0 %2189
  %2205 = vst.msk [vmem:[#allocation4] sm:$0xff] %vm349, %v2164
  %2206 = vst.msk [vmem:[#allocation4 + $0x18] sm:$0xff] %vm349, %v2166
  %2207 = vst.msk [vmem:[#allocation4 + $0x30] sm:$0xff] %vm349, %v2168
  %2208 = vst.msk [vmem:[#allocation4 + $0x48] sm:$0xff] %vm349, %v2170
  %2209 = vst.msk [vmem:[#allocation4 + $0x60] sm:$0xff] %vm349, %v2172
  %2210 = vst.msk [vmem:[#allocation4 + $0x78] sm:$0xff] %vm349, %v2174
  %2211 = vst.msk [vmem:[#allocation4 + $0x90] sm:$0xff] %vm349, %v2176
  %2212 = vst.msk [vmem:[#allocation4 + $0xa8] sm:$0xff] %vm349, %v2178
  %2213 = vst.msk [vmem:[#allocation4 + $0xc0] sm:$0xff] %vm349, %v2180
  %2214 = vst.msk [vmem:[#allocation4 + $0xd8] sm:$0xff] %vm349, %v2182
  %2215 = vst.msk [vmem:[#allocation4 + $0xf0] sm:$0xff] %vm349, %v2184
  %2216 = vst.msk [vmem:[#allocation4 + $0x108] sm:$0xff] %vm349, %v2186
  %2217 = vst.msk [vmem:[#allocation4 + $0x120] sm:$0xff] %vm349, %v2188
  %2218 = vst.msk [vmem:[#allocation4 + $0x138] sm:$0xff] %vm349, %v2190
  %v2219 = vld [vmem:[#allocation3 + $0xf] sm:$0xff]
  %v2220 = vld [vmem:[#allocation3 + $0x17] sm:$0xff]
  %v2221 = vld [vmem:[#allocation3 + $0x1f] sm:$0xff]
  %v2222 = vld [vmem:[#allocation3 + $0x27] sm:$0xff]
  %v2223 = vld [vmem:[#allocation3 + $0x2f] sm:$0xff]
  %v2224 = vld [vmem:[#allocation3 + $0x37] sm:$0xff]
  %v2225 = vld [vmem:[#allocation3 + $0x3f] sm:$0xff]
  %v2226 = vld [vmem:[#allocation3 + $0x47] sm:$0xff]
  %v2227 = vld [vmem:[#allocation3 + $0x4f] sm:$0xff]
  %v2228 = vld [vmem:[#allocation3 + $0x57] sm:$0xff]
  %v2229 = vld [vmem:[#allocation3 + $0x5f] sm:$0xff]
  %v2230 = vld [vmem:[#allocation3 + $0x67] sm:$0xff]
  %v2231 = vld [vmem:[#allocation3 + $0x6f] sm:$0xff]
  %v2232 = vld [vmem:[#allocation3 + $0x77] sm:$0xff]
  %2247 = vrot.lane.b32.xlu0 %v2219, 96
  %v2248 = vpop.permute.xlu0 %2247
  %2249 = vrot.lane.b32.xlu0 %v2220, 96
  %v2250 = vpop.permute.xlu0 %2249
  %2251 = vrot.lane.b32.xlu0 %v2221, 96
  %v2252 = vpop.permute.xlu0 %2251
  %2253 = vrot.lane.b32.xlu0 %v2222, 96
  %v2254 = vpop.permute.xlu0 %2253
  %2255 = vrot.lane.b32.xlu0 %v2223, 96
  %v2256 = vpop.permute.xlu0 %2255
  %2257 = vrot.lane.b32.xlu0 %v2224, 96
  %v2258 = vpop.permute.xlu0 %2257
  %2259 = vrot.lane.b32.xlu0 %v2225, 96
  %v2260 = vpop.permute.xlu0 %2259
  %2261 = vrot.lane.b32.xlu0 %v2226, 96
  %v2262 = vpop.permute.xlu0 %2261
  %2263 = vrot.lane.b32.xlu0 %v2227, 96
  %v2264 = vpop.permute.xlu0 %2263
  %2265 = vrot.lane.b32.xlu0 %v2228, 96
  %v2266 = vpop.permute.xlu0 %2265
  %2267 = vrot.lane.b32.xlu0 %v2229, 96
  %v2268 = vpop.permute.xlu0 %2267
  %2269 = vrot.lane.b32.xlu0 %v2230, 96
  %v2270 = vpop.permute.xlu0 %2269
  %2271 = vrot.lane.b32.xlu0 %v2231, 96
  %v2272 = vpop.permute.xlu0 %2271
  %2273 = vrot.lane.b32.xlu0 %v2232, 96
  %v2274 = vpop.permute.xlu0 %2273
  %2289 = vst.msk [vmem:[#allocation4] sm:$0xff] %vm434, %v2248
  %2290 = vst.msk [vmem:[#allocation4 + $0x18] sm:$0xff] %vm434, %v2250
  %2291 = vst.msk [vmem:[#allocation4 + $0x30] sm:$0xff] %vm434, %v2252
  %2292 = vst.msk [vmem:[#allocation4 + $0x48] sm:$0xff] %vm434, %v2254
  %2293 = vst.msk [vmem:[#allocation4 + $0x60] sm:$0xff] %vm434, %v2256
  %2294 = vst.msk [vmem:[#allocation4 + $0x78] sm:$0xff] %vm434, %v2258
  %2295 = vst.msk [vmem:[#allocation4 + $0x90] sm:$0xff] %vm434, %v2260
  %2296 = vst.msk [vmem:[#allocation4 + $0xa8] sm:$0xff] %vm434, %v2262
  %2297 = vst.msk [vmem:[#allocation4 + $0xc0] sm:$0xff] %vm434, %v2264
  %2298 = vst.msk [vmem:[#allocation4 + $0xd8] sm:$0xff] %vm434, %v2266
  %2299 = vst.msk [vmem:[#allocation4 + $0xf0] sm:$0xff] %vm434, %v2268
  %2300 = vst.msk [vmem:[#allocation4 + $0x108] sm:$0xff] %vm434, %v2270
  %2301 = vst.msk [vmem:[#allocation4 + $0x120] sm:$0xff] %vm434, %v2272
  %2302 = vst.msk [vmem:[#allocation4 + $0x138] sm:$0xff] %vm434, %v2274
  %v2303 = vld [vmem:[#allocation3 + $0x10] sm:$0xff]
  %v2304 = vld [vmem:[#allocation3 + $0x18] sm:$0xff]
  %v2305 = vld [vmem:[#allocation3 + $0x20] sm:$0xff]
  %v2306 = vld [vmem:[#allocation3 + $0x28] sm:$0xff]
  %v2307 = vld [vmem:[#allocation3 + $0x30] sm:$0xff]
  %v2308 = vld [vmem:[#allocation3 + $0x38] sm:$0xff]
  %v2309 = vld [vmem:[#allocation3 + $0x40] sm:$0xff]
  %v2310 = vld [vmem:[#allocation3 + $0x48] sm:$0xff]
  %v2311 = vld [vmem:[#allocation3 + $0x50] sm:$0xff]
  %v2312 = vld [vmem:[#allocation3 + $0x58] sm:$0xff]
  %v2313 = vld [vmem:[#allocation3 + $0x60] sm:$0xff]
  %v2314 = vld [vmem:[#allocation3 + $0x68] sm:$0xff]
  %v2315 = vld [vmem:[#allocation3 + $0x70] sm:$0xff]
  %v2316 = vld [vmem:[#allocation3 + $0x78] sm:$0xff]
  %2317 = vst.msk [vmem:[#allocation4 + $0x8] sm:$0xff] %vm37, %v2303
  %2318 = vst.msk [vmem:[#allocation4 + $0x20] sm:$0xff] %vm37, %v2304
  %2319 = vst.msk [vmem:[#allocation4 + $0x38] sm:$0xff] %vm37, %v2305
  %2320 = vst.msk [vmem:[#allocation4 + $0x50] sm:$0xff] %vm37, %v2306
  %2321 = vst.msk [vmem:[#allocation4 + $0x68] sm:$0xff] %vm37, %v2307
  %2322 = vst.msk [vmem:[#allocation4 + $0x80] sm:$0xff] %vm37, %v2308
  %2323 = vst.msk [vmem:[#allocation4 + $0x98] sm:$0xff] %vm37, %v2309
  %2324 = vst.msk [vmem:[#allocation4 + $0xb0] sm:$0xff] %vm37, %v2310
  %2325 = vst.msk [vmem:[#allocation4 + $0xc8] sm:$0xff] %vm37, %v2311
  %2326 = vst.msk [vmem:[#allocation4 + $0xe0] sm:$0xff] %vm37, %v2312
  %2327 = vst.msk [vmem:[#allocation4 + $0xf8] sm:$0xff] %vm37, %v2313
  %2328 = vst.msk [vmem:[#allocation4 + $0x110] sm:$0xff] %vm37, %v2314
  %2329 = vst.msk [vmem:[#allocation4 + $0x128] sm:$0xff] %vm37, %v2315
  %2330 = vst.msk [vmem:[#allocation4 + $0x140] sm:$0xff] %vm37, %v2316
  %v2331 = vld [vmem:[#allocation3 + $0x11] sm:$0xff]
  %v2332 = vld [vmem:[#allocation3 + $0x19] sm:$0xff]
  %v2333 = vld [vmem:[#allocation3 + $0x21] sm:$0xff]
  %v2334 = vld [vmem:[#allocation3 + $0x29] sm:$0xff]
  %v2335 = vld [vmem:[#allocation3 + $0x31] sm:$0xff]
  %v2336 = vld [vmem:[#allocation3 + $0x39] sm:$0xff]
  %v2337 = vld [vmem:[#allocation3 + $0x41] sm:$0xff]
  %v2338 = vld [vmem:[#allocation3 + $0x49] sm:$0xff]
  %v2339 = vld [vmem:[#allocation3 + $0x51] sm:$0xff]
  %v2340 = vld [vmem:[#allocation3 + $0x59] sm:$0xff]
  %v2341 = vld [vmem:[#allocation3 + $0x61] sm:$0xff]
  %v2342 = vld [vmem:[#allocation3 + $0x69] sm:$0xff]
  %v2343 = vld [vmem:[#allocation3 + $0x71] sm:$0xff]
  %v2344 = vld [vmem:[#allocation3 + $0x79] sm:$0xff]
  %2359 = vrot.lane.b32.xlu0 %v2331, 32
  %v2360 = vpop.permute.xlu0 %2359
  %2361 = vrot.lane.b32.xlu0 %v2332, 32
  %v2362 = vpop.permute.xlu0 %2361
  %2363 = vrot.lane.b32.xlu0 %v2333, 32
  %v2364 = vpop.permute.xlu0 %2363
  %2365 = vrot.lane.b32.xlu0 %v2334, 32
  %v2366 = vpop.permute.xlu0 %2365
  %2367 = vrot.lane.b32.xlu0 %v2335, 32
  %v2368 = vpop.permute.xlu0 %2367
  %2369 = vrot.lane.b32.xlu0 %v2336, 32
  %v2370 = vpop.permute.xlu0 %2369
  %2371 = vrot.lane.b32.xlu0 %v2337, 32
  %v2372 = vpop.permute.xlu0 %2371
  %2373 = vrot.lane.b32.xlu0 %v2338, 32
  %v2374 = vpop.permute.xlu0 %2373
  %2375 = vrot.lane.b32.xlu0 %v2339, 32
  %v2376 = vpop.permute.xlu0 %2375
  %2377 = vrot.lane.b32.xlu0 %v2340, 32
  %v2378 = vpop.permute.xlu0 %2377
  %2379 = vrot.lane.b32.xlu0 %v2341, 32
  %v2380 = vpop.permute.xlu0 %2379
  %2381 = vrot.lane.b32.xlu0 %v2342, 32
  %v2382 = vpop.permute.xlu0 %2381
  %2383 = vrot.lane.b32.xlu0 %v2343, 32
  %v2384 = vpop.permute.xlu0 %2383
  %2385 = vrot.lane.b32.xlu0 %v2344, 32
  %v2386 = vpop.permute.xlu0 %2385
  %2401 = vst.msk [vmem:[#allocation4 + $0x8] sm:$0xff] %vm264, %v2360
  %2402 = vst.msk [vmem:[#allocation4 + $0x20] sm:$0xff] %vm264, %v2362
  %2403 = vst.msk [vmem:[#allocation4 + $0x38] sm:$0xff] %vm264, %v2364
  %2404 = vst.msk [vmem:[#allocation4 + $0x50] sm:$0xff] %vm264, %v2366
  %2405 = vst.msk [vmem:[#allocation4 + $0x68] sm:$0xff] %vm264, %v2368
  %2406 = vst.msk [vmem:[#allocation4 + $0x80] sm:$0xff] %vm264, %v2370
  %2407 = vst.msk [vmem:[#allocation4 + $0x98] sm:$0xff] %vm264, %v2372
  %2408 = vst.msk [vmem:[#allocation4 + $0xb0] sm:$0xff] %vm264, %v2374
  %2409 = vst.msk [vmem:[#allocation4 + $0xc8] sm:$0xff] %vm264, %v2376
  %2410 = vst.msk [vmem:[#allocation4 + $0xe0] sm:$0xff] %vm264, %v2378
  %2411 = vst.msk [vmem:[#allocation4 + $0xf8] sm:$0xff] %vm264, %v2380
  %2412 = vst.msk [vmem:[#allocation4 + $0x110] sm:$0xff] %vm264, %v2382
  %2413 = vst.msk [vmem:[#allocation4 + $0x128] sm:$0xff] %vm264, %v2384
  %2414 = vst.msk [vmem:[#allocation4 + $0x140] sm:$0xff] %vm264, %v2386
  %v2415 = vld [vmem:[#allocation3 + $0x17] sm:$0xff]
  %v2416 = vld [vmem:[#allocation3 + $0x1f] sm:$0xff]
  %v2417 = vld [vmem:[#allocation3 + $0x27] sm:$0xff]
  %v2418 = vld [vmem:[#allocation3 + $0x2f] sm:$0xff]
  %v2419 = vld [vmem:[#allocation3 + $0x37] sm:$0xff]
  %v2420 = vld [vmem:[#allocation3 + $0x3f] sm:$0xff]
  %v2421 = vld [vmem:[#allocation3 + $0x47] sm:$0xff]
  %v2422 = vld [vmem:[#allocation3 + $0x4f] sm:$0xff]
  %v2423 = vld [vmem:[#allocation3 + $0x57] sm:$0xff]
  %v2424 = vld [vmem:[#allocation3 + $0x5f] sm:$0xff]
  %v2425 = vld [vmem:[#allocation3 + $0x67] sm:$0xff]
  %v2426 = vld [vmem:[#allocation3 + $0x6f] sm:$0xff]
  %v2427 = vld [vmem:[#allocation3 + $0x77] sm:$0xff]
  %v2428 = vld [vmem:[#allocation3 + $0x7f] sm:$0xff]
  %2443 = vrot.lane.b32.xlu0 %v2415, 64
  %v2444 = vpop.permute.xlu0 %2443
  %2445 = vrot.lane.b32.xlu0 %v2416, 64
  %v2446 = vpop.permute.xlu0 %2445
  %2447 = vrot.lane.b32.xlu0 %v2417, 64
  %v2448 = vpop.permute.xlu0 %2447
  %2449 = vrot.lane.b32.xlu0 %v2418, 64
  %v2450 = vpop.permute.xlu0 %2449
  %2451 = vrot.lane.b32.xlu0 %v2419, 64
  %v2452 = vpop.permute.xlu0 %2451
  %2453 = vrot.lane.b32.xlu0 %v2420, 64
  %v2454 = vpop.permute.xlu0 %2453
  %2455 = vrot.lane.b32.xlu0 %v2421, 64
  %v2456 = vpop.permute.xlu0 %2455
  %2457 = vrot.lane.b32.xlu0 %v2422, 64
  %v2458 = vpop.permute.xlu0 %2457
  %2459 = vrot.lane.b32.xlu0 %v2423, 64
  %v2460 = vpop.permute.xlu0 %2459
  %2461 = vrot.lane.b32.xlu0 %v2424, 64
  %v2462 = vpop.permute.xlu0 %2461
  %2463 = vrot.lane.b32.xlu0 %v2425, 64
  %v2464 = vpop.permute.xlu0 %2463
  %2465 = vrot.lane.b32.xlu0 %v2426, 64
  %v2466 = vpop.permute.xlu0 %2465
  %2467 = vrot.lane.b32.xlu0 %v2427, 64
  %v2468 = vpop.permute.xlu0 %2467
  %2469 = vrot.lane.b32.xlu0 %v2428, 64
  %v2470 = vpop.permute.xlu0 %2469
  %2485 = vst.msk [vmem:[#allocation4 + $0x8] sm:$0xff] %vm349, %v2444
  %2486 = vst.msk [vmem:[#allocation4 + $0x20] sm:$0xff] %vm349, %v2446
  %2487 = vst.msk [vmem:[#allocation4 + $0x38] sm:$0xff] %vm349, %v2448
  %2488 = vst.msk [vmem:[#allocation4 + $0x50] sm:$0xff] %vm349, %v2450
  %2489 = vst.msk [vmem:[#allocation4 + $0x68] sm:$0xff] %vm349, %v2452
  %2490 = vst.msk [vmem:[#allocation4 + $0x80] sm:$0xff] %vm349, %v2454
  %2491 = vst.msk [vmem:[#allocation4 + $0x98] sm:$0xff] %vm349, %v2456
  %2492 = vst.msk [vmem:[#allocation4 + $0xb0] sm:$0xff] %vm349, %v2458
  %2493 = vst.msk [vmem:[#allocation4 + $0xc8] sm:$0xff] %vm349, %v2460
  %2494 = vst.msk [vmem:[#allocation4 + $0xe0] sm:$0xff] %vm349, %v2462
  %2495 = vst.msk [vmem:[#allocation4 + $0xf8] sm:$0xff] %vm349, %v2464
  %2496 = vst.msk [vmem:[#allocation4 + $0x110] sm:$0xff] %vm349, %v2466
  %2497 = vst.msk [vmem:[#allocation4 + $0x128] sm:$0xff] %vm349, %v2468
  %2498 = vst.msk [vmem:[#allocation4 + $0x140] sm:$0xff] %vm349, %v2470
  %v2499 = vld [vmem:[#allocation3 + $0x18] sm:$0xff]
  %v2500 = vld [vmem:[#allocation3 + $0x20] sm:$0xff]
  %v2501 = vld [vmem:[#allocation3 + $0x28] sm:$0xff]
  %v2502 = vld [vmem:[#allocation3 + $0x30] sm:$0xff]
  %v2503 = vld [vmem:[#allocation3 + $0x38] sm:$0xff]
  %v2504 = vld [vmem:[#allocation3 + $0x40] sm:$0xff]
  %v2505 = vld [vmem:[#allocation3 + $0x48] sm:$0xff]
  %v2506 = vld [vmem:[#allocation3 + $0x50] sm:$0xff]
  %v2507 = vld [vmem:[#allocation3 + $0x58] sm:$0xff]
  %v2508 = vld [vmem:[#allocation3 + $0x60] sm:$0xff]
  %v2509 = vld [vmem:[#allocation3 + $0x68] sm:$0xff]
  %v2510 = vld [vmem:[#allocation3 + $0x70] sm:$0xff]
  %v2511 = vld [vmem:[#allocation3 + $0x78] sm:$0xff]
  %v2512 = vld [vmem:[#allocation3 + $0x80] sm:$0xff]
  %2527 = vrot.lane.b32.xlu0 %v2499, 96
  %v2528 = vpop.permute.xlu0 %2527
  %2529 = vrot.lane.b32.xlu0 %v2500, 96
  %v2530 = vpop.permute.xlu0 %2529
  %2531 = vrot.lane.b32.xlu0 %v2501, 96
  %v2532 = vpop.permute.xlu0 %2531
  %2533 = vrot.lane.b32.xlu0 %v2502, 96
  %v2534 = vpop.permute.xlu0 %2533
  %2535 = vrot.lane.b32.xlu0 %v2503, 96
  %v2536 = vpop.permute.xlu0 %2535
  %2537 = vrot.lane.b32.xlu0 %v2504, 96
  %v2538 = vpop.permute.xlu0 %2537
  %2539 = vrot.lane.b32.xlu0 %v2505, 96
  %v2540 = vpop.permute.xlu0 %2539
  %2541 = vrot.lane.b32.xlu0 %v2506, 96
  %v2542 = vpop.permute.xlu0 %2541
  %2543 = vrot.lane.b32.xlu0 %v2507, 96
  %v2544 = vpop.permute.xlu0 %2543
  %2545 = vrot.lane.b32.xlu0 %v2508, 96
  %v2546 = vpop.permute.xlu0 %2545
  %2547 = vrot.lane.b32.xlu0 %v2509, 96
  %v2548 = vpop.permute.xlu0 %2547
  %2549 = vrot.lane.b32.xlu0 %v2510, 96
  %v2550 = vpop.permute.xlu0 %2549
  %2551 = vrot.lane.b32.xlu0 %v2511, 96
  %v2552 = vpop.permute.xlu0 %2551
  %2553 = vrot.lane.b32.xlu0 %v2512, 96
  %v2554 = vpop.permute.xlu0 %2553
  %2569 = vst.msk [vmem:[#allocation4 + $0x8] sm:$0xff] %vm434, %v2528
  %2570 = vst.msk [vmem:[#allocation4 + $0x20] sm:$0xff] %vm434, %v2530
  %2571 = vst.msk [vmem:[#allocation4 + $0x38] sm:$0xff] %vm434, %v2532
  %2572 = vst.msk [vmem:[#allocation4 + $0x50] sm:$0xff] %vm434, %v2534
  %2573 = vst.msk [vmem:[#allocation4 + $0x68] sm:$0xff] %vm434, %v2536
  %2574 = vst.msk [vmem:[#allocation4 + $0x80] sm:$0xff] %vm434, %v2538
  %2575 = vst.msk [vmem:[#allocation4 + $0x98] sm:$0xff] %vm434, %v2540
  %2576 = vst.msk [vmem:[#allocation4 + $0xb0] sm:$0xff] %vm434, %v2542
  %2577 = vst.msk [vmem:[#allocation4 + $0xc8] sm:$0xff] %vm434, %v2544
  %2578 = vst.msk [vmem:[#allocation4 + $0xe0] sm:$0xff] %vm434, %v2546
  %2579 = vst.msk [vmem:[#allocation4 + $0xf8] sm:$0xff] %vm434, %v2548
  %2580 = vst.msk [vmem:[#allocation4 + $0x110] sm:$0xff] %vm434, %v2550
  %2581 = vst.msk [vmem:[#allocation4 + $0x128] sm:$0xff] %vm434, %v2552
  %2582 = vst.msk [vmem:[#allocation4 + $0x140] sm:$0xff] %vm434, %v2554
  %v2583 = vld [vmem:[#allocation3 + $0x19] sm:$0xff]
  %v2584 = vld [vmem:[#allocation3 + $0x21] sm:$0xff]
  %v2585 = vld [vmem:[#allocation3 + $0x29] sm:$0xff]
  %v2586 = vld [vmem:[#allocation3 + $0x31] sm:$0xff]
  %v2587 = vld [vmem:[#allocation3 + $0x39] sm:$0xff]
  %v2588 = vld [vmem:[#allocation3 + $0x41] sm:$0xff]
  %v2589 = vld [vmem:[#allocation3 + $0x49] sm:$0xff]
  %v2590 = vld [vmem:[#allocation3 + $0x51] sm:$0xff]
  %v2591 = vld [vmem:[#allocation3 + $0x59] sm:$0xff]
  %v2592 = vld [vmem:[#allocation3 + $0x61] sm:$0xff]
  %v2593 = vld [vmem:[#allocation3 + $0x69] sm:$0xff]
  %v2594 = vld [vmem:[#allocation3 + $0x71] sm:$0xff]
  %v2595 = vld [vmem:[#allocation3 + $0x79] sm:$0xff]
  %v2596 = vld [vmem:[#allocation3 + $0x81] sm:$0xff]
  %2597 = vst.msk [vmem:[#allocation4 + $0x10] sm:$0xff] %vm37, %v2583
  %2598 = vst.msk [vmem:[#allocation4 + $0x28] sm:$0xff] %vm37, %v2584
  %2599 = vst.msk [vmem:[#allocation4 + $0x40] sm:$0xff] %vm37, %v2585
  %2600 = vst.msk [vmem:[#allocation4 + $0x58] sm:$0xff] %vm37, %v2586
  %2601 = vst.msk [vmem:[#allocation4 + $0x70] sm:$0xff] %vm37, %v2587
  %2602 = vst.msk [vmem:[#allocation4 + $0x88] sm:$0xff] %vm37, %v2588
  %2603 = vst.msk [vmem:[#allocation4 + $0xa0] sm:$0xff] %vm37, %v2589
  %2604 = vst.msk [vmem:[#allocation4 + $0xb8] sm:$0xff] %vm37, %v2590
  %2605 = vst.msk [vmem:[#allocation4 + $0xd0] sm:$0xff] %vm37, %v2591
  %2606 = vst.msk [vmem:[#allocation4 + $0xe8] sm:$0xff] %vm37, %v2592
  %2607 = vst.msk [vmem:[#allocation4 + $0x100] sm:$0xff] %vm37, %v2593
  %2608 = vst.msk [vmem:[#allocation4 + $0x118] sm:$0xff] %vm37, %v2594
  %2609 = vst.msk [vmem:[#allocation4 + $0x130] sm:$0xff] %vm37, %v2595
  %2610 = vst.msk [vmem:[#allocation4 + $0x148] sm:$0xff] %vm37, %v2596
  %v2611 = vld [vmem:[#allocation4] sm:$0xff]
  %v2612 = vld [vmem:[#allocation4 + $0x8] sm:$0xff]
  %v2613 = vld [vmem:[#allocation4 + $0x10] sm:$0xff]
  %v2614 = vld [vmem:[#allocation4 + $0x18] sm:$0xff]
  %v2615 = vld [vmem:[#allocation4 + $0x20] sm:$0xff]
  %v2616 = vld [vmem:[#allocation4 + $0x28] sm:$0xff]
  %v2617 = vld [vmem:[#allocation4 + $0x30] sm:$0xff]
  %v2618 = vld [vmem:[#allocation4 + $0x38] sm:$0xff]
  %v2619 = vld [vmem:[#allocation4 + $0x40] sm:$0xff]
  %v2620 = vld [vmem:[#allocation4 + $0x48] sm:$0xff]
  %v2621 = vld [vmem:[#allocation4 + $0x50] sm:$0xff]
  %v2622 = vld [vmem:[#allocation4 + $0x58] sm:$0xff]
  %v2623 = vld [vmem:[#allocation4 + $0x60] sm:$0xff]
  %v2624 = vld [vmem:[#allocation4 + $0x68] sm:$0xff]
  %v2625 = vld [vmem:[#allocation4 + $0x70] sm:$0xff]
  %v2626 = vld [vmem:[#allocation4 + $0x78] sm:$0xff]
  %v2627 = vld [vmem:[#allocation4 + $0x80] sm:$0xff]
  %v2628 = vld [vmem:[#allocation4 + $0x88] sm:$0xff]
  %v2629 = vld [vmem:[#allocation4 + $0x90] sm:$0xff]
  %v2630 = vld [vmem:[#allocation4 + $0x98] sm:$0xff]
  %v2631 = vld [vmem:[#allocation4 + $0xa0] sm:$0xff]
  %v2632 = vld [vmem:[#allocation4 + $0xa8] sm:$0xff]
  %v2633 = vld [vmem:[#allocation4 + $0xb0] sm:$0xff]
  %v2634 = vld [vmem:[#allocation4 + $0xb8] sm:$0xff]
  %v2635 = vld [vmem:[#allocation4 + $0xc0] sm:$0xff]
  %v2636 = vld [vmem:[#allocation4 + $0xc8] sm:$0xff]
  %v2637 = vld [vmem:[#allocation4 + $0xd0] sm:$0xff]
  %v2638 = vld [vmem:[#allocation4 + $0xd8] sm:$0xff]
  %v2639 = vld [vmem:[#allocation4 + $0xe0] sm:$0xff]
  %v2640 = vld [vmem:[#allocation4 + $0xe8] sm:$0xff]
  %v2641 = vld [vmem:[#allocation4 + $0xf0] sm:$0xff]
  %v2642 = vld [vmem:[#allocation4 + $0xf8] sm:$0xff]
  %v2643 = vld [vmem:[#allocation4 + $0x100] sm:$0xff]
  %v2644 = vld [vmem:[#allocation4 + $0x108] sm:$0xff]
  %v2645 = vld [vmem:[#allocation4 + $0x110] sm:$0xff]
  %v2646 = vld [vmem:[#allocation4 + $0x118] sm:$0xff]
  %v2647 = vld [vmem:[#allocation4 + $0x120] sm:$0xff]
  %v2648 = vld [vmem:[#allocation4 + $0x128] sm:$0xff]
  %v2649 = vld [vmem:[#allocation4 + $0x130] sm:$0xff]
  %v2650 = vld [vmem:[#allocation4 + $0x138] sm:$0xff]
  %v2651 = vld [vmem:[#allocation4 + $0x140] sm:$0xff]
  %v2652 = vld [vmem:[#allocation4 + $0x148] sm:$0xff]
  %v2653 = vld [vmem:[#allocation2 + $0x10] sm:$0xff]
  %v2654 = vld [vmem:[#allocation2 + $0x18] sm:$0xff]
  %v2655 = vld [vmem:[#allocation2 + $0x20] sm:$0xff]
  %v2656 = vld [vmem:[#allocation2 + $0x28] sm:$0xff]
  %v2657 = vld [vmem:[#allocation2 + $0x30] sm:$0xff]
  %v2658 = vld [vmem:[#allocation2 + $0x38] sm:$0xff]
  %v2659 = vld [vmem:[#allocation2 + $0x40] sm:$0xff]
  %v2660 = vld [vmem:[#allocation2 + $0x48] sm:$0xff]
  %v2661 = vld [vmem:[#allocation2 + $0x50] sm:$0xff]
  %v2662 = vld [vmem:[#allocation2 + $0x58] sm:$0xff]
  %v2663 = vld [vmem:[#allocation2 + $0x60] sm:$0xff]
  %v2664 = vld [vmem:[#allocation2 + $0x68] sm:$0xff]
  %v2665 = vld [vmem:[#allocation2 + $0x70] sm:$0xff]
  %v2666 = vld [vmem:[#allocation2 + $0x78] sm:$0xff]
  %v2668 = vsel %vm37, %v2613, 0
  %v2671 = vsel %vm37, %v2616, 0
  %v2674 = vsel %vm37, %v2619, 0
  %v2677 = vsel %vm37, %v2622, 0
  %v2680 = vsel %vm37, %v2625, 0
  %v2683 = vsel %vm37, %v2628, 0
  %v2686 = vsel %vm37, %v2631, 0
  %v2689 = vsel %vm37, %v2634, 0
  %v2692 = vsel %vm37, %v2637, 0
  %v2695 = vsel %vm37, %v2640, 0
  %v2698 = vsel %vm37, %v2643, 0
  %v2701 = vsel %vm37, %v2646, 0
  %v2704 = vsel %vm37, %v2649, 0
  %v2707 = vsel %vm37, %v2652, 0
  %2709 = vmatpush.msra.mxu0 %v1111
  %2710 = vmatpush.msra.mxu0 %v1110
  %2711 = vmatpush.msra.mxu0 %v1109
  %2712 = vmatpush.msra.mxu0 %v1108
  %2713 = vmatpush.msra.mxu0 %v1107
  %2714 = vmatpush.msra.mxu0 %v1106
  %2715 = vmatpush.msra.mxu0 %v1105
  %2716 = vmatpush.msra.mxu0 %v1104
  %2717 = vmatpush.msra.mxu0 %v1103
  %2718 = vmatpush.msra.mxu0 %v1102
  %2719 = vmatpush.msra.mxu0 %v1101
  %2720 = vmatpush.msra.mxu0 %v1100
  %2721 = vmatpush.msra.mxu0 %v1099
  %2722 = vmatpush.msra.mxu0 %v1098
  %2723 = vmatpush.msra.mxu0 %v1097
  %2724 = vmatpush.msra.mxu0 %v1096
  %2725 = vmatmul.f32.gmra.mxu0 %v2611
  %v2726 = vpop.f32.mrf.mxu0
  %v2727 = vadd.f32 %v2653, %v2726
  %2728 = vmatmul.f32.gmra.mxu0 %v2614
  %v2729 = vpop.f32.mrf.mxu0
  %v2730 = vadd.f32 %v2654, %v2729
  %2731 = vmatmul.f32.gmra.mxu0 %v2617
  %v2732 = vpop.f32.mrf.mxu0
  %v2733 = vadd.f32 %v2655, %v2732
  %2734 = vmatmul.f32.gmra.mxu0 %v2620
  %v2735 = vpop.f32.mrf.mxu0
  %v2736 = vadd.f32 %v2656, %v2735
  %2737 = vmatmul.f32.gmra.mxu0 %v2623
  %v2738 = vpop.f32.mrf.mxu0
  %v2739 = vadd.f32 %v2657, %v2738
  %2740 = vmatmul.f32.gmra.mxu0 %v2626
  %v2741 = vpop.f32.mrf.mxu0
  %v2742 = vadd.f32 %v2658, %v2741
  %2743 = vmatmul.f32.gmra.mxu0 %v2629
  %v2744 = vpop.f32.mrf.mxu0
  %v2745 = vadd.f32 %v2659, %v2744
  %2746 = vmatmul.f32.gmra.mxu0 %v2632
  %v2747 = vpop.f32.mrf.mxu0
  %v2748 = vadd.f32 %v2660, %v2747
  %2749 = vmatmul.f32.gmra.mxu0 %v2635
  %v2750 = vpop.f32.mrf.mxu0
  %v2751 = vadd.f32 %v2661, %v2750
  %2752 = vmatmul.f32.gmra.mxu0 %v2638
  %v2753 = vpop.f32.mrf.mxu0
  %v2754 = vadd.f32 %v2662, %v2753
  %2755 = vmatmul.f32.gmra.mxu0 %v2641
  %v2756 = vpop.f32.mrf.mxu0
  %v2757 = vadd.f32 %v2663, %v2756
  %2758 = vmatmul.f32.gmra.mxu0 %v2644
  %v2759 = vpop.f32.mrf.mxu0
  %v2760 = vadd.f32 %v2664, %v2759
  %2761 = vmatmul.f32.gmra.mxu0 %v2647
  %v2762 = vpop.f32.mrf.mxu0
  %v2763 = vadd.f32 %v2665, %v2762
  %2764 = vmatmul.f32.gmra.mxu0 %v2650
  %v2765 = vpop.f32.mrf.mxu0
  %v2766 = vadd.f32 %v2666, %v2765
  %2767 = vdwg.mxu0
  %2768 = vmatpush.msra.mxu0 %v1127
  %2769 = vmatpush.msra.mxu0 %v1126
  %2770 = vmatpush.msra.mxu0 %v1125
  %2771 = vmatpush.msra.mxu0 %v1124
  %2772 = vmatpush.msra.mxu0 %v1123
  %2773 = vmatpush.msra.mxu0 %v1122
  %2774 = vmatpush.msra.mxu0 %v1121
  %2775 = vmatpush.msra.mxu0 %v1120
  %2776 = vmatpush.msra.mxu0 %v1119
  %2777 = vmatpush.msra.mxu0 %v1118
  %2778 = vmatpush.msra.mxu0 %v1117
  %2779 = vmatpush.msra.mxu0 %v1116
  %2780 = vmatpush.msra.mxu0 %v1115
  %2781 = vmatpush.msra.mxu0 %v1114
  %2782 = vmatpush.msra.mxu0 %v1113
  %2783 = vmatpush.msra.mxu0 %v1112
  %2784 = vmatmul.f32.gmra.mxu0 %v2612
  %v2785 = vpop.f32.mrf.mxu0
  %v2786 = vadd.f32 %v2727, %v2785
  %2787 = vmatmul.f32.gmra.mxu0 %v2615
  %v2788 = vpop.f32.mrf.mxu0
  %v2789 = vadd.f32 %v2730, %v2788
  %2790 = vmatmul.f32.gmra.mxu0 %v2618
  %v2791 = vpop.f32.mrf.mxu0
  %v2792 = vadd.f32 %v2733, %v2791
  %2793 = vmatmul.f32.gmra.mxu0 %v2621
  %v2794 = vpop.f32.mrf.mxu0
  %v2795 = vadd.f32 %v2736, %v2794
  %2796 = vmatmul.f32.gmra.mxu0 %v2624
  %v2797 = vpop.f32.mrf.mxu0
  %v2798 = vadd.f32 %v2739, %v2797
  %2799 = vmatmul.f32.gmra.mxu0 %v2627
  %v2800 = vpop.f32.mrf.mxu0
  %v2801 = vadd.f32 %v2742, %v2800
  %2802 = vmatmul.f32.gmra.mxu0 %v2630
  %v2803 = vpop.f32.mrf.mxu0
  %v2804 = vadd.f32 %v2745, %v2803
  %2805 = vmatmul.f32.gmra.mxu0 %v2633
  %v2806 = vpop.f32.mrf.mxu0
  %v2807 = vadd.f32 %v2748, %v2806
  %2808 = vmatmul.f32.gmra.mxu0 %v2636
  %v2809 = vpop.f32.mrf.mxu0
  %v2810 = vadd.f32 %v2751, %v2809
  %2811 = vmatmul.f32.gmra.mxu0 %v2639
  %v2812 = vpop.f32.mrf.mxu0
  %v2813 = vadd.f32 %v2754, %v2812
  %2814 = vmatmul.f32.gmra.mxu0 %v2642
  %v2815 = vpop.f32.mrf.mxu0
  %v2816 = vadd.f32 %v2757, %v2815
  %2817 = vmatmul.f32.gmra.mxu0 %v2645
  %v2818 = vpop.f32.mrf.mxu0
  %v2819 = vadd.f32 %v2760, %v2818
  %2820 = vmatmul.f32.gmra.mxu0 %v2648
  %v2821 = vpop.f32.mrf.mxu0
  %v2822 = vadd.f32 %v2763, %v2821
  %2823 = vmatmul.f32.gmra.mxu0 %v2651
  %v2824 = vpop.f32.mrf.mxu0
  %v2825 = vadd.f32 %v2766, %v2824
  %2826 = vdwg.mxu0
  %2827 = vmatpush.msra.mxu0 0.0
  %2828 = vmatpush.msra.mxu0 0.0
  %2829 = vmatpush.msra.mxu0 0.0
  %2830 = vmatpush.msra.mxu0 0.0
  %2831 = vmatpush.msra.mxu0 0.0
  %2832 = vmatpush.msra.mxu0 0.0
  %2833 = vmatpush.msra.mxu0 0.0
  %2834 = vmatpush.msra.mxu0 0.0
  %2835 = vmatpush.msra.mxu0 0.0
  %2836 = vmatpush.msra.mxu0 0.0
  %2837 = vmatpush.msra.mxu0 0.0
  %2838 = vmatpush.msra.mxu0 0.0
  %2839 = vmatpush.msra.mxu0 %v1131
  %2840 = vmatpush.msra.mxu0 %v1130
  %2841 = vmatpush.msra.mxu0 %v1129
  %2842 = vmatpush.msra.mxu0 %v1128
  %2843 = vmatmul.f32.gmra.mxu0 %v2668
  %v2844 = vpop.f32.mrf.mxu0
  %v2845 = vadd.f32 %v2786, %v2844
  %2846 = vmatmul.f32.gmra.mxu0 %v2671
  %v2847 = vpop.f32.mrf.mxu0
  %v2848 = vadd.f32 %v2789, %v2847
  %2849 = vmatmul.f32.gmra.mxu0 %v2674
  %v2850 = vpop.f32.mrf.mxu0
  %v2851 = vadd.f32 %v2792, %v2850
  %2852 = vmatmul.f32.gmra.mxu0 %v2677
  %v2853 = vpop.f32.mrf.mxu0
  %v2854 = vadd.f32 %v2795, %v2853
  %2855 = vmatmul.f32.gmra.mxu0 %v2680
  %v2856 = vpop.f32.mrf.mxu0
  %v2857 = vadd.f32 %v2798, %v2856
  %2858 = vmatmul.f32.gmra.mxu0 %v2683
  %v2859 = vpop.f32.mrf.mxu0
  %v2860 = vadd.f32 %v2801, %v2859
  %2861 = vmatmul.f32.gmra.mxu0 %v2686
  %v2862 = vpop.f32.mrf.mxu0
  %v2863 = vadd.f32 %v2804, %v2862
  %2864 = vmatmul.f32.gmra.mxu0 %v2689
  %v2865 = vpop.f32.mrf.mxu0
  %v2866 = vadd.f32 %v2807, %v2865
  %2867 = vmatmul.f32.gmra.mxu0 %v2692
  %v2868 = vpop.f32.mrf.mxu0
  %v2869 = vadd.f32 %v2810, %v2868
  %2870 = vmatmul.f32.gmra.mxu0 %v2695
  %v2871 = vpop.f32.mrf.mxu0
  %v2872 = vadd.f32 %v2813, %v2871
  %2873 = vmatmul.f32.gmra.mxu0 %v2698
  %v2874 = vpop.f32.mrf.mxu0
  %v2875 = vadd.f32 %v2816, %v2874
  %2876 = vmatmul.f32.gmra.mxu0 %v2701
  %v2877 = vpop.f32.mrf.mxu0
  %v2878 = vadd.f32 %v2819, %v2877
  %2879 = vmatmul.f32.gmra.mxu0 %v2704
  %v2880 = vpop.f32.mrf.mxu0
  %v2881 = vadd.f32 %v2822, %v2880
  %2882 = vmatmul.f32.gmra.mxu0 %v2707
  %v2883 = vpop.f32.mrf.mxu0
  %v2884 = vadd.f32 %v2825, %v2883
  %2885 = vdwg.mxu0
  %v2886 = vmax.f32 %v2845, 0.0
  %v2887 = vmax.f32 %v2848, 0.0
  %v2888 = vmax.f32 %v2851, 0.0
  %v2889 = vmax.f32 %v2854, 0.0
  %v2890 = vmax.f32 %v2857, 0.0
  %v2891 = vmax.f32 %v2860, 0.0
  %v2892 = vmax.f32 %v2863, 0.0
  %v2893 = vmax.f32 %v2866, 0.0
  %v2894 = vmax.f32 %v2869, 0.0
  %v2895 = vmax.f32 %v2872, 0.0
  %v2896 = vmax.f32 %v2875, 0.0
  %v2897 = vmax.f32 %v2878, 0.0
  %v2898 = vmax.f32 %v2881, 0.0
  %v2899 = vmax.f32 %v2884, 0.0
  %v2900 = vmul.f32 %v2886, %v63
  %v2901 = vmul.f32 %v2887, %v68
  %v2902 = vmul.f32 %v2888, %v73
  %v2903 = vmul.f32 %v2889, %v78
  %v2904 = vmul.f32 %v2890, %v83
  %v2905 = vmul.f32 %v2891, %v88
  %v2906 = vmul.f32 %v2892, %v93
  %v2907 = vmul.f32 %v2893, %v98
  %v2908 = vmul.f32 %v2894, %v103
  %v2909 = vmul.f32 %v2895, %v108
  %v2910 = vmul.f32 %v2896, %v113
  %v2911 = vmul.f32 %v2897, %v118
  %v2912 = vmul.f32 %v2898, %v123
  %v2913 = vmul.f32 %v2899, %v128
  %2914 = vst.msk [vmem:[#allocation2 + $0x10] sm:$0xff] %vm37, %v2900
  %2915 = vst.msk [vmem:[#allocation2 + $0x18] sm:$0xff] %vm37, %v2901
  %2916 = vst.msk [vmem:[#allocation2 + $0x20] sm:$0xff] %vm37, %v2902
  %2917 = vst.msk [vmem:[#allocation2 + $0x28] sm:$0xff] %vm37, %v2903
  %2918 = vst.msk [vmem:[#allocation2 + $0x30] sm:$0xff] %vm37, %v2904
  %2919 = vst.msk [vmem:[#allocation2 + $0x38] sm:$0xff] %vm37, %v2905
  %2920 = vst.msk [vmem:[#allocation2 + $0x40] sm:$0xff] %vm37, %v2906
  %2921 = vst.msk [vmem:[#allocation2 + $0x48] sm:$0xff] %vm37, %v2907
  %2922 = vst.msk [vmem:[#allocation2 + $0x50] sm:$0xff] %vm37, %v2908
  %2923 = vst.msk [vmem:[#allocation2 + $0x58] sm:$0xff] %vm37, %v2909
  %2924 = vst.msk [vmem:[#allocation2 + $0x60] sm:$0xff] %vm37, %v2910
  %2925 = vst.msk [vmem:[#allocation2 + $0x68] sm:$0xff] %vm37, %v2911
  %2926 = vst.msk [vmem:[#allocation2 + $0x70] sm:$0xff] %vm37, %v2912
  %2927 = vst.msk [vmem:[#allocation2 + $0x78] sm:$0xff] %vm37, %v2913
  %v2928 = vld [vmem:[%s3 + $0x240] sm:$0xff]
  %v2929 = vld [vmem:[%s3 + $0x248] sm:$0xff]
  %v2930 = vld [vmem:[%s3 + $0x250] sm:$0xff]
  %v2931 = vld [vmem:[%s3 + $0x258] sm:$0xff]
  %v2932 = vld [vmem:[%s3 + $0x260] sm:$0xff]
  %v2933 = vld [vmem:[%s3 + $0x268] sm:$0xff]
  %v2934 = vld [vmem:[%s3 + $0x270] sm:$0xff]
  %v2935 = vld [vmem:[%s3 + $0x278] sm:$0xff]
  %v2936 = vld [vmem:[%s3 + $0x280] sm:$0xff]
  %v2937 = vld [vmem:[%s3 + $0x288] sm:$0xff]
  %v2938 = vld [vmem:[%s3 + $0x290] sm:$0xff]
  %v2939 = vld [vmem:[%s3 + $0x298] sm:$0xff]
  %v2940 = vld [vmem:[%s3 + $0x2a0] sm:$0xff]
  %v2941 = vld [vmem:[%s3 + $0x2a8] sm:$0xff]
  %v2942 = vld [vmem:[%s3 + $0x2b0] sm:$0xff]
  %v2943 = vld [vmem:[%s3 + $0x2b8] sm:$0xff]
  %v2944 = vld [vmem:[%s3 + $0x2c0] sm:$0xff]
  %v2945 = vld [vmem:[%s3 + $0x2c8] sm:$0xff]
  %v2946 = vld [vmem:[%s3 + $0x2d0] sm:$0xff]
  %v2947 = vld [vmem:[%s3 + $0x2d8] sm:$0xff]
  %v2948 = vld [vmem:[%s3 + $0x2e0] sm:$0xff]
  %v2949 = vld [vmem:[%s3 + $0x2e8] sm:$0xff]
  %v2950 = vld [vmem:[%s3 + $0x2f0] sm:$0xff]
  %v2951 = vld [vmem:[%s3 + $0x2f8] sm:$0xff]
  %v2952 = vld [vmem:[%s3 + $0x300] sm:$0xff]
  %v2953 = vld [vmem:[%s3 + $0x308] sm:$0xff]
  %v2954 = vld [vmem:[%s3 + $0x310] sm:$0xff]
  %v2955 = vld [vmem:[%s3 + $0x318] sm:$0xff]
  %v2956 = vld [vmem:[%s3 + $0x320] sm:$0xff]
  %v2957 = vld [vmem:[%s3 + $0x328] sm:$0xff]
  %v2958 = vld [vmem:[%s3 + $0x330] sm:$0xff]
  %v2959 = vld [vmem:[%s3 + $0x338] sm:$0xff]
  %v2960 = vld [vmem:[%s3 + $0x340] sm:$0xff]
  %v2961 = vld [vmem:[%s3 + $0x348] sm:$0xff]
  %v2962 = vld [vmem:[%s3 + $0x350] sm:$0xff]
  %v2963 = vld [vmem:[%s3 + $0x358] sm:$0xff]
  %v2964 = vld [vmem:[%s3 + $0x360] sm:$0xff]
  %v2965 = vld [vmem:[%s3 + $0x368] sm:$0xff]
  %v2966 = vld [vmem:[%s3 + $0x370] sm:$0xff]
  %v2967 = vld [vmem:[%s3 + $0x378] sm:$0xff]
  %v2968 = vld [vmem:[%s3 + $0x380] sm:$0xff]
  %v2969 = vld [vmem:[%s3 + $0x388] sm:$0xff]
  %v2970 = vld [vmem:[%s3 + $0x390] sm:$0xff]
  %v2971 = vld [vmem:[%s3 + $0x398] sm:$0xff]
  %v2972 = vld [vmem:[%s3 + $0x3a0] sm:$0xff]
  %v2973 = vld [vmem:[%s3 + $0x3a8] sm:$0xff]
  %v2974 = vld [vmem:[%s3 + $0x3b0] sm:$0xff]
  %v2975 = vld [vmem:[%s3 + $0x3b8] sm:$0xff]
  %v2976 = vld [vmem:[%s3 + $0x3c0] sm:$0xff]
  %v2977 = vld [vmem:[%s3 + $0x3c8] sm:$0xff]
  %v2978 = vld [vmem:[%s3 + $0x3d0] sm:$0xff]
  %v2979 = vld [vmem:[%s3 + $0x3d8] sm:$0xff]
  %v2980 = vld [vmem:[%s3 + $0x3e0] sm:$0xff]
  %v2981 = vld [vmem:[%s3 + $0x3e8] sm:$0xff]
  %v2982 = vld [vmem:[%s3 + $0x3f0] sm:$0xff]
  %v2983 = vld [vmem:[%s3 + $0x3f8] sm:$0xff]
  %v2984 = vld [vmem:[%s3 + $0x400] sm:$0xff]
  %v2985 = vld [vmem:[%s3 + $0x408] sm:$0xff]
  %v2986 = vld [vmem:[%s3 + $0x410] sm:$0xff]
  %v2987 = vld [vmem:[%s3 + $0x418] sm:$0xff]
  %v2988 = vld [vmem:[%s3 + $0x420] sm:$0xff]
  %v2989 = vld [vmem:[%s3 + $0x428] sm:$0xff]
  %v2990 = vld [vmem:[%s3 + $0x430] sm:$0xff]
  %v2991 = vld [vmem:[%s3 + $0x438] sm:$0xff]
  %v2992 = vld [vmem:[%s3 + $0x440] sm:$0xff]
  %v2993 = vld [vmem:[%s3 + $0x448] sm:$0xff]
  %v2994 = vld [vmem:[%s3 + $0x450] sm:$0xff]
  %v2995 = vld [vmem:[%s3 + $0x458] sm:$0xff]
  %v2996 = vld [vmem:[%s3 + $0x460] sm:$0xff]
  %v2997 = vld [vmem:[%s3 + $0x468] sm:$0xff]
  %v2998 = vld [vmem:[%s3 + $0x470] sm:$0xff]
  %v2999 = vld [vmem:[%s3 + $0x478] sm:$0xff]
  %v3000 = vld [vmem:[#allocation2 + $0x7] sm:$0xff]
  %v3001 = vld [vmem:[#allocation2 + $0xf] sm:$0xff]
  %v3002 = vld [vmem:[#allocation2 + $0x17] sm:$0xff]
  %v3003 = vld [vmem:[#allocation2 + $0x1f] sm:$0xff]
  %v3004 = vld [vmem:[#allocation2 + $0x27] sm:$0xff]
  %v3005 = vld [vmem:[#allocation2 + $0x2f] sm:$0xff]
  %v3006 = vld [vmem:[#allocation2 + $0x37] sm:$0xff]
  %v3007 = vld [vmem:[#allocation2 + $0x3f] sm:$0xff]
  %v3008 = vld [vmem:[#allocation2 + $0x47] sm:$0xff]
  %v3009 = vld [vmem:[#allocation2 + $0x4f] sm:$0xff]
  %v3010 = vld [vmem:[#allocation2 + $0x57] sm:$0xff]
  %v3011 = vld [vmem:[#allocation2 + $0x5f] sm:$0xff]
  %v3012 = vld [vmem:[#allocation2 + $0x67] sm:$0xff]
  %v3013 = vld [vmem:[#allocation2 + $0x6f] sm:$0xff]
  %3014 = vst.msk [vmem:[#allocation4] sm:$0xff] %vm37, %v3000
  %3015 = vst.msk [vmem:[#allocation4 + $0x18] sm:$0xff] %vm37, %v3001
  %3016 = vst.msk [vmem:[#allocation4 + $0x30] sm:$0xff] %vm37, %v3002
  %3017 = vst.msk [vmem:[#allocation4 + $0x48] sm:$0xff] %vm37, %v3003
  %3018 = vst.msk [vmem:[#allocation4 + $0x60] sm:$0xff] %vm37, %v3004
  %3019 = vst.msk [vmem:[#allocation4 + $0x78] sm:$0xff] %vm37, %v3005
  %3020 = vst.msk [vmem:[#allocation4 + $0x90] sm:$0xff] %vm37, %v3006
  %3021 = vst.msk [vmem:[#allocation4 + $0xa8] sm:$0xff] %vm37, %v3007
  %3022 = vst.msk [vmem:[#allocation4 + $0xc0] sm:$0xff] %vm37, %v3008
  %3023 = vst.msk [vmem:[#allocation4 + $0xd8] sm:$0xff] %vm37, %v3009
  %3024 = vst.msk [vmem:[#allocation4 + $0xf0] sm:$0xff] %vm37, %v3010
  %3025 = vst.msk [vmem:[#allocation4 + $0x108] sm:$0xff] %vm37, %v3011
  %3026 = vst.msk [vmem:[#allocation4 + $0x120] sm:$0xff] %vm37, %v3012
  %3027 = vst.msk [vmem:[#allocation4 + $0x138] sm:$0xff] %vm37, %v3013
  %v3028 = vld [vmem:[#allocation2 + $0x8] sm:$0xff]
  %v3029 = vld [vmem:[#allocation2 + $0x10] sm:$0xff]
  %v3030 = vld [vmem:[#allocation2 + $0x18] sm:$0xff]
  %v3031 = vld [vmem:[#allocation2 + $0x20] sm:$0xff]
  %v3032 = vld [vmem:[#allocation2 + $0x28] sm:$0xff]
  %v3033 = vld [vmem:[#allocation2 + $0x30] sm:$0xff]
  %v3034 = vld [vmem:[#allocation2 + $0x38] sm:$0xff]
  %v3035 = vld [vmem:[#allocation2 + $0x40] sm:$0xff]
  %v3036 = vld [vmem:[#allocation2 + $0x48] sm:$0xff]
  %v3037 = vld [vmem:[#allocation2 + $0x50] sm:$0xff]
  %v3038 = vld [vmem:[#allocation2 + $0x58] sm:$0xff]
  %v3039 = vld [vmem:[#allocation2 + $0x60] sm:$0xff]
  %v3040 = vld [vmem:[#allocation2 + $0x68] sm:$0xff]
  %v3041 = vld [vmem:[#allocation2 + $0x70] sm:$0xff]
  %3056 = vrot.lane.b32.xlu0 %v3028, 32
  %v3057 = vpop.permute.xlu0 %3056
  %3058 = vrot.lane.b32.xlu0 %v3029, 32
  %v3059 = vpop.permute.xlu0 %3058
  %3060 = vrot.lane.b32.xlu0 %v3030, 32
  %v3061 = vpop.permute.xlu0 %3060
  %3062 = vrot.lane.b32.xlu0 %v3031, 32
  %v3063 = vpop.permute.xlu0 %3062
  %3064 = vrot.lane.b32.xlu0 %v3032, 32
  %v3065 = vpop.permute.xlu0 %3064
  %3066 = vrot.lane.b32.xlu0 %v3033, 32
  %v3067 = vpop.permute.xlu0 %3066
  %3068 = vrot.lane.b32.xlu0 %v3034, 32
  %v3069 = vpop.permute.xlu0 %3068
  %3070 = vrot.lane.b32.xlu0 %v3035, 32
  %v3071 = vpop.permute.xlu0 %3070
  %3072 = vrot.lane.b32.xlu0 %v3036, 32
  %v3073 = vpop.permute.xlu0 %3072
  %3074 = vrot.lane.b32.xlu0 %v3037, 32
  %v3075 = vpop.permute.xlu0 %3074
  %3076 = vrot.lane.b32.xlu0 %v3038, 32
  %v3077 = vpop.permute.xlu0 %3076
  %3078 = vrot.lane.b32.xlu0 %v3039, 32
  %v3079 = vpop.permute.xlu0 %3078
  %3080 = vrot.lane.b32.xlu0 %v3040, 32
  %v3081 = vpop.permute.xlu0 %3080
  %3082 = vrot.lane.b32.xlu0 %v3041, 32
  %v3083 = vpop.permute.xlu0 %3082
  %3098 = vst.msk [vmem:[#allocation4] sm:$0xff] %vm264, %v3057
  %3099 = vst.msk [vmem:[#allocation4 + $0x18] sm:$0xff] %vm264, %v3059
  %3100 = vst.msk [vmem:[#allocation4 + $0x30] sm:$0xff] %vm264, %v3061
  %3101 = vst.msk [vmem:[#allocation4 + $0x48] sm:$0xff] %vm264, %v3063
  %3102 = vst.msk [vmem:[#allocation4 + $0x60] sm:$0xff] %vm264, %v3065
  %3103 = vst.msk [vmem:[#allocation4 + $0x78] sm:$0xff] %vm264, %v3067
  %3104 = vst.msk [vmem:[#allocation4 + $0x90] sm:$0xff] %vm264, %v3069
  %3105 = vst.msk [vmem:[#allocation4 + $0xa8] sm:$0xff] %vm264, %v3071
  %3106 = vst.msk [vmem:[#allocation4 + $0xc0] sm:$0xff] %vm264, %v3073
  %3107 = vst.msk [vmem:[#allocation4 + $0xd8] sm:$0xff] %vm264, %v3075
  %3108 = vst.msk [vmem:[#allocation4 + $0xf0] sm:$0xff] %vm264, %v3077
  %3109 = vst.msk [vmem:[#allocation4 + $0x108] sm:$0xff] %vm264, %v3079
  %3110 = vst.msk [vmem:[#allocation4 + $0x120] sm:$0xff] %vm264, %v3081
  %3111 = vst.msk [vmem:[#allocation4 + $0x138] sm:$0xff] %vm264, %v3083
  %v3112 = vld [vmem:[#allocation2 + $0x9] sm:$0xff]
  %v3113 = vld [vmem:[#allocation2 + $0x11] sm:$0xff]
  %v3114 = vld [vmem:[#allocation2 + $0x19] sm:$0xff]
  %v3115 = vld [vmem:[#allocation2 + $0x21] sm:$0xff]
  %v3116 = vld [vmem:[#allocation2 + $0x29] sm:$0xff]
  %v3117 = vld [vmem:[#allocation2 + $0x31] sm:$0xff]
  %v3118 = vld [vmem:[#allocation2 + $0x39] sm:$0xff]
  %v3119 = vld [vmem:[#allocation2 + $0x41] sm:$0xff]
  %v3120 = vld [vmem:[#allocation2 + $0x49] sm:$0xff]
  %v3121 = vld [vmem:[#allocation2 + $0x51] sm:$0xff]
  %v3122 = vld [vmem:[#allocation2 + $0x59] sm:$0xff]
  %v3123 = vld [vmem:[#allocation2 + $0x61] sm:$0xff]
  %v3124 = vld [vmem:[#allocation2 + $0x69] sm:$0xff]
  %v3125 = vld [vmem:[#allocation2 + $0x71] sm:$0xff]
  %3140 = vrot.lane.b32.xlu0 %v3112, 64
  %v3141 = vpop.permute.xlu0 %3140
  %3142 = vrot.lane.b32.xlu0 %v3113, 64
  %v3143 = vpop.permute.xlu0 %3142
  %3144 = vrot.lane.b32.xlu0 %v3114, 64
  %v3145 = vpop.permute.xlu0 %3144
  %3146 = vrot.lane.b32.xlu0 %v3115, 64
  %v3147 = vpop.permute.xlu0 %3146
  %3148 = vrot.lane.b32.xlu0 %v3116, 64
  %v3149 = vpop.permute.xlu0 %3148
  %3150 = vrot.lane.b32.xlu0 %v3117, 64
  %v3151 = vpop.permute.xlu0 %3150
  %3152 = vrot.lane.b32.xlu0 %v3118, 64
  %v3153 = vpop.permute.xlu0 %3152
  %3154 = vrot.lane.b32.xlu0 %v3119, 64
  %v3155 = vpop.permute.xlu0 %3154
  %3156 = vrot.lane.b32.xlu0 %v3120, 64
  %v3157 = vpop.permute.xlu0 %3156
  %3158 = vrot.lane.b32.xlu0 %v3121, 64
  %v3159 = vpop.permute.xlu0 %3158
  %3160 = vrot.lane.b32.xlu0 %v3122, 64
  %v3161 = vpop.permute.xlu0 %3160
  %3162 = vrot.lane.b32.xlu0 %v3123, 64
  %v3163 = vpop.permute.xlu0 %3162
  %3164 = vrot.lane.b32.xlu0 %v3124, 64
  %v3165 = vpop.permute.xlu0 %3164
  %3166 = vrot.lane.b32.xlu0 %v3125, 64
  %v3167 = vpop.permute.xlu0 %3166
  %3182 = vst.msk [vmem:[#allocation4] sm:$0xff] %vm349, %v3141
  %3183 = vst.msk [vmem:[#allocation4 + $0x18] sm:$0xff] %vm349, %v3143
  %3184 = vst.msk [vmem:[#allocation4 + $0x30] sm:$0xff] %vm349, %v3145
  %3185 = vst.msk [vmem:[#allocation4 + $0x48] sm:$0xff] %vm349, %v3147
  %3186 = vst.msk [vmem:[#allocation4 + $0x60] sm:$0xff] %vm349, %v3149
  %3187 = vst.msk [vmem:[#allocation4 + $0x78] sm:$0xff] %vm349, %v3151
  %3188 = vst.msk [vmem:[#allocation4 + $0x90] sm:$0xff] %vm349, %v3153
  %3189 = vst.msk [vmem:[#allocation4 + $0xa8] sm:$0xff] %vm349, %v3155
  %3190 = vst.msk [vmem:[#allocation4 + $0xc0] sm:$0xff] %vm349, %v3157
  %3191 = vst.msk [vmem:[#allocation4 + $0xd8] sm:$0xff] %vm349, %v3159
  %3192 = vst.msk [vmem:[#allocation4 + $0xf0] sm:$0xff] %vm349, %v3161
  %3193 = vst.msk [vmem:[#allocation4 + $0x108] sm:$0xff] %vm349, %v3163
  %3194 = vst.msk [vmem:[#allocation4 + $0x120] sm:$0xff] %vm349, %v3165
  %3195 = vst.msk [vmem:[#allocation4 + $0x138] sm:$0xff] %vm349, %v3167
  %v3196 = vld [vmem:[#allocation2 + $0xf] sm:$0xff]
  %v3197 = vld [vmem:[#allocation2 + $0x17] sm:$0xff]
  %v3198 = vld [vmem:[#allocation2 + $0x1f] sm:$0xff]
  %v3199 = vld [vmem:[#allocation2 + $0x27] sm:$0xff]
  %v3200 = vld [vmem:[#allocation2 + $0x2f] sm:$0xff]
  %v3201 = vld [vmem:[#allocation2 + $0x37] sm:$0xff]
  %v3202 = vld [vmem:[#allocation2 + $0x3f] sm:$0xff]
  %v3203 = vld [vmem:[#allocation2 + $0x47] sm:$0xff]
  %v3204 = vld [vmem:[#allocation2 + $0x4f] sm:$0xff]
  %v3205 = vld [vmem:[#allocation2 + $0x57] sm:$0xff]
  %v3206 = vld [vmem:[#allocation2 + $0x5f] sm:$0xff]
  %v3207 = vld [vmem:[#allocation2 + $0x67] sm:$0xff]
  %v3208 = vld [vmem:[#allocation2 + $0x6f] sm:$0xff]
  %v3209 = vld [vmem:[#allocation2 + $0x77] sm:$0xff]
  %3224 = vrot.lane.b32.xlu0 %v3196, 96
  %v3225 = vpop.permute.xlu0 %3224
  %3226 = vrot.lane.b32.xlu0 %v3197, 96
  %v3227 = vpop.permute.xlu0 %3226
  %3228 = vrot.lane.b32.xlu0 %v3198, 96
  %v3229 = vpop.permute.xlu0 %3228
  %3230 = vrot.lane.b32.xlu0 %v3199, 96
  %v3231 = vpop.permute.xlu0 %3230
  %3232 = vrot.lane.b32.xlu0 %v3200, 96
  %v3233 = vpop.permute.xlu0 %3232
  %3234 = vrot.lane.b32.xlu0 %v3201, 96
  %v3235 = vpop.permute.xlu0 %3234
  %3236 = vrot.lane.b32.xlu0 %v3202, 96
  %v3237 = vpop.permute.xlu0 %3236
  %3238 = vrot.lane.b32.xlu0 %v3203, 96
  %v3239 = vpop.permute.xlu0 %3238
  %3240 = vrot.lane.b32.xlu0 %v3204, 96
  %v3241 = vpop.permute.xlu0 %3240
  %3242 = vrot.lane.b32.xlu0 %v3205, 96
  %v3243 = vpop.permute.xlu0 %3242
  %3244 = vrot.lane.b32.xlu0 %v3206, 96
  %v3245 = vpop.permute.xlu0 %3244
  %3246 = vrot.lane.b32.xlu0 %v3207, 96
  %v3247 = vpop.permute.xlu0 %3246
  %3248 = vrot.lane.b32.xlu0 %v3208, 96
  %v3249 = vpop.permute.xlu0 %3248
  %3250 = vrot.lane.b32.xlu0 %v3209, 96
  %v3251 = vpop.permute.xlu0 %3250
  %3266 = vst.msk [vmem:[#allocation4] sm:$0xff] %vm434, %v3225
  %3267 = vst.msk [vmem:[#allocation4 + $0x18] sm:$0xff] %vm434, %v3227
  %3268 = vst.msk [vmem:[#allocation4 + $0x30] sm:$0xff] %vm434, %v3229
  %3269 = vst.msk [vmem:[#allocation4 + $0x48] sm:$0xff] %vm434, %v3231
  %3270 = vst.msk [vmem:[#allocation4 + $0x60] sm:$0xff] %vm434, %v3233
  %3271 = vst.msk [vmem:[#allocation4 + $0x78] sm:$0xff] %vm434, %v3235
  %3272 = vst.msk [vmem:[#allocation4 + $0x90] sm:$0xff] %vm434, %v3237
  %3273 = vst.msk [vmem:[#allocation4 + $0xa8] sm:$0xff] %vm434, %v3239
  %3274 = vst.msk [vmem:[#allocation4 + $0xc0] sm:$0xff] %vm434, %v3241
  %3275 = vst.msk [vmem:[#allocation4 + $0xd8] sm:$0xff] %vm434, %v3243
  %3276 = vst.msk [vmem:[#allocation4 + $0xf0] sm:$0xff] %vm434, %v3245
  %3277 = vst.msk [vmem:[#allocation4 + $0x108] sm:$0xff] %vm434, %v3247
  %3278 = vst.msk [vmem:[#allocation4 + $0x120] sm:$0xff] %vm434, %v3249
  %3279 = vst.msk [vmem:[#allocation4 + $0x138] sm:$0xff] %vm434, %v3251
  %v3280 = vld [vmem:[#allocation2 + $0x10] sm:$0xff]
  %v3281 = vld [vmem:[#allocation2 + $0x18] sm:$0xff]
  %v3282 = vld [vmem:[#allocation2 + $0x20] sm:$0xff]
  %v3283 = vld [vmem:[#allocation2 + $0x28] sm:$0xff]
  %v3284 = vld [vmem:[#allocation2 + $0x30] sm:$0xff]
  %v3285 = vld [vmem:[#allocation2 + $0x38] sm:$0xff]
  %v3286 = vld [vmem:[#allocation2 + $0x40] sm:$0xff]
  %v3287 = vld [vmem:[#allocation2 + $0x48] sm:$0xff]
  %v3288 = vld [vmem:[#allocation2 + $0x50] sm:$0xff]
  %v3289 = vld [vmem:[#allocation2 + $0x58] sm:$0xff]
  %v3290 = vld [vmem:[#allocation2 + $0x60] sm:$0xff]
  %v3291 = vld [vmem:[#allocation2 + $0x68] sm:$0xff]
  %v3292 = vld [vmem:[#allocation2 + $0x70] sm:$0xff]
  %v3293 = vld [vmem:[#allocation2 + $0x78] sm:$0xff]
  %3294 = vst.msk [vmem:[#allocation4 + $0x8] sm:$0xff] %vm37, %v3280
  %3295 = vst.msk [vmem:[#allocation4 + $0x20] sm:$0xff] %vm37, %v3281
  %3296 = vst.msk [vmem:[#allocation4 + $0x38] sm:$0xff] %vm37, %v3282
  %3297 = vst.msk [vmem:[#allocation4 + $0x50] sm:$0xff] %vm37, %v3283
  %3298 = vst.msk [vmem:[#allocation4 + $0x68] sm:$0xff] %vm37, %v3284
  %3299 = vst.msk [vmem:[#allocation4 + $0x80] sm:$0xff] %vm37, %v3285
  %3300 = vst.msk [vmem:[#allocation4 + $0x98] sm:$0xff] %vm37, %v3286
  %3301 = vst.msk [vmem:[#allocation4 + $0xb0] sm:$0xff] %vm37, %v3287
  %3302 = vst.msk [vmem:[#allocation4 + $0xc8] sm:$0xff] %vm37, %v3288
  %3303 = vst.msk [vmem:[#allocation4 + $0xe0] sm:$0xff] %vm37, %v3289
  %3304 = vst.msk [vmem:[#allocation4 + $0xf8] sm:$0xff] %vm37, %v3290
  %3305 = vst.msk [vmem:[#allocation4 + $0x110] sm:$0xff] %vm37, %v3291
  %3306 = vst.msk [vmem:[#allocation4 + $0x128] sm:$0xff] %vm37, %v3292
  %3307 = vst.msk [vmem:[#allocation4 + $0x140] sm:$0xff] %vm37, %v3293
  %v3308 = vld [vmem:[#allocation2 + $0x11] sm:$0xff]
  %v3309 = vld [vmem:[#allocation2 + $0x19] sm:$0xff]
  %v3310 = vld [vmem:[#allocation2 + $0x21] sm:$0xff]
  %v3311 = vld [vmem:[#allocation2 + $0x29] sm:$0xff]
  %v3312 = vld [vmem:[#allocation2 + $0x31] sm:$0xff]
  %v3313 = vld [vmem:[#allocation2 + $0x39] sm:$0xff]
  %v3314 = vld [vmem:[#allocation2 + $0x41] sm:$0xff]
  %v3315 = vld [vmem:[#allocation2 + $0x49] sm:$0xff]
  %v3316 = vld [vmem:[#allocation2 + $0x51] sm:$0xff]
  %v3317 = vld [vmem:[#allocation2 + $0x59] sm:$0xff]
  %v3318 = vld [vmem:[#allocation2 + $0x61] sm:$0xff]
  %v3319 = vld [vmem:[#allocation2 + $0x69] sm:$0xff]
  %v3320 = vld [vmem:[#allocation2 + $0x71] sm:$0xff]
  %v3321 = vld [vmem:[#allocation2 + $0x79] sm:$0xff]
  %3336 = vrot.lane.b32.xlu0 %v3308, 32
  %v3337 = vpop.permute.xlu0 %3336
  %3338 = vrot.lane.b32.xlu0 %v3309, 32
  %v3339 = vpop.permute.xlu0 %3338
  %3340 = vrot.lane.b32.xlu0 %v3310, 32
  %v3341 = vpop.permute.xlu0 %3340
  %3342 = vrot.lane.b32.xlu0 %v3311, 32
  %v3343 = vpop.permute.xlu0 %3342
  %3344 = vrot.lane.b32.xlu0 %v3312, 32
  %v3345 = vpop.permute.xlu0 %3344
  %3346 = vrot.lane.b32.xlu0 %v3313, 32
  %v3347 = vpop.permute.xlu0 %3346
  %3348 = vrot.lane.b32.xlu0 %v3314, 32
  %v3349 = vpop.permute.xlu0 %3348
  %3350 = vrot.lane.b32.xlu0 %v3315, 32
  %v3351 = vpop.permute.xlu0 %3350
  %3352 = vrot.lane.b32.xlu0 %v3316, 32
  %v3353 = vpop.permute.xlu0 %3352
  %3354 = vrot.lane.b32.xlu0 %v3317, 32
  %v3355 = vpop.permute.xlu0 %3354
  %3356 = vrot.lane.b32.xlu0 %v3318, 32
  %v3357 = vpop.permute.xlu0 %3356
  %3358 = vrot.lane.b32.xlu0 %v3319, 32
  %v3359 = vpop.permute.xlu0 %3358
  %3360 = vrot.lane.b32.xlu0 %v3320, 32
  %v3361 = vpop.permute.xlu0 %3360
  %3362 = vrot.lane.b32.xlu0 %v3321, 32
  %v3363 = vpop.permute.xlu0 %3362
  %3378 = vst.msk [vmem:[#allocation4 + $0x8] sm:$0xff] %vm264, %v3337
  %3379 = vst.msk [vmem:[#allocation4 + $0x20] sm:$0xff] %vm264, %v3339
  %3380 = vst.msk [vmem:[#allocation4 + $0x38] sm:$0xff] %vm264, %v3341
  %3381 = vst.msk [vmem:[#allocation4 + $0x50] sm:$0xff] %vm264, %v3343
  %3382 = vst.msk [vmem:[#allocation4 + $0x68] sm:$0xff] %vm264, %v3345
  %3383 = vst.msk [vmem:[#allocation4 + $0x80] sm:$0xff] %vm264, %v3347
  %3384 = vst.msk [vmem:[#allocation4 + $0x98] sm:$0xff] %vm264, %v3349
  %3385 = vst.msk [vmem:[#allocation4 + $0xb0] sm:$0xff] %vm264, %v3351
  %3386 = vst.msk [vmem:[#allocation4 + $0xc8] sm:$0xff] %vm264, %v3353
  %3387 = vst.msk [vmem:[#allocation4 + $0xe0] sm:$0xff] %vm264, %v3355
  %3388 = vst.msk [vmem:[#allocation4 + $0xf8] sm:$0xff] %vm264, %v3357
  %3389 = vst.msk [vmem:[#allocation4 + $0x110] sm:$0xff] %vm264, %v3359
  %3390 = vst.msk [vmem:[#allocation4 + $0x128] sm:$0xff] %vm264, %v3361
  %3391 = vst.msk [vmem:[#allocation4 + $0x140] sm:$0xff] %vm264, %v3363
  %v3392 = vld [vmem:[#allocation2 + $0x17] sm:$0xff]
  %v3393 = vld [vmem:[#allocation2 + $0x1f] sm:$0xff]
  %v3394 = vld [vmem:[#allocation2 + $0x27] sm:$0xff]
  %v3395 = vld [vmem:[#allocation2 + $0x2f] sm:$0xff]
  %v3396 = vld [vmem:[#allocation2 + $0x37] sm:$0xff]
  %v3397 = vld [vmem:[#allocation2 + $0x3f] sm:$0xff]
  %v3398 = vld [vmem:[#allocation2 + $0x47] sm:$0xff]
  %v3399 = vld [vmem:[#allocation2 + $0x4f] sm:$0xff]
  %v3400 = vld [vmem:[#allocation2 + $0x57] sm:$0xff]
  %v3401 = vld [vmem:[#allocation2 + $0x5f] sm:$0xff]
  %v3402 = vld [vmem:[#allocation2 + $0x67] sm:$0xff]
  %v3403 = vld [vmem:[#allocation2 + $0x6f] sm:$0xff]
  %v3404 = vld [vmem:[#allocation2 + $0x77] sm:$0xff]
  %v3405 = vld [vmem:[#allocation2 + $0x7f] sm:$0xff]
  %3420 = vrot.lane.b32.xlu0 %v3392, 64
  %v3421 = vpop.permute.xlu0 %3420
  %3422 = vrot.lane.b32.xlu0 %v3393, 64
  %v3423 = vpop.permute.xlu0 %3422
  %3424 = vrot.lane.b32.xlu0 %v3394, 64
  %v3425 = vpop.permute.xlu0 %3424
  %3426 = vrot.lane.b32.xlu0 %v3395, 64
  %v3427 = vpop.permute.xlu0 %3426
  %3428 = vrot.lane.b32.xlu0 %v3396, 64
  %v3429 = vpop.permute.xlu0 %3428
  %3430 = vrot.lane.b32.xlu0 %v3397, 64
  %v3431 = vpop.permute.xlu0 %3430
  %3432 = vrot.lane.b32.xlu0 %v3398, 64
  %v3433 = vpop.permute.xlu0 %3432
  %3434 = vrot.lane.b32.xlu0 %v3399, 64
  %v3435 = vpop.permute.xlu0 %3434
  %3436 = vrot.lane.b32.xlu0 %v3400, 64
  %v3437 = vpop.permute.xlu0 %3436
  %3438 = vrot.lane.b32.xlu0 %v3401, 64
  %v3439 = vpop.permute.xlu0 %3438
  %3440 = vrot.lane.b32.xlu0 %v3402, 64
  %v3441 = vpop.permute.xlu0 %3440
  %3442 = vrot.lane.b32.xlu0 %v3403, 64
  %v3443 = vpop.permute.xlu0 %3442
  %3444 = vrot.lane.b32.xlu0 %v3404, 64
  %v3445 = vpop.permute.xlu0 %3444
  %3446 = vrot.lane.b32.xlu0 %v3405, 64
  %v3447 = vpop.permute.xlu0 %3446
  %3462 = vst.msk [vmem:[#allocation4 + $0x8] sm:$0xff] %vm349, %v3421
  %3463 = vst.msk [vmem:[#allocation4 + $0x20] sm:$0xff] %vm349, %v3423
  %3464 = vst.msk [vmem:[#allocation4 + $0x38] sm:$0xff] %vm349, %v3425
  %3465 = vst.msk [vmem:[#allocation4 + $0x50] sm:$0xff] %vm349, %v3427
  %3466 = vst.msk [vmem:[#allocation4 + $0x68] sm:$0xff] %vm349, %v3429
  %3467 = vst.msk [vmem:[#allocation4 + $0x80] sm:$0xff] %vm349, %v3431
  %3468 = vst.msk [vmem:[#allocation4 + $0x98] sm:$0xff] %vm349, %v3433
  %3469 = vst.msk [vmem:[#allocation4 + $0xb0] sm:$0xff] %vm349, %v3435
  %3470 = vst.msk [vmem:[#allocation4 + $0xc8] sm:$0xff] %vm349, %v3437
  %3471 = vst.msk [vmem:[#allocation4 + $0xe0] sm:$0xff] %vm349, %v3439
  %3472 = vst.msk [vmem:[#allocation4 + $0xf8] sm:$0xff] %vm349, %v3441
  %3473 = vst.msk [vmem:[#allocation4 + $0x110] sm:$0xff] %vm349, %v3443
  %3474 = vst.msk [vmem:[#allocation4 + $0x128] sm:$0xff] %vm349, %v3445
  %3475 = vst.msk [vmem:[#allocation4 + $0x140] sm:$0xff] %vm349, %v3447
  %v3476 = vld [vmem:[#allocation2 + $0x18] sm:$0xff]
  %v3477 = vld [vmem:[#allocation2 + $0x20] sm:$0xff]
  %v3478 = vld [vmem:[#allocation2 + $0x28] sm:$0xff]
  %v3479 = vld [vmem:[#allocation2 + $0x30] sm:$0xff]
  %v3480 = vld [vmem:[#allocation2 + $0x38] sm:$0xff]
  %v3481 = vld [vmem:[#allocation2 + $0x40] sm:$0xff]
  %v3482 = vld [vmem:[#allocation2 + $0x48] sm:$0xff]
  %v3483 = vld [vmem:[#allocation2 + $0x50] sm:$0xff]
  %v3484 = vld [vmem:[#allocation2 + $0x58] sm:$0xff]
  %v3485 = vld [vmem:[#allocation2 + $0x60] sm:$0xff]
  %v3486 = vld [vmem:[#allocation2 + $0x68] sm:$0xff]
  %v3487 = vld [vmem:[#allocation2 + $0x70] sm:$0xff]
  %v3488 = vld [vmem:[#allocation2 + $0x78] sm:$0xff]
  %v3489 = vld [vmem:[#allocation2 + $0x80] sm:$0xff]
  %3504 = vrot.lane.b32.xlu0 %v3476, 96
  %v3505 = vpop.permute.xlu0 %3504
  %3506 = vrot.lane.b32.xlu0 %v3477, 96
  %v3507 = vpop.permute.xlu0 %3506
  %3508 = vrot.lane.b32.xlu0 %v3478, 96
  %v3509 = vpop.permute.xlu0 %3508
  %3510 = vrot.lane.b32.xlu0 %v3479, 96
  %v3511 = vpop.permute.xlu0 %3510
  %3512 = vrot.lane.b32.xlu0 %v3480, 96
  %v3513 = vpop.permute.xlu0 %3512
  %3514 = vrot.lane.b32.xlu0 %v3481, 96
  %v3515 = vpop.permute.xlu0 %3514
  %3516 = vrot.lane.b32.xlu0 %v3482, 96
  %v3517 = vpop.permute.xlu0 %3516
  %3518 = vrot.lane.b32.xlu0 %v3483, 96
  %v3519 = vpop.permute.xlu0 %3518
  %3520 = vrot.lane.b32.xlu0 %v3484, 96
  %v3521 = vpop.permute.xlu0 %3520
  %3522 = vrot.lane.b32.xlu0 %v3485, 96
  %v3523 = vpop.permute.xlu0 %3522
  %3524 = vrot.lane.b32.xlu0 %v3486, 96
  %v3525 = vpop.permute.xlu0 %3524
  %3526 = vrot.lane.b32.xlu0 %v3487, 96
  %v3527 = vpop.permute.xlu0 %3526
  %3528 = vrot.lane.b32.xlu0 %v3488, 96
  %v3529 = vpop.permute.xlu0 %3528
  %3530 = vrot.lane.b32.xlu0 %v3489, 96
  %v3531 = vpop.permute.xlu0 %3530
  %3546 = vst.msk [vmem:[#allocation4 + $0x8] sm:$0xff] %vm434, %v3505
  %3547 = vst.msk [vmem:[#allocation4 + $0x20] sm:$0xff] %vm434, %v3507
  %3548 = vst.msk [vmem:[#allocation4 + $0x38] sm:$0xff] %vm434, %v3509
  %3549 = vst.msk [vmem:[#allocation4 + $0x50] sm:$0xff] %vm434, %v3511
  %3550 = vst.msk [vmem:[#allocation4 + $0x68] sm:$0xff] %vm434, %v3513
  %3551 = vst.msk [vmem:[#allocation4 + $0x80] sm:$0xff] %vm434, %v3515
  %3552 = vst.msk [vmem:[#allocation4 + $0x98] sm:$0xff] %vm434, %v3517
  %3553 = vst.msk [vmem:[#allocation4 + $0xb0] sm:$0xff] %vm434, %v3519
  %3554 = vst.msk [vmem:[#allocation4 + $0xc8] sm:$0xff] %vm434, %v3521
  %3555 = vst.msk [vmem:[#allocation4 + $0xe0] sm:$0xff] %vm434, %v3523
  %3556 = vst.msk [vmem:[#allocation4 + $0xf8] sm:$0xff] %vm434, %v3525
  %3557 = vst.msk [vmem:[#allocation4 + $0x110] sm:$0xff] %vm434, %v3527
  %3558 = vst.msk [vmem:[#allocation4 + $0x128] sm:$0xff] %vm434, %v3529
  %3559 = vst.msk [vmem:[#allocation4 + $0x140] sm:$0xff] %vm434, %v3531
  %v3560 = vld [vmem:[#allocation2 + $0x19] sm:$0xff]
  %v3561 = vld [vmem:[#allocation2 + $0x21] sm:$0xff]
  %v3562 = vld [vmem:[#allocation2 + $0x29] sm:$0xff]
  %v3563 = vld [vmem:[#allocation2 + $0x31] sm:$0xff]
  %v3564 = vld [vmem:[#allocation2 + $0x39] sm:$0xff]
  %v3565 = vld [vmem:[#allocation2 + $0x41] sm:$0xff]
  %v3566 = vld [vmem:[#allocation2 + $0x49] sm:$0xff]
  %v3567 = vld [vmem:[#allocation2 + $0x51] sm:$0xff]
  %v3568 = vld [vmem:[#allocation2 + $0x59] sm:$0xff]
  %v3569 = vld [vmem:[#allocation2 + $0x61] sm:$0xff]
  %v3570 = vld [vmem:[#allocation2 + $0x69] sm:$0xff]
  %v3571 = vld [vmem:[#allocation2 + $0x71] sm:$0xff]
  %v3572 = vld [vmem:[#allocation2 + $0x79] sm:$0xff]
  %v3573 = vld [vmem:[#allocation2 + $0x81] sm:$0xff]
  %3574 = vst.msk [vmem:[#allocation4 + $0x10] sm:$0xff] %vm37, %v3560
  %3575 = vst.msk [vmem:[#allocation4 + $0x28] sm:$0xff] %vm37, %v3561
  %3576 = vst.msk [vmem:[#allocation4 + $0x40] sm:$0xff] %vm37, %v3562
  %3577 = vst.msk [vmem:[#allocation4 + $0x58] sm:$0xff] %vm37, %v3563
  %3578 = vst.msk [vmem:[#allocation4 + $0x70] sm:$0xff] %vm37, %v3564
  %3579 = vst.msk [vmem:[#allocation4 + $0x88] sm:$0xff] %vm37, %v3565
  %3580 = vst.msk [vmem:[#allocation4 + $0xa0] sm:$0xff] %vm37, %v3566
  %3581 = vst.msk [vmem:[#allocation4 + $0xb8] sm:$0xff] %vm37, %v3567
  %3582 = vst.msk [vmem:[#allocation4 + $0xd0] sm:$0xff] %vm37, %v3568
  %3583 = vst.msk [vmem:[#allocation4 + $0xe8] sm:$0xff] %vm37, %v3569
  %3584 = vst.msk [vmem:[#allocation4 + $0x100] sm:$0xff] %vm37, %v3570
  %3585 = vst.msk [vmem:[#allocation4 + $0x118] sm:$0xff] %vm37, %v3571
  %3586 = vst.msk [vmem:[#allocation4 + $0x130] sm:$0xff] %vm37, %v3572
  %3587 = vst.msk [vmem:[#allocation4 + $0x148] sm:$0xff] %vm37, %v3573
  %v3588 = vld [vmem:[#allocation4] sm:$0xff]
  %v3589 = vld [vmem:[#allocation4 + $0x8] sm:$0xff]
  %v3590 = vld [vmem:[#allocation4 + $0x10] sm:$0xff]
  %v3591 = vld [vmem:[#allocation4 + $0x18] sm:$0xff]
  %v3592 = vld [vmem:[#allocation4 + $0x20] sm:$0xff]
  %v3593 = vld [vmem:[#allocation4 + $0x28] sm:$0xff]
  %v3594 = vld [vmem:[#allocation4 + $0x30] sm:$0xff]
  %v3595 = vld [vmem:[#allocation4 + $0x38] sm:$0xff]
  %v3596 = vld [vmem:[#allocation4 + $0x40] sm:$0xff]
  %v3597 = vld [vmem:[#allocation4 + $0x48] sm:$0xff]
  %v3598 = vld [vmem:[#allocation4 + $0x50] sm:$0xff]
  %v3599 = vld [vmem:[#allocation4 + $0x58] sm:$0xff]
  %v3600 = vld [vmem:[#allocation4 + $0x60] sm:$0xff]
  %v3601 = vld [vmem:[#allocation4 + $0x68] sm:$0xff]
  %v3602 = vld [vmem:[#allocation4 + $0x70] sm:$0xff]
  %v3603 = vld [vmem:[#allocation4 + $0x78] sm:$0xff]
  %v3604 = vld [vmem:[#allocation4 + $0x80] sm:$0xff]
  %v3605 = vld [vmem:[#allocation4 + $0x88] sm:$0xff]
  %v3606 = vld [vmem:[#allocation4 + $0x90] sm:$0xff]
  %v3607 = vld [vmem:[#allocation4 + $0x98] sm:$0xff]
  %v3608 = vld [vmem:[#allocation4 + $0xa0] sm:$0xff]
  %v3609 = vld [vmem:[#allocation4 + $0xa8] sm:$0xff]
  %v3610 = vld [vmem:[#allocation4 + $0xb0] sm:$0xff]
  %v3611 = vld [vmem:[#allocation4 + $0xb8] sm:$0xff]
  %v3612 = vld [vmem:[#allocation4 + $0xc0] sm:$0xff]
  %v3613 = vld [vmem:[#allocation4 + $0xc8] sm:$0xff]
  %v3614 = vld [vmem:[#allocation4 + $0xd0] sm:$0xff]
  %v3615 = vld [vmem:[#allocation4 + $0xd8] sm:$0xff]
  %v3616 = vld [vmem:[#allocation4 + $0xe0] sm:$0xff]
  %v3617 = vld [vmem:[#allocation4 + $0xe8] sm:$0xff]
  %v3618 = vld [vmem:[#allocation4 + $0xf0] sm:$0xff]
  %v3619 = vld [vmem:[#allocation4 + $0xf8] sm:$0xff]
  %v3620 = vld [vmem:[#allocation4 + $0x100] sm:$0xff]
  %v3621 = vld [vmem:[#allocation4 + $0x108] sm:$0xff]
  %v3622 = vld [vmem:[#allocation4 + $0x110] sm:$0xff]
  %v3623 = vld [vmem:[#allocation4 + $0x118] sm:$0xff]
  %v3624 = vld [vmem:[#allocation4 + $0x120] sm:$0xff]
  %v3625 = vld [vmem:[#allocation4 + $0x128] sm:$0xff]
  %v3626 = vld [vmem:[#allocation4 + $0x130] sm:$0xff]
  %v3627 = vld [vmem:[#allocation4 + $0x138] sm:$0xff]
  %v3628 = vld [vmem:[#allocation4 + $0x140] sm:$0xff]
  %v3629 = vld [vmem:[#allocation4 + $0x148] sm:$0xff]
  %v3631 = vsel %vm37, %v3590, 0
  %v3634 = vsel %vm37, %v3593, 0
  %v3637 = vsel %vm37, %v3596, 0
  %v3640 = vsel %vm37, %v3599, 0
  %v3643 = vsel %vm37, %v3602, 0
  %v3646 = vsel %vm37, %v3605, 0
  %v3649 = vsel %vm37, %v3608, 0
  %v3652 = vsel %vm37, %v3611, 0
  %v3655 = vsel %vm37, %v3614, 0
  %v3658 = vsel %vm37, %v3617, 0
  %v3661 = vsel %vm37, %v3620, 0
  %v3664 = vsel %vm37, %v3623, 0
  %v3667 = vsel %vm37, %v3626, 0
  %v3670 = vsel %vm37, %v3629, 0
  %3672 = vmatpush.msra.mxu0 %v2943
  %3673 = vmatpush.msra.mxu0 %v2942
  %3674 = vmatpush.msra.mxu0 %v2941
  %3675 = vmatpush.msra.mxu0 %v2940
  %3676 = vmatpush.msra.mxu0 %v2939
  %3677 = vmatpush.msra.mxu0 %v2938
  %3678 = vmatpush.msra.mxu0 %v2937
  %3679 = vmatpush.msra.mxu0 %v2936
  %3680 = vmatpush.msra.mxu0 %v2935
  %3681 = vmatpush.msra.mxu0 %v2934
  %3682 = vmatpush.msra.mxu0 %v2933
  %3683 = vmatpush.msra.mxu0 %v2932
  %3684 = vmatpush.msra.mxu0 %v2931
  %3685 = vmatpush.msra.mxu0 %v2930
  %3686 = vmatpush.msra.mxu0 %v2929
  %3687 = vmatpush.msra.mxu0 %v2928
  %3688 = vmatmul.f32.gmra.mxu0 %v3588
  %v3689 = vpop.f32.mrf.mxu0
  %v3690 = vadd.f32 0.0, %v3689
  %3691 = vmatmul.f32.gmra.mxu0 %v3591
  %v3692 = vpop.f32.mrf.mxu0
  %v3693 = vadd.f32 0.0, %v3692
  %3694 = vmatmul.f32.gmra.mxu0 %v3594
  %v3695 = vpop.f32.mrf.mxu0
  %v3696 = vadd.f32 0.0, %v3695
  %3697 = vmatmul.f32.gmra.mxu0 %v3597
  %v3698 = vpop.f32.mrf.mxu0
  %v3699 = vadd.f32 0.0, %v3698
  %3700 = vmatmul.f32.gmra.mxu0 %v3600
  %v3701 = vpop.f32.mrf.mxu0
  %v3702 = vadd.f32 0.0, %v3701
  %3703 = vmatmul.f32.gmra.mxu0 %v3603
  %v3704 = vpop.f32.mrf.mxu0
  %v3705 = vadd.f32 0.0, %v3704
  %3706 = vmatmul.f32.gmra.mxu0 %v3606
  %v3707 = vpop.f32.mrf.mxu0
  %v3708 = vadd.f32 0.0, %v3707
  %3709 = vmatmul.f32.gmra.mxu0 %v3609
  %v3710 = vpop.f32.mrf.mxu0
  %v3711 = vadd.f32 0.0, %v3710
  %3712 = vmatmul.f32.gmra.mxu0 %v3612
  %v3713 = vpop.f32.mrf.mxu0
  %v3714 = vadd.f32 0.0, %v3713
  %3715 = vmatmul.f32.gmra.mxu0 %v3615
  %v3716 = vpop.f32.mrf.mxu0
  %v3717 = vadd.f32 0.0, %v3716
  %3718 = vmatmul.f32.gmra.mxu0 %v3618
  %v3719 = vpop.f32.mrf.mxu0
  %v3720 = vadd.f32 0.0, %v3719
  %3721 = vmatmul.f32.gmra.mxu0 %v3621
  %v3722 = vpop.f32.mrf.mxu0
  %v3723 = vadd.f32 0.0, %v3722
  %3724 = vmatmul.f32.gmra.mxu0 %v3624
  %v3725 = vpop.f32.mrf.mxu0
  %v3726 = vadd.f32 0.0, %v3725
  %3727 = vmatmul.f32.gmra.mxu0 %v3627
  %v3728 = vpop.f32.mrf.mxu0
  %v3729 = vadd.f32 0.0, %v3728
  %3730 = vdwg.mxu0
  %3731 = vmatpush.msra.mxu0 %v2959
  %3732 = vmatpush.msra.mxu0 %v2958
  %3733 = vmatpush.msra.mxu0 %v2957
  %3734 = vmatpush.msra.mxu0 %v2956
  %3735 = vmatpush.msra.mxu0 %v2955
  %3736 = vmatpush.msra.mxu0 %v2954
  %3737 = vmatpush.msra.mxu0 %v2953
  %3738 = vmatpush.msra.mxu0 %v2952
  %3739 = vmatpush.msra.mxu0 %v2951
  %3740 = vmatpush.msra.mxu0 %v2950
  %3741 = vmatpush.msra.mxu0 %v2949
  %3742 = vmatpush.msra.mxu0 %v2948
  %3743 = vmatpush.msra.mxu0 %v2947
  %3744 = vmatpush.msra.mxu0 %v2946
  %3745 = vmatpush.msra.mxu0 %v2945
  %3746 = vmatpush.msra.mxu0 %v2944
  %3747 = vmatmul.f32.gmra.mxu0 %v3589
  %v3748 = vpop.f32.mrf.mxu0
  %v3749 = vadd.f32 %v3690, %v3748
  %3750 = vmatmul.f32.gmra.mxu0 %v3592
  %v3751 = vpop.f32.mrf.mxu0
  %v3752 = vadd.f32 %v3693, %v3751
  %3753 = vmatmul.f32.gmra.mxu0 %v3595
  %v3754 = vpop.f32.mrf.mxu0
  %v3755 = vadd.f32 %v3696, %v3754
  %3756 = vmatmul.f32.gmra.mxu0 %v3598
  %v3757 = vpop.f32.mrf.mxu0
  %v3758 = vadd.f32 %v3699, %v3757
  %3759 = vmatmul.f32.gmra.mxu0 %v3601
  %v3760 = vpop.f32.mrf.mxu0
  %v3761 = vadd.f32 %v3702, %v3760
  %3762 = vmatmul.f32.gmra.mxu0 %v3604
  %v3763 = vpop.f32.mrf.mxu0
  %v3764 = vadd.f32 %v3705, %v3763
  %3765 = vmatmul.f32.gmra.mxu0 %v3607
  %v3766 = vpop.f32.mrf.mxu0
  %v3767 = vadd.f32 %v3708, %v3766
  %3768 = vmatmul.f32.gmra.mxu0 %v3610
  %v3769 = vpop.f32.mrf.mxu0
  %v3770 = vadd.f32 %v3711, %v3769
  %3771 = vmatmul.f32.gmra.mxu0 %v3613
  %v3772 = vpop.f32.mrf.mxu0
  %v3773 = vadd.f32 %v3714, %v3772
  %3774 = vmatmul.f32.gmra.mxu0 %v3616
  %v3775 = vpop.f32.mrf.mxu0
  %v3776 = vadd.f32 %v3717, %v3775
  %3777 = vmatmul.f32.gmra.mxu0 %v3619
  %v3778 = vpop.f32.mrf.mxu0
  %v3779 = vadd.f32 %v3720, %v3778
  %3780 = vmatmul.f32.gmra.mxu0 %v3622
  %v3781 = vpop.f32.mrf.mxu0
  %v3782 = vadd.f32 %v3723, %v3781
  %3783 = vmatmul.f32.gmra.mxu0 %v3625
  %v3784 = vpop.f32.mrf.mxu0
  %v3785 = vadd.f32 %v3726, %v3784
  %3786 = vmatmul.f32.gmra.mxu0 %v3628
  %v3787 = vpop.f32.mrf.mxu0
  %v3788 = vadd.f32 %v3729, %v3787
  %3789 = vdwg.mxu0
  %3790 = vmatpush.msra.mxu0 0.0
  %3791 = vmatpush.msra.mxu0 0.0
  %3792 = vmatpush.msra.mxu0 0.0
  %3793 = vmatpush.msra.mxu0 0.0
  %3794 = vmatpush.msra.mxu0 0.0
  %3795 = vmatpush.msra.mxu0 0.0
  %3796 = vmatpush.msra.mxu0 0.0
  %3797 = vmatpush.msra.mxu0 0.0
  %3798 = vmatpush.msra.mxu0 0.0
  %3799 = vmatpush.msra.mxu0 0.0
  %3800 = vmatpush.msra.mxu0 0.0
  %3801 = vmatpush.msra.mxu0 0.0
  %3802 = vmatpush.msra.mxu0 %v2963
  %3803 = vmatpush.msra.mxu0 %v2962
  %3804 = vmatpush.msra.mxu0 %v2961
  %3805 = vmatpush.msra.mxu0 %v2960
  %3806 = vmatmul.f32.gmra.mxu0 %v3631
  %v3807 = vpop.f32.mrf.mxu0
  %v3808 = vadd.f32 %v3749, %v3807
  %3809 = vmatmul.f32.gmra.mxu0 %v3634
  %v3810 = vpop.f32.mrf.mxu0
  %v3811 = vadd.f32 %v3752, %v3810
  %3812 = vmatmul.f32.gmra.mxu0 %v3637
  %v3813 = vpop.f32.mrf.mxu0
  %v3814 = vadd.f32 %v3755, %v3813
  %3815 = vmatmul.f32.gmra.mxu0 %v3640
  %v3816 = vpop.f32.mrf.mxu0
  %v3817 = vadd.f32 %v3758, %v3816
  %3818 = vmatmul.f32.gmra.mxu0 %v3643
  %v3819 = vpop.f32.mrf.mxu0
  %v3820 = vadd.f32 %v3761, %v3819
  %3821 = vmatmul.f32.gmra.mxu0 %v3646
  %v3822 = vpop.f32.mrf.mxu0
  %v3823 = vadd.f32 %v3764, %v3822
  %3824 = vmatmul.f32.gmra.mxu0 %v3649
  %v3825 = vpop.f32.mrf.mxu0
  %v3826 = vadd.f32 %v3767, %v3825
  %3827 = vmatmul.f32.gmra.mxu0 %v3652
  %v3828 = vpop.f32.mrf.mxu0
  %v3829 = vadd.f32 %v3770, %v3828
  %3830 = vmatmul.f32.gmra.mxu0 %v3655
  %v3831 = vpop.f32.mrf.mxu0
  %v3832 = vadd.f32 %v3773, %v3831
  %3833 = vmatmul.f32.gmra.mxu0 %v3658
  %v3834 = vpop.f32.mrf.mxu0
  %v3835 = vadd.f32 %v3776, %v3834
  %3836 = vmatmul.f32.gmra.mxu0 %v3661
  %v3837 = vpop.f32.mrf.mxu0
  %v3838 = vadd.f32 %v3779, %v3837
  %3839 = vmatmul.f32.gmra.mxu0 %v3664
  %v3840 = vpop.f32.mrf.mxu0
  %v3841 = vadd.f32 %v3782, %v3840
  %3842 = vmatmul.f32.gmra.mxu0 %v3667
  %v3843 = vpop.f32.mrf.mxu0
  %v3844 = vadd.f32 %v3785, %v3843
  %3845 = vmatmul.f32.gmra.mxu0 %v3670
  %v3846 = vpop.f32.mrf.mxu0
  %v3847 = vadd.f32 %v3788, %v3846
  %3848 = vdwg.mxu0
  %v3849 = vmax.f32 %v3808, 0.0
  %v3850 = vmax.f32 %v3811, 0.0
  %v3851 = vmax.f32 %v3814, 0.0
  %v3852 = vmax.f32 %v3817, 0.0
  %v3853 = vmax.f32 %v3820, 0.0
  %v3854 = vmax.f32 %v3823, 0.0
  %v3855 = vmax.f32 %v3826, 0.0
  %v3856 = vmax.f32 %v3829, 0.0
  %v3857 = vmax.f32 %v3832, 0.0
  %v3858 = vmax.f32 %v3835, 0.0
  %v3859 = vmax.f32 %v3838, 0.0
  %v3860 = vmax.f32 %v3841, 0.0
  %v3861 = vmax.f32 %v3844, 0.0
  %v3862 = vmax.f32 %v3847, 0.0
  %v3863 = vmul.f32 %v3849, %v63
  %v3864 = vmul.f32 %v3850, %v68
  %v3865 = vmul.f32 %v3851, %v73
  %v3866 = vmul.f32 %v3852, %v78
  %v3867 = vmul.f32 %v3853, %v83
  %v3868 = vmul.f32 %v3854, %v88
  %v3869 = vmul.f32 %v3855, %v93
  %v3870 = vmul.f32 %v3856, %v98
  %v3871 = vmul.f32 %v3857, %v103
  %v3872 = vmul.f32 %v3858, %v108
  %v3873 = vmul.f32 %v3859, %v113
  %v3874 = vmul.f32 %v3860, %v118
  %v3875 = vmul.f32 %v3861, %v123
  %v3876 = vmul.f32 %v3862, %v128
  %3877 = vst.msk [vmem:[#allocation3 + $0x10] sm:$0xff] %vm37, %v3863
  %3878 = vst.msk [vmem:[#allocation3 + $0x18] sm:$0xff] %vm37, %v3864
  %3879 = vst.msk [vmem:[#allocation3 + $0x20] sm:$0xff] %vm37, %v3865
  %3880 = vst.msk [vmem:[#allocation3 + $0x28] sm:$0xff] %vm37, %v3866
  %3881 = vst.msk [vmem:[#allocation3 + $0x30] sm:$0xff] %vm37, %v3867
  %3882 = vst.msk [vmem:[#allocation3 + $0x38] sm:$0xff] %vm37, %v3868
  %3883 = vst.msk [vmem:[#allocation3 + $0x40] sm:$0xff] %vm37, %v3869
  %3884 = vst.msk [vmem:[#allocation3 + $0x48] sm:$0xff] %vm37, %v3870
  %3885 = vst.msk [vmem:[#allocation3 + $0x50] sm:$0xff] %vm37, %v3871
  %3886 = vst.msk [vmem:[#allocation3 + $0x58] sm:$0xff] %vm37, %v3872
  %3887 = vst.msk [vmem:[#allocation3 + $0x60] sm:$0xff] %vm37, %v3873
  %3888 = vst.msk [vmem:[#allocation3 + $0x68] sm:$0xff] %vm37, %v3874
  %3889 = vst.msk [vmem:[#allocation3 + $0x70] sm:$0xff] %vm37, %v3875
  %3890 = vst.msk [vmem:[#allocation3 + $0x78] sm:$0xff] %vm37, %v3876
  %v3891 = vld [vmem:[#allocation3 + $0x7] sm:$0xff]
  %v3892 = vld [vmem:[#allocation3 + $0xf] sm:$0xff]
  %v3893 = vld [vmem:[#allocation3 + $0x17] sm:$0xff]
  %v3894 = vld [vmem:[#allocation3 + $0x1f] sm:$0xff]
  %v3895 = vld [vmem:[#allocation3 + $0x27] sm:$0xff]
  %v3896 = vld [vmem:[#allocation3 + $0x2f] sm:$0xff]
  %v3897 = vld [vmem:[#allocation3 + $0x37] sm:$0xff]
  %v3898 = vld [vmem:[#allocation3 + $0x3f] sm:$0xff]
  %v3899 = vld [vmem:[#allocation3 + $0x47] sm:$0xff]
  %v3900 = vld [vmem:[#allocation3 + $0x4f] sm:$0xff]
  %v3901 = vld [vmem:[#allocation3 + $0x57] sm:$0xff]
  %v3902 = vld [vmem:[#allocation3 + $0x5f] sm:$0xff]
  %v3903 = vld [vmem:[#allocation3 + $0x67] sm:$0xff]
  %v3904 = vld [vmem:[#allocation3 + $0x6f] sm:$0xff]
  %3905 = vst.msk [vmem:[#allocation4] sm:$0xff] %vm37, %v3891
  %3906 = vst.msk [vmem:[#allocation4 + $0x18] sm:$0xff] %vm37, %v3892
  %3907 = vst.msk [vmem:[#allocation4 + $0x30] sm:$0xff] %vm37, %v3893
  %3908 = vst.msk [vmem:[#allocation4 + $0x48] sm:$0xff] %vm37, %v3894
  %3909 = vst.msk [vmem:[#allocation4 + $0x60] sm:$0xff] %vm37, %v3895
  %3910 = vst.msk [vmem:[#allocation4 + $0x78] sm:$0xff] %vm37, %v3896
  %3911 = vst.msk [vmem:[#allocation4 + $0x90] sm:$0xff] %vm37, %v3897
  %3912 = vst.msk [vmem:[#allocation4 + $0xa8] sm:$0xff] %vm37, %v3898
  %3913 = vst.msk [vmem:[#allocation4 + $0xc0] sm:$0xff] %vm37, %v3899
  %3914 = vst.msk [vmem:[#allocation4 + $0xd8] sm:$0xff] %vm37, %v3900
  %3915 = vst.msk [vmem:[#allocation4 + $0xf0] sm:$0xff] %vm37, %v3901
  %3916 = vst.msk [vmem:[#allocation4 + $0x108] sm:$0xff] %vm37, %v3902
  %3917 = vst.msk [vmem:[#allocation4 + $0x120] sm:$0xff] %vm37, %v3903
  %3918 = vst.msk [vmem:[#allocation4 + $0x138] sm:$0xff] %vm37, %v3904
  %v3919 = vld [vmem:[#allocation3 + $0x8] sm:$0xff]
  %v3920 = vld [vmem:[#allocation3 + $0x10] sm:$0xff]
  %v3921 = vld [vmem:[#allocation3 + $0x18] sm:$0xff]
  %v3922 = vld [vmem:[#allocation3 + $0x20] sm:$0xff]
  %v3923 = vld [vmem:[#allocation3 + $0x28] sm:$0xff]
  %v3924 = vld [vmem:[#allocation3 + $0x30] sm:$0xff]
  %v3925 = vld [vmem:[#allocation3 + $0x38] sm:$0xff]
  %v3926 = vld [vmem:[#allocation3 + $0x40] sm:$0xff]
  %v3927 = vld [vmem:[#allocation3 + $0x48] sm:$0xff]
  %v3928 = vld [vmem:[#allocation3 + $0x50] sm:$0xff]
  %v3929 = vld [vmem:[#allocation3 + $0x58] sm:$0xff]
  %v3930 = vld [vmem:[#allocation3 + $0x60] sm:$0xff]
  %v3931 = vld [vmem:[#allocation3 + $0x68] sm:$0xff]
  %v3932 = vld [vmem:[#allocation3 + $0x70] sm:$0xff]
  %3947 = vrot.lane.b32.xlu0 %v3919, 32
  %v3948 = vpop.permute.xlu0 %3947
  %3949 = vrot.lane.b32.xlu0 %v3920, 32
  %v3950 = vpop.permute.xlu0 %3949
  %3951 = vrot.lane.b32.xlu0 %v3921, 32
  %v3952 = vpop.permute.xlu0 %3951
  %3953 = vrot.lane.b32.xlu0 %v3922, 32
  %v3954 = vpop.permute.xlu0 %3953
  %3955 = vrot.lane.b32.xlu0 %v3923, 32
  %v3956 = vpop.permute.xlu0 %3955
  %3957 = vrot.lane.b32.xlu0 %v3924, 32
  %v3958 = vpop.permute.xlu0 %3957
  %3959 = vrot.lane.b32.xlu0 %v3925, 32
  %v3960 = vpop.permute.xlu0 %3959
  %3961 = vrot.lane.b32.xlu0 %v3926, 32
  %v3962 = vpop.permute.xlu0 %3961
  %3963 = vrot.lane.b32.xlu0 %v3927, 32
  %v3964 = vpop.permute.xlu0 %3963
  %3965 = vrot.lane.b32.xlu0 %v3928, 32
  %v3966 = vpop.permute.xlu0 %3965
  %3967 = vrot.lane.b32.xlu0 %v3929, 32
  %v3968 = vpop.permute.xlu0 %3967
  %3969 = vrot.lane.b32.xlu0 %v3930, 32
  %v3970 = vpop.permute.xlu0 %3969
  %3971 = vrot.lane.b32.xlu0 %v3931, 32
  %v3972 = vpop.permute.xlu0 %3971
  %3973 = vrot.lane.b32.xlu0 %v3932, 32
  %v3974 = vpop.permute.xlu0 %3973
  %3989 = vst.msk [vmem:[#allocation4] sm:$0xff] %vm264, %v3948
  %3990 = vst.msk [vmem:[#allocation4 + $0x18] sm:$0xff] %vm264, %v3950
  %3991 = vst.msk [vmem:[#allocation4 + $0x30] sm:$0xff] %vm264, %v3952
  %3992 = vst.msk [vmem:[#allocation4 + $0x48] sm:$0xff] %vm264, %v3954
  %3993 = vst.msk [vmem:[#allocation4 + $0x60] sm:$0xff] %vm264, %v3956
  %3994 = vst.msk [vmem:[#allocation4 + $0x78] sm:$0xff] %vm264, %v3958
  %3995 = vst.msk [vmem:[#allocation4 + $0x90] sm:$0xff] %vm264, %v3960
  %3996 = vst.msk [vmem:[#allocation4 + $0xa8] sm:$0xff] %vm264, %v3962
  %3997 = vst.msk [vmem:[#allocation4 + $0xc0] sm:$0xff] %vm264, %v3964
  %3998 = vst.msk [vmem:[#allocation4 + $0xd8] sm:$0xff] %vm264, %v3966
  %3999 = vst.msk [vmem:[#allocation4 + $0xf0] sm:$0xff] %vm264, %v3968
  %4000 = vst.msk [vmem:[#allocation4 + $0x108] sm:$0xff] %vm264, %v3970
  %4001 = vst.msk [vmem:[#allocation4 + $0x120] sm:$0xff] %vm264, %v3972
  %4002 = vst.msk [vmem:[#allocation4 + $0x138] sm:$0xff] %vm264, %v3974
  %v4003 = vld [vmem:[#allocation3 + $0x9] sm:$0xff]
  %v4004 = vld [vmem:[#allocation3 + $0x11] sm:$0xff]
  %v4005 = vld [vmem:[#allocation3 + $0x19] sm:$0xff]
  %v4006 = vld [vmem:[#allocation3 + $0x21] sm:$0xff]
  %v4007 = vld [vmem:[#allocation3 + $0x29] sm:$0xff]
  %v4008 = vld [vmem:[#allocation3 + $0x31] sm:$0xff]
  %v4009 = vld [vmem:[#allocation3 + $0x39] sm:$0xff]
  %v4010 = vld [vmem:[#allocation3 + $0x41] sm:$0xff]
  %v4011 = vld [vmem:[#allocation3 + $0x49] sm:$0xff]
  %v4012 = vld [vmem:[#allocation3 + $0x51] sm:$0xff]
  %v4013 = vld [vmem:[#allocation3 + $0x59] sm:$0xff]
  %v4014 = vld [vmem:[#allocation3 + $0x61] sm:$0xff]
  %v4015 = vld [vmem:[#allocation3 + $0x69] sm:$0xff]
  %v4016 = vld [vmem:[#allocation3 + $0x71] sm:$0xff]
  %4031 = vrot.lane.b32.xlu0 %v4003, 64
  %v4032 = vpop.permute.xlu0 %4031
  %4033 = vrot.lane.b32.xlu0 %v4004, 64
  %v4034 = vpop.permute.xlu0 %4033
  %4035 = vrot.lane.b32.xlu0 %v4005, 64
  %v4036 = vpop.permute.xlu0 %4035
  %4037 = vrot.lane.b32.xlu0 %v4006, 64
  %v4038 = vpop.permute.xlu0 %4037
  %4039 = vrot.lane.b32.xlu0 %v4007, 64
  %v4040 = vpop.permute.xlu0 %4039
  %4041 = vrot.lane.b32.xlu0 %v4008, 64
  %v4042 = vpop.permute.xlu0 %4041
  %4043 = vrot.lane.b32.xlu0 %v4009, 64
  %v4044 = vpop.permute.xlu0 %4043
  %4045 = vrot.lane.b32.xlu0 %v4010, 64
  %v4046 = vpop.permute.xlu0 %4045
  %4047 = vrot.lane.b32.xlu0 %v4011, 64
  %v4048 = vpop.permute.xlu0 %4047
  %4049 = vrot.lane.b32.xlu0 %v4012, 64
  %v4050 = vpop.permute.xlu0 %4049
  %4051 = vrot.lane.b32.xlu0 %v4013, 64
  %v4052 = vpop.permute.xlu0 %4051
  %4053 = vrot.lane.b32.xlu0 %v4014, 64
  %v4054 = vpop.permute.xlu0 %4053
  %4055 = vrot.lane.b32.xlu0 %v4015, 64
  %v4056 = vpop.permute.xlu0 %4055
  %4057 = vrot.lane.b32.xlu0 %v4016, 64
  %v4058 = vpop.permute.xlu0 %4057
  %4073 = vst.msk [vmem:[#allocation4] sm:$0xff] %vm349, %v4032
  %4074 = vst.msk [vmem:[#allocation4 + $0x18] sm:$0xff] %vm349, %v4034
  %4075 = vst.msk [vmem:[#allocation4 + $0x30] sm:$0xff] %vm349, %v4036
  %4076 = vst.msk [vmem:[#allocation4 + $0x48] sm:$0xff] %vm349, %v4038
  %4077 = vst.msk [vmem:[#allocation4 + $0x60] sm:$0xff] %vm349, %v4040
  %4078 = vst.msk [vmem:[#allocation4 + $0x78] sm:$0xff] %vm349, %v4042
  %4079 = vst.msk [vmem:[#allocation4 + $0x90] sm:$0xff] %vm349, %v4044
  %4080 = vst.msk [vmem:[#allocation4 + $0xa8] sm:$0xff] %vm349, %v4046
  %4081 = vst.msk [vmem:[#allocation4 + $0xc0] sm:$0xff] %vm349, %v4048
  %4082 = vst.msk [vmem:[#allocation4 + $0xd8] sm:$0xff] %vm349, %v4050
  %4083 = vst.msk [vmem:[#allocation4 + $0xf0] sm:$0xff] %vm349, %v4052
  %4084 = vst.msk [vmem:[#allocation4 + $0x108] sm:$0xff] %vm349, %v4054
  %4085 = vst.msk [vmem:[#allocation4 + $0x120] sm:$0xff] %vm349, %v4056
  %4086 = vst.msk [vmem:[#allocation4 + $0x138] sm:$0xff] %vm349, %v4058
  %v4087 = vld [vmem:[#allocation3 + $0xf] sm:$0xff]
  %v4088 = vld [vmem:[#allocation3 + $0x17] sm:$0xff]
  %v4089 = vld [vmem:[#allocation3 + $0x1f] sm:$0xff]
  %v4090 = vld [vmem:[#allocation3 + $0x27] sm:$0xff]
  %v4091 = vld [vmem:[#allocation3 + $0x2f] sm:$0xff]
  %v4092 = vld [vmem:[#allocation3 + $0x37] sm:$0xff]
  %v4093 = vld [vmem:[#allocation3 + $0x3f] sm:$0xff]
  %v4094 = vld [vmem:[#allocation3 + $0x47] sm:$0xff]
  %v4095 = vld [vmem:[#allocation3 + $0x4f] sm:$0xff]
  %v4096 = vld [vmem:[#allocation3 + $0x57] sm:$0xff]
  %v4097 = vld [vmem:[#allocation3 + $0x5f] sm:$0xff]
  %v4098 = vld [vmem:[#allocation3 + $0x67] sm:$0xff]
  %v4099 = vld [vmem:[#allocation3 + $0x6f] sm:$0xff]
  %v4100 = vld [vmem:[#allocation3 + $0x77] sm:$0xff]
  %4115 = vrot.lane.b32.xlu0 %v4087, 96
  %v4116 = vpop.permute.xlu0 %4115
  %4117 = vrot.lane.b32.xlu0 %v4088, 96
  %v4118 = vpop.permute.xlu0 %4117
  %4119 = vrot.lane.b32.xlu0 %v4089, 96
  %v4120 = vpop.permute.xlu0 %4119
  %4121 = vrot.lane.b32.xlu0 %v4090, 96
  %v4122 = vpop.permute.xlu0 %4121
  %4123 = vrot.lane.b32.xlu0 %v4091, 96
  %v4124 = vpop.permute.xlu0 %4123
  %4125 = vrot.lane.b32.xlu0 %v4092, 96
  %v4126 = vpop.permute.xlu0 %4125
  %4127 = vrot.lane.b32.xlu0 %v4093, 96
  %v4128 = vpop.permute.xlu0 %4127
  %4129 = vrot.lane.b32.xlu0 %v4094, 96
  %v4130 = vpop.permute.xlu0 %4129
  %4131 = vrot.lane.b32.xlu0 %v4095, 96
  %v4132 = vpop.permute.xlu0 %4131
  %4133 = vrot.lane.b32.xlu0 %v4096, 96
  %v4134 = vpop.permute.xlu0 %4133
  %4135 = vrot.lane.b32.xlu0 %v4097, 96
  %v4136 = vpop.permute.xlu0 %4135
  %4137 = vrot.lane.b32.xlu0 %v4098, 96
  %v4138 = vpop.permute.xlu0 %4137
  %4139 = vrot.lane.b32.xlu0 %v4099, 96
  %v4140 = vpop.permute.xlu0 %4139
  %4141 = vrot.lane.b32.xlu0 %v4100, 96
  %v4142 = vpop.permute.xlu0 %4141
  %4157 = vst.msk [vmem:[#allocation4] sm:$0xff] %vm434, %v4116
  %4158 = vst.msk [vmem:[#allocation4 + $0x18] sm:$0xff] %vm434, %v4118
  %4159 = vst.msk [vmem:[#allocation4 + $0x30] sm:$0xff] %vm434, %v4120
  %4160 = vst.msk [vmem:[#allocation4 + $0x48] sm:$0xff] %vm434, %v4122
  %4161 = vst.msk [vmem:[#allocation4 + $0x60] sm:$0xff] %vm434, %v4124
  %4162 = vst.msk [vmem:[#allocation4 + $0x78] sm:$0xff] %vm434, %v4126
  %4163 = vst.msk [vmem:[#allocation4 + $0x90] sm:$0xff] %vm434, %v4128
  %4164 = vst.msk [vmem:[#allocation4 + $0xa8] sm:$0xff] %vm434, %v4130
  %4165 = vst.msk [vmem:[#allocation4 + $0xc0] sm:$0xff] %vm434, %v4132
  %4166 = vst.msk [vmem:[#allocation4 + $0xd8] sm:$0xff] %vm434, %v4134
  %4167 = vst.msk [vmem:[#allocation4 + $0xf0] sm:$0xff] %vm434, %v4136
  %4168 = vst.msk [vmem:[#allocation4 + $0x108] sm:$0xff] %vm434, %v4138
  %4169 = vst.msk [vmem:[#allocation4 + $0x120] sm:$0xff] %vm434, %v4140
  %4170 = vst.msk [vmem:[#allocation4 + $0x138] sm:$0xff] %vm434, %v4142
  %v4171 = vld [vmem:[#allocation3 + $0x10] sm:$0xff]
  %v4172 = vld [vmem:[#allocation3 + $0x18] sm:$0xff]
  %v4173 = vld [vmem:[#allocation3 + $0x20] sm:$0xff]
  %v4174 = vld [vmem:[#allocation3 + $0x28] sm:$0xff]
  %v4175 = vld [vmem:[#allocation3 + $0x30] sm:$0xff]
  %v4176 = vld [vmem:[#allocation3 + $0x38] sm:$0xff]
  %v4177 = vld [vmem:[#allocation3 + $0x40] sm:$0xff]
  %v4178 = vld [vmem:[#allocation3 + $0x48] sm:$0xff]
  %v4179 = vld [vmem:[#allocation3 + $0x50] sm:$0xff]
  %v4180 = vld [vmem:[#allocation3 + $0x58] sm:$0xff]
  %v4181 = vld [vmem:[#allocation3 + $0x60] sm:$0xff]
  %v4182 = vld [vmem:[#allocation3 + $0x68] sm:$0xff]
  %v4183 = vld [vmem:[#allocation3 + $0x70] sm:$0xff]
  %v4184 = vld [vmem:[#allocation3 + $0x78] sm:$0xff]
  %4185 = vst.msk [vmem:[#allocation4 + $0x8] sm:$0xff] %vm37, %v4171
  %4186 = vst.msk [vmem:[#allocation4 + $0x20] sm:$0xff] %vm37, %v4172
  %4187 = vst.msk [vmem:[#allocation4 + $0x38] sm:$0xff] %vm37, %v4173
  %4188 = vst.msk [vmem:[#allocation4 + $0x50] sm:$0xff] %vm37, %v4174
  %4189 = vst.msk [vmem:[#allocation4 + $0x68] sm:$0xff] %vm37, %v4175
  %4190 = vst.msk [vmem:[#allocation4 + $0x80] sm:$0xff] %vm37, %v4176
  %4191 = vst.msk [vmem:[#allocation4 + $0x98] sm:$0xff] %vm37, %v4177
  %4192 = vst.msk [vmem:[#allocation4 + $0xb0] sm:$0xff] %vm37, %v4178
  %4193 = vst.msk [vmem:[#allocation4 + $0xc8] sm:$0xff] %vm37, %v4179
  %4194 = vst.msk [vmem:[#allocation4 + $0xe0] sm:$0xff] %vm37, %v4180
  %4195 = vst.msk [vmem:[#allocation4 + $0xf8] sm:$0xff] %vm37, %v4181
  %4196 = vst.msk [vmem:[#allocation4 + $0x110] sm:$0xff] %vm37, %v4182
  %4197 = vst.msk [vmem:[#allocation4 + $0x128] sm:$0xff] %vm37, %v4183
  %4198 = vst.msk [vmem:[#allocation4 + $0x140] sm:$0xff] %vm37, %v4184
  %v4199 = vld [vmem:[#allocation3 + $0x11] sm:$0xff]
  %v4200 = vld [vmem:[#allocation3 + $0x19] sm:$0xff]
  %v4201 = vld [vmem:[#allocation3 + $0x21] sm:$0xff]
  %v4202 = vld [vmem:[#allocation3 + $0x29] sm:$0xff]
  %v4203 = vld [vmem:[#allocation3 + $0x31] sm:$0xff]
  %v4204 = vld [vmem:[#allocation3 + $0x39] sm:$0xff]
  %v4205 = vld [vmem:[#allocation3 + $0x41] sm:$0xff]
  %v4206 = vld [vmem:[#allocation3 + $0x49] sm:$0xff]
  %v4207 = vld [vmem:[#allocation3 + $0x51] sm:$0xff]
  %v4208 = vld [vmem:[#allocation3 + $0x59] sm:$0xff]
  %v4209 = vld [vmem:[#allocation3 + $0x61] sm:$0xff]
  %v4210 = vld [vmem:[#allocation3 + $0x69] sm:$0xff]
  %v4211 = vld [vmem:[#allocation3 + $0x71] sm:$0xff]
  %v4212 = vld [vmem:[#allocation3 + $0x79] sm:$0xff]
  %4227 = vrot.lane.b32.xlu0 %v4199, 32
  %v4228 = vpop.permute.xlu0 %4227
  %4229 = vrot.lane.b32.xlu0 %v4200, 32
  %v4230 = vpop.permute.xlu0 %4229
  %4231 = vrot.lane.b32.xlu0 %v4201, 32
  %v4232 = vpop.permute.xlu0 %4231
  %4233 = vrot.lane.b32.xlu0 %v4202, 32
  %v4234 = vpop.permute.xlu0 %4233
  %4235 = vrot.lane.b32.xlu0 %v4203, 32
  %v4236 = vpop.permute.xlu0 %4235
  %4237 = vrot.lane.b32.xlu0 %v4204, 32
  %v4238 = vpop.permute.xlu0 %4237
  %4239 = vrot.lane.b32.xlu0 %v4205, 32
  %v4240 = vpop.permute.xlu0 %4239
  %4241 = vrot.lane.b32.xlu0 %v4206, 32
  %v4242 = vpop.permute.xlu0 %4241
  %4243 = vrot.lane.b32.xlu0 %v4207, 32
  %v4244 = vpop.permute.xlu0 %4243
  %4245 = vrot.lane.b32.xlu0 %v4208, 32
  %v4246 = vpop.permute.xlu0 %4245
  %4247 = vrot.lane.b32.xlu0 %v4209, 32
  %v4248 = vpop.permute.xlu0 %4247
  %4249 = vrot.lane.b32.xlu0 %v4210, 32
  %v4250 = vpop.permute.xlu0 %4249
  %4251 = vrot.lane.b32.xlu0 %v4211, 32
  %v4252 = vpop.permute.xlu0 %4251
  %4253 = vrot.lane.b32.xlu0 %v4212, 32
  %v4254 = vpop.permute.xlu0 %4253
  %4269 = vst.msk [vmem:[#allocation4 + $0x8] sm:$0xff] %vm264, %v4228
  %4270 = vst.msk [vmem:[#allocation4 + $0x20] sm:$0xff] %vm264, %v4230
  %4271 = vst.msk [vmem:[#allocation4 + $0x38] sm:$0xff] %vm264, %v4232
  %4272 = vst.msk [vmem:[#allocation4 + $0x50] sm:$0xff] %vm264, %v4234
  %4273 = vst.msk [vmem:[#allocation4 + $0x68] sm:$0xff] %vm264, %v4236
  %4274 = vst.msk [vmem:[#allocation4 + $0x80] sm:$0xff] %vm264, %v4238
  %4275 = vst.msk [vmem:[#allocation4 + $0x98] sm:$0xff] %vm264, %v4240
  %4276 = vst.msk [vmem:[#allocation4 + $0xb0] sm:$0xff] %vm264, %v4242
  %4277 = vst.msk [vmem:[#allocation4 + $0xc8] sm:$0xff] %vm264, %v4244
  %4278 = vst.msk [vmem:[#allocation4 + $0xe0] sm:$0xff] %vm264, %v4246
  %4279 = vst.msk [vmem:[#allocation4 + $0xf8] sm:$0xff] %vm264, %v4248
  %4280 = vst.msk [vmem:[#allocation4 + $0x110] sm:$0xff] %vm264, %v4250
  %4281 = vst.msk [vmem:[#allocation4 + $0x128] sm:$0xff] %vm264, %v4252
  %4282 = vst.msk [vmem:[#allocation4 + $0x140] sm:$0xff] %vm264, %v4254
  %v4283 = vld [vmem:[#allocation3 + $0x17] sm:$0xff]
  %v4284 = vld [vmem:[#allocation3 + $0x1f] sm:$0xff]
  %v4285 = vld [vmem:[#allocation3 + $0x27] sm:$0xff]
  %v4286 = vld [vmem:[#allocation3 + $0x2f] sm:$0xff]
  %v4287 = vld [vmem:[#allocation3 + $0x37] sm:$0xff]
  %v4288 = vld [vmem:[#allocation3 + $0x3f] sm:$0xff]
  %v4289 = vld [vmem:[#allocation3 + $0x47] sm:$0xff]
  %v4290 = vld [vmem:[#allocation3 + $0x4f] sm:$0xff]
  %v4291 = vld [vmem:[#allocation3 + $0x57] sm:$0xff]
  %v4292 = vld [vmem:[#allocation3 + $0x5f] sm:$0xff]
  %v4293 = vld [vmem:[#allocation3 + $0x67] sm:$0xff]
  %v4294 = vld [vmem:[#allocation3 + $0x6f] sm:$0xff]
  %v4295 = vld [vmem:[#allocation3 + $0x77] sm:$0xff]
  %v4296 = vld [vmem:[#allocation3 + $0x7f] sm:$0xff]
  %4311 = vrot.lane.b32.xlu0 %v4283, 64
  %v4312 = vpop.permute.xlu0 %4311
  %4313 = vrot.lane.b32.xlu0 %v4284, 64
  %v4314 = vpop.permute.xlu0 %4313
  %4315 = vrot.lane.b32.xlu0 %v4285, 64
  %v4316 = vpop.permute.xlu0 %4315
  %4317 = vrot.lane.b32.xlu0 %v4286, 64
  %v4318 = vpop.permute.xlu0 %4317
  %4319 = vrot.lane.b32.xlu0 %v4287, 64
  %v4320 = vpop.permute.xlu0 %4319
  %4321 = vrot.lane.b32.xlu0 %v4288, 64
  %v4322 = vpop.permute.xlu0 %4321
  %4323 = vrot.lane.b32.xlu0 %v4289, 64
  %v4324 = vpop.permute.xlu0 %4323
  %4325 = vrot.lane.b32.xlu0 %v4290, 64
  %v4326 = vpop.permute.xlu0 %4325
  %4327 = vrot.lane.b32.xlu0 %v4291, 64
  %v4328 = vpop.permute.xlu0 %4327
  %4329 = vrot.lane.b32.xlu0 %v4292, 64
  %v4330 = vpop.permute.xlu0 %4329
  %4331 = vrot.lane.b32.xlu0 %v4293, 64
  %v4332 = vpop.permute.xlu0 %4331
  %4333 = vrot.lane.b32.xlu0 %v4294, 64
  %v4334 = vpop.permute.xlu0 %4333
  %4335 = vrot.lane.b32.xlu0 %v4295, 64
  %v4336 = vpop.permute.xlu0 %4335
  %4337 = vrot.lane.b32.xlu0 %v4296, 64
  %v4338 = vpop.permute.xlu0 %4337
  %4353 = vst.msk [vmem:[#allocation4 + $0x8] sm:$0xff] %vm349, %v4312
  %4354 = vst.msk [vmem:[#allocation4 + $0x20] sm:$0xff] %vm349, %v4314
  %4355 = vst.msk [vmem:[#allocation4 + $0x38] sm:$0xff] %vm349, %v4316
  %4356 = vst.msk [vmem:[#allocation4 + $0x50] sm:$0xff] %vm349, %v4318
  %4357 = vst.msk [vmem:[#allocation4 + $0x68] sm:$0xff] %vm349, %v4320
  %4358 = vst.msk [vmem:[#allocation4 + $0x80] sm:$0xff] %vm349, %v4322
  %4359 = vst.msk [vmem:[#allocation4 + $0x98] sm:$0xff] %vm349, %v4324
  %4360 = vst.msk [vmem:[#allocation4 + $0xb0] sm:$0xff] %vm349, %v4326
  %4361 = vst.msk [vmem:[#allocation4 + $0xc8] sm:$0xff] %vm349, %v4328
  %4362 = vst.msk [vmem:[#allocation4 + $0xe0] sm:$0xff] %vm349, %v4330
  %4363 = vst.msk [vmem:[#allocation4 + $0xf8] sm:$0xff] %vm349, %v4332
  %4364 = vst.msk [vmem:[#allocation4 + $0x110] sm:$0xff] %vm349, %v4334
  %4365 = vst.msk [vmem:[#allocation4 + $0x128] sm:$0xff] %vm349, %v4336
  %4366 = vst.msk [vmem:[#allocation4 + $0x140] sm:$0xff] %vm349, %v4338
  %v4367 = vld [vmem:[#allocation3 + $0x18] sm:$0xff]
  %v4368 = vld [vmem:[#allocation3 + $0x20] sm:$0xff]
  %v4369 = vld [vmem:[#allocation3 + $0x28] sm:$0xff]
  %v4370 = vld [vmem:[#allocation3 + $0x30] sm:$0xff]
  %v4371 = vld [vmem:[#allocation3 + $0x38] sm:$0xff]
  %v4372 = vld [vmem:[#allocation3 + $0x40] sm:$0xff]
  %v4373 = vld [vmem:[#allocation3 + $0x48] sm:$0xff]
  %v4374 = vld [vmem:[#allocation3 + $0x50] sm:$0xff]
  %v4375 = vld [vmem:[#allocation3 + $0x58] sm:$0xff]
  %v4376 = vld [vmem:[#allocation3 + $0x60] sm:$0xff]
  %v4377 = vld [vmem:[#allocation3 + $0x68] sm:$0xff]
  %v4378 = vld [vmem:[#allocation3 + $0x70] sm:$0xff]
  %v4379 = vld [vmem:[#allocation3 + $0x78] sm:$0xff]
  %v4380 = vld [vmem:[#allocation3 + $0x80] sm:$0xff]
  %4395 = vrot.lane.b32.xlu0 %v4367, 96
  %v4396 = vpop.permute.xlu0 %4395
  %4397 = vrot.lane.b32.xlu0 %v4368, 96
  %v4398 = vpop.permute.xlu0 %4397
  %4399 = vrot.lane.b32.xlu0 %v4369, 96
  %v4400 = vpop.permute.xlu0 %4399
  %4401 = vrot.lane.b32.xlu0 %v4370, 96
  %v4402 = vpop.permute.xlu0 %4401
  %4403 = vrot.lane.b32.xlu0 %v4371, 96
  %v4404 = vpop.permute.xlu0 %4403
  %4405 = vrot.lane.b32.xlu0 %v4372, 96
  %v4406 = vpop.permute.xlu0 %4405
  %4407 = vrot.lane.b32.xlu0 %v4373, 96
  %v4408 = vpop.permute.xlu0 %4407
  %4409 = vrot.lane.b32.xlu0 %v4374, 96
  %v4410 = vpop.permute.xlu0 %4409
  %4411 = vrot.lane.b32.xlu0 %v4375, 96
  %v4412 = vpop.permute.xlu0 %4411
  %4413 = vrot.lane.b32.xlu0 %v4376, 96
  %v4414 = vpop.permute.xlu0 %4413
  %4415 = vrot.lane.b32.xlu0 %v4377, 96
  %v4416 = vpop.permute.xlu0 %4415
  %4417 = vrot.lane.b32.xlu0 %v4378, 96
  %v4418 = vpop.permute.xlu0 %4417
  %4419 = vrot.lane.b32.xlu0 %v4379, 96
  %v4420 = vpop.permute.xlu0 %4419
  %4421 = vrot.lane.b32.xlu0 %v4380, 96
  %v4422 = vpop.permute.xlu0 %4421
  %4437 = vst.msk [vmem:[#allocation4 + $0x8] sm:$0xff] %vm434, %v4396
  %4438 = vst.msk [vmem:[#allocation4 + $0x20] sm:$0xff] %vm434, %v4398
  %4439 = vst.msk [vmem:[#allocation4 + $0x38] sm:$0xff] %vm434, %v4400
  %4440 = vst.msk [vmem:[#allocation4 + $0x50] sm:$0xff] %vm434, %v4402
  %4441 = vst.msk [vmem:[#allocation4 + $0x68] sm:$0xff] %vm434, %v4404
  %4442 = vst.msk [vmem:[#allocation4 + $0x80] sm:$0xff] %vm434, %v4406
  %4443 = vst.msk [vmem:[#allocation4 + $0x98] sm:$0xff] %vm434, %v4408
  %4444 = vst.msk [vmem:[#allocation4 + $0xb0] sm:$0xff] %vm434, %v4410
  %4445 = vst.msk [vmem:[#allocation4 + $0xc8] sm:$0xff] %vm434, %v4412
  %4446 = vst.msk [vmem:[#allocation4 + $0xe0] sm:$0xff] %vm434, %v4414
  %4447 = vst.msk [vmem:[#allocation4 + $0xf8] sm:$0xff] %vm434, %v4416
  %4448 = vst.msk [vmem:[#allocation4 + $0x110] sm:$0xff] %vm434, %v4418
  %4449 = vst.msk [vmem:[#allocation4 + $0x128] sm:$0xff] %vm434, %v4420
  %4450 = vst.msk [vmem:[#allocation4 + $0x140] sm:$0xff] %vm434, %v4422
  %v4451 = vld [vmem:[#allocation3 + $0x19] sm:$0xff]
  %v4452 = vld [vmem:[#allocation3 + $0x21] sm:$0xff]
  %v4453 = vld [vmem:[#allocation3 + $0x29] sm:$0xff]
  %v4454 = vld [vmem:[#allocation3 + $0x31] sm:$0xff]
  %v4455 = vld [vmem:[#allocation3 + $0x39] sm:$0xff]
  %v4456 = vld [vmem:[#allocation3 + $0x41] sm:$0xff]
  %v4457 = vld [vmem:[#allocation3 + $0x49] sm:$0xff]
  %v4458 = vld [vmem:[#allocation3 + $0x51] sm:$0xff]
  %v4459 = vld [vmem:[#allocation3 + $0x59] sm:$0xff]
  %v4460 = vld [vmem:[#allocation3 + $0x61] sm:$0xff]
  %v4461 = vld [vmem:[#allocation3 + $0x69] sm:$0xff]
  %v4462 = vld [vmem:[#allocation3 + $0x71] sm:$0xff]
  %v4463 = vld [vmem:[#allocation3 + $0x79] sm:$0xff]
  %v4464 = vld [vmem:[#allocation3 + $0x81] sm:$0xff]
  %4465 = vst.msk [vmem:[#allocation4 + $0x10] sm:$0xff] %vm37, %v4451
  %4466 = vst.msk [vmem:[#allocation4 + $0x28] sm:$0xff] %vm37, %v4452
  %4467 = vst.msk [vmem:[#allocation4 + $0x40] sm:$0xff] %vm37, %v4453
  %4468 = vst.msk [vmem:[#allocation4 + $0x58] sm:$0xff] %vm37, %v4454
  %4469 = vst.msk [vmem:[#allocation4 + $0x70] sm:$0xff] %vm37, %v4455
  %4470 = vst.msk [vmem:[#allocation4 + $0x88] sm:$0xff] %vm37, %v4456
  %4471 = vst.msk [vmem:[#allocation4 + $0xa0] sm:$0xff] %vm37, %v4457
  %4472 = vst.msk [vmem:[#allocation4 + $0xb8] sm:$0xff] %vm37, %v4458
  %4473 = vst.msk [vmem:[#allocation4 + $0xd0] sm:$0xff] %vm37, %v4459
  %4474 = vst.msk [vmem:[#allocation4 + $0xe8] sm:$0xff] %vm37, %v4460
  %4475 = vst.msk [vmem:[#allocation4 + $0x100] sm:$0xff] %vm37, %v4461
  %4476 = vst.msk [vmem:[#allocation4 + $0x118] sm:$0xff] %vm37, %v4462
  %4477 = vst.msk [vmem:[#allocation4 + $0x130] sm:$0xff] %vm37, %v4463
  %4478 = vst.msk [vmem:[#allocation4 + $0x148] sm:$0xff] %vm37, %v4464
  %v4479 = vld [vmem:[#allocation4] sm:$0xff]
  %v4480 = vld [vmem:[#allocation4 + $0x8] sm:$0xff]
  %v4481 = vld [vmem:[#allocation4 + $0x10] sm:$0xff]
  %v4482 = vld [vmem:[#allocation4 + $0x18] sm:$0xff]
  %v4483 = vld [vmem:[#allocation4 + $0x20] sm:$0xff]
  %v4484 = vld [vmem:[#allocation4 + $0x28] sm:$0xff]
  %v4485 = vld [vmem:[#allocation4 + $0x30] sm:$0xff]
  %v4486 = vld [vmem:[#allocation4 + $0x38] sm:$0xff]
  %v4487 = vld [vmem:[#allocation4 + $0x40] sm:$0xff]
  %v4488 = vld [vmem:[#allocation4 + $0x48] sm:$0xff]
  %v4489 = vld [vmem:[#allocation4 + $0x50] sm:$0xff]
  %v4490 = vld [vmem:[#allocation4 + $0x58] sm:$0xff]
  %v4491 = vld [vmem:[#allocation4 + $0x60] sm:$0xff]
  %v4492 = vld [vmem:[#allocation4 + $0x68] sm:$0xff]
  %v4493 = vld [vmem:[#allocation4 + $0x70] sm:$0xff]
  %v4494 = vld [vmem:[#allocation4 + $0x78] sm:$0xff]
  %v4495 = vld [vmem:[#allocation4 + $0x80] sm:$0xff]
  %v4496 = vld [vmem:[#allocation4 + $0x88] sm:$0xff]
  %v4497 = vld [vmem:[#allocation4 + $0x90] sm:$0xff]
  %v4498 = vld [vmem:[#allocation4 + $0x98] sm:$0xff]
  %v4499 = vld [vmem:[#allocation4 + $0xa0] sm:$0xff]
  %v4500 = vld [vmem:[#allocation4 + $0xa8] sm:$0xff]
  %v4501 = vld [vmem:[#allocation4 + $0xb0] sm:$0xff]
  %v4502 = vld [vmem:[#allocation4 + $0xb8] sm:$0xff]
  %v4503 = vld [vmem:[#allocation4 + $0xc0] sm:$0xff]
  %v4504 = vld [vmem:[#allocation4 + $0xc8] sm:$0xff]
  %v4505 = vld [vmem:[#allocation4 + $0xd0] sm:$0xff]
  %v4506 = vld [vmem:[#allocation4 + $0xd8] sm:$0xff]
  %v4507 = vld [vmem:[#allocation4 + $0xe0] sm:$0xff]
  %v4508 = vld [vmem:[#allocation4 + $0xe8] sm:$0xff]
  %v4509 = vld [vmem:[#allocation4 + $0xf0] sm:$0xff]
  %v4510 = vld [vmem:[#allocation4 + $0xf8] sm:$0xff]
  %v4511 = vld [vmem:[#allocation4 + $0x100] sm:$0xff]
  %v4512 = vld [vmem:[#allocation4 + $0x108] sm:$0xff]
  %v4513 = vld [vmem:[#allocation4 + $0x110] sm:$0xff]
  %v4514 = vld [vmem:[#allocation4 + $0x118] sm:$0xff]
  %v4515 = vld [vmem:[#allocation4 + $0x120] sm:$0xff]
  %v4516 = vld [vmem:[#allocation4 + $0x128] sm:$0xff]
  %v4517 = vld [vmem:[#allocation4 + $0x130] sm:$0xff]
  %v4518 = vld [vmem:[#allocation4 + $0x138] sm:$0xff]
  %v4519 = vld [vmem:[#allocation4 + $0x140] sm:$0xff]
  %v4520 = vld [vmem:[#allocation4 + $0x148] sm:$0xff]
  %v4521 = vld [vmem:[#allocation2 + $0x10] sm:$0xff]
  %v4522 = vld [vmem:[#allocation2 + $0x18] sm:$0xff]
  %v4523 = vld [vmem:[#allocation2 + $0x20] sm:$0xff]
  %v4524 = vld [vmem:[#allocation2 + $0x28] sm:$0xff]
  %v4525 = vld [vmem:[#allocation2 + $0x30] sm:$0xff]
  %v4526 = vld [vmem:[#allocation2 + $0x38] sm:$0xff]
  %v4527 = vld [vmem:[#allocation2 + $0x40] sm:$0xff]
  %v4528 = vld [vmem:[#allocation2 + $0x48] sm:$0xff]
  %v4529 = vld [vmem:[#allocation2 + $0x50] sm:$0xff]
  %v4530 = vld [vmem:[#allocation2 + $0x58] sm:$0xff]
  %v4531 = vld [vmem:[#allocation2 + $0x60] sm:$0xff]
  %v4532 = vld [vmem:[#allocation2 + $0x68] sm:$0xff]
  %v4533 = vld [vmem:[#allocation2 + $0x70] sm:$0xff]
  %v4534 = vld [vmem:[#allocation2 + $0x78] sm:$0xff]
  %v4536 = vsel %vm37, %v4481, 0
  %v4539 = vsel %vm37, %v4484, 0
  %v4542 = vsel %vm37, %v4487, 0
  %v4545 = vsel %vm37, %v4490, 0
  %v4548 = vsel %vm37, %v4493, 0
  %v4551 = vsel %vm37, %v4496, 0
  %v4554 = vsel %vm37, %v4499, 0
  %v4557 = vsel %vm37, %v4502, 0
  %v4560 = vsel %vm37, %v4505, 0
  %v4563 = vsel %vm37, %v4508, 0
  %v4566 = vsel %vm37, %v4511, 0
  %v4569 = vsel %vm37, %v4514, 0
  %v4572 = vsel %vm37, %v4517, 0
  %v4575 = vsel %vm37, %v4520, 0
  %4577 = vmatpush.msra.mxu0 %v2979
  %4578 = vmatpush.msra.mxu0 %v2978
  %4579 = vmatpush.msra.mxu0 %v2977
  %4580 = vmatpush.msra.mxu0 %v2976
  %4581 = vmatpush.msra.mxu0 %v2975
  %4582 = vmatpush.msra.mxu0 %v2974
  %4583 = vmatpush.msra.mxu0 %v2973
  %4584 = vmatpush.msra.mxu0 %v2972
  %4585 = vmatpush.msra.mxu0 %v2971
  %4586 = vmatpush.msra.mxu0 %v2970
  %4587 = vmatpush.msra.mxu0 %v2969
  %4588 = vmatpush.msra.mxu0 %v2968
  %4589 = vmatpush.msra.mxu0 %v2967
  %4590 = vmatpush.msra.mxu0 %v2966
  %4591 = vmatpush.msra.mxu0 %v2965
  %4592 = vmatpush.msra.mxu0 %v2964
  %4593 = vmatmul.f32.gmra.mxu0 %v4479
  %v4594 = vpop.f32.mrf.mxu0
  %v4595 = vadd.f32 %v4521, %v4594
  %4596 = vmatmul.f32.gmra.mxu0 %v4482
  %v4597 = vpop.f32.mrf.mxu0
  %v4598 = vadd.f32 %v4522, %v4597
  %4599 = vmatmul.f32.gmra.mxu0 %v4485
  %v4600 = vpop.f32.mrf.mxu0
  %v4601 = vadd.f32 %v4523, %v4600
  %4602 = vmatmul.f32.gmra.mxu0 %v4488
  %v4603 = vpop.f32.mrf.mxu0
  %v4604 = vadd.f32 %v4524, %v4603
  %4605 = vmatmul.f32.gmra.mxu0 %v4491
  %v4606 = vpop.f32.mrf.mxu0
  %v4607 = vadd.f32 %v4525, %v4606
  %4608 = vmatmul.f32.gmra.mxu0 %v4494
  %v4609 = vpop.f32.mrf.mxu0
  %v4610 = vadd.f32 %v4526, %v4609
  %4611 = vmatmul.f32.gmra.mxu0 %v4497
  %v4612 = vpop.f32.mrf.mxu0
  %v4613 = vadd.f32 %v4527, %v4612
  %4614 = vmatmul.f32.gmra.mxu0 %v4500
  %v4615 = vpop.f32.mrf.mxu0
  %v4616 = vadd.f32 %v4528, %v4615
  %4617 = vmatmul.f32.gmra.mxu0 %v4503
  %v4618 = vpop.f32.mrf.mxu0
  %v4619 = vadd.f32 %v4529, %v4618
  %4620 = vmatmul.f32.gmra.mxu0 %v4506
  %v4621 = vpop.f32.mrf.mxu0
  %v4622 = vadd.f32 %v4530, %v4621
  %4623 = vmatmul.f32.gmra.mxu0 %v4509
  %v4624 = vpop.f32.mrf.mxu0
  %v4625 = vadd.f32 %v4531, %v4624
  %4626 = vmatmul.f32.gmra.mxu0 %v4512
  %v4627 = vpop.f32.mrf.mxu0
  %v4628 = vadd.f32 %v4532, %v4627
  %4629 = vmatmul.f32.gmra.mxu0 %v4515
  %v4630 = vpop.f32.mrf.mxu0
  %v4631 = vadd.f32 %v4533, %v4630
  %4632 = vmatmul.f32.gmra.mxu0 %v4518
  %v4633 = vpop.f32.mrf.mxu0
  %v4634 = vadd.f32 %v4534, %v4633
  %4635 = vdwg.mxu0
  %4636 = vmatpush.msra.mxu0 %v2995
  %4637 = vmatpush.msra.mxu0 %v2994
  %4638 = vmatpush.msra.mxu0 %v2993
  %4639 = vmatpush.msra.mxu0 %v2992
  %4640 = vmatpush.msra.mxu0 %v2991
  %4641 = vmatpush.msra.mxu0 %v2990
  %4642 = vmatpush.msra.mxu0 %v2989
  %4643 = vmatpush.msra.mxu0 %v2988
  %4644 = vmatpush.msra.mxu0 %v2987
  %4645 = vmatpush.msra.mxu0 %v2986
  %4646 = vmatpush.msra.mxu0 %v2985
  %4647 = vmatpush.msra.mxu0 %v2984
  %4648 = vmatpush.msra.mxu0 %v2983
  %4649 = vmatpush.msra.mxu0 %v2982
  %4650 = vmatpush.msra.mxu0 %v2981
  %4651 = vmatpush.msra.mxu0 %v2980
  %4652 = vmatmul.f32.gmra.mxu0 %v4480
  %v4653 = vpop.f32.mrf.mxu0
  %v4654 = vadd.f32 %v4595, %v4653
  %4655 = vmatmul.f32.gmra.mxu0 %v4483
  %v4656 = vpop.f32.mrf.mxu0
  %v4657 = vadd.f32 %v4598, %v4656
  %4658 = vmatmul.f32.gmra.mxu0 %v4486
  %v4659 = vpop.f32.mrf.mxu0
  %v4660 = vadd.f32 %v4601, %v4659
  %4661 = vmatmul.f32.gmra.mxu0 %v4489
  %v4662 = vpop.f32.mrf.mxu0
  %v4663 = vadd.f32 %v4604, %v4662
  %4664 = vmatmul.f32.gmra.mxu0 %v4492
  %v4665 = vpop.f32.mrf.mxu0
  %v4666 = vadd.f32 %v4607, %v4665
  %4667 = vmatmul.f32.gmra.mxu0 %v4495
  %v4668 = vpop.f32.mrf.mxu0
  %v4669 = vadd.f32 %v4610, %v4668
  %4670 = vmatmul.f32.gmra.mxu0 %v4498
  %v4671 = vpop.f32.mrf.mxu0
  %v4672 = vadd.f32 %v4613, %v4671
  %4673 = vmatmul.f32.gmra.mxu0 %v4501
  %v4674 = vpop.f32.mrf.mxu0
  %v4675 = vadd.f32 %v4616, %v4674
  %4676 = vmatmul.f32.gmra.mxu0 %v4504
  %v4677 = vpop.f32.mrf.mxu0
  %v4678 = vadd.f32 %v4619, %v4677
  %4679 = vmatmul.f32.gmra.mxu0 %v4507
  %v4680 = vpop.f32.mrf.mxu0
  %v4681 = vadd.f32 %v4622, %v4680
  %4682 = vmatmul.f32.gmra.mxu0 %v4510
  %v4683 = vpop.f32.mrf.mxu0
  %v4684 = vadd.f32 %v4625, %v4683
  %4685 = vmatmul.f32.gmra.mxu0 %v4513
  %v4686 = vpop.f32.mrf.mxu0
  %v4687 = vadd.f32 %v4628, %v4686
  %4688 = vmatmul.f32.gmra.mxu0 %v4516
  %v4689 = vpop.f32.mrf.mxu0
  %v4690 = vadd.f32 %v4631, %v4689
  %4691 = vmatmul.f32.gmra.mxu0 %v4519
  %v4692 = vpop.f32.mrf.mxu0
  %v4693 = vadd.f32 %v4634, %v4692
  %4694 = vdwg.mxu0
  %4695 = vmatpush.msra.mxu0 0.0
  %4696 = vmatpush.msra.mxu0 0.0
  %4697 = vmatpush.msra.mxu0 0.0
  %4698 = vmatpush.msra.mxu0 0.0
  %4699 = vmatpush.msra.mxu0 0.0
  %4700 = vmatpush.msra.mxu0 0.0
  %4701 = vmatpush.msra.mxu0 0.0
  %4702 = vmatpush.msra.mxu0 0.0
  %4703 = vmatpush.msra.mxu0 0.0
  %4704 = vmatpush.msra.mxu0 0.0
  %4705 = vmatpush.msra.mxu0 0.0
  %4706 = vmatpush.msra.mxu0 0.0
  %4707 = vmatpush.msra.mxu0 %v2999
  %4708 = vmatpush.msra.mxu0 %v2998
  %4709 = vmatpush.msra.mxu0 %v2997
  %4710 = vmatpush.msra.mxu0 %v2996
  %4711 = vmatmul.f32.gmra.mxu0 %v4536
  %v4712 = vpop.f32.mrf.mxu0
  %v4713 = vadd.f32 %v4654, %v4712
  %4714 = vmatmul.f32.gmra.mxu0 %v4539
  %v4715 = vpop.f32.mrf.mxu0
  %v4716 = vadd.f32 %v4657, %v4715
  %4717 = vmatmul.f32.gmra.mxu0 %v4542
  %v4718 = vpop.f32.mrf.mxu0
  %v4719 = vadd.f32 %v4660, %v4718
  %4720 = vmatmul.f32.gmra.mxu0 %v4545
  %v4721 = vpop.f32.mrf.mxu0
  %v4722 = vadd.f32 %v4663, %v4721
  %4723 = vmatmul.f32.gmra.mxu0 %v4548
  %v4724 = vpop.f32.mrf.mxu0
  %v4725 = vadd.f32 %v4666, %v4724
  %4726 = vmatmul.f32.gmra.mxu0 %v4551
  %v4727 = vpop.f32.mrf.mxu0
  %v4728 = vadd.f32 %v4669, %v4727
  %4729 = vmatmul.f32.gmra.mxu0 %v4554
  %v4730 = vpop.f32.mrf.mxu0
  %v4731 = vadd.f32 %v4672, %v4730
  %4732 = vmatmul.f32.gmra.mxu0 %v4557
  %v4733 = vpop.f32.mrf.mxu0
  %v4734 = vadd.f32 %v4675, %v4733
  %4735 = vmatmul.f32.gmra.mxu0 %v4560
  %v4736 = vpop.f32.mrf.mxu0
  %v4737 = vadd.f32 %v4678, %v4736
  %4738 = vmatmul.f32.gmra.mxu0 %v4563
  %v4739 = vpop.f32.mrf.mxu0
  %v4740 = vadd.f32 %v4681, %v4739
  %4741 = vmatmul.f32.gmra.mxu0 %v4566
  %v4742 = vpop.f32.mrf.mxu0
  %v4743 = vadd.f32 %v4684, %v4742
  %4744 = vmatmul.f32.gmra.mxu0 %v4569
  %v4745 = vpop.f32.mrf.mxu0
  %v4746 = vadd.f32 %v4687, %v4745
  %4747 = vmatmul.f32.gmra.mxu0 %v4572
  %v4748 = vpop.f32.mrf.mxu0
  %v4749 = vadd.f32 %v4690, %v4748
  %4750 = vmatmul.f32.gmra.mxu0 %v4575
  %v4751 = vpop.f32.mrf.mxu0
  %v4752 = vadd.f32 %v4693, %v4751
  %4753 = vdwg.mxu0
  %v4754 = vmax.f32 %v4713, 0.0
  %v4755 = vmax.f32 %v4716, 0.0
  %v4756 = vmax.f32 %v4719, 0.0
  %v4757 = vmax.f32 %v4722, 0.0
  %v4758 = vmax.f32 %v4725, 0.0
  %v4759 = vmax.f32 %v4728, 0.0
  %v4760 = vmax.f32 %v4731, 0.0
  %v4761 = vmax.f32 %v4734, 0.0
  %v4762 = vmax.f32 %v4737, 0.0
  %v4763 = vmax.f32 %v4740, 0.0
  %v4764 = vmax.f32 %v4743, 0.0
  %v4765 = vmax.f32 %v4746, 0.0
  %v4766 = vmax.f32 %v4749, 0.0
  %v4767 = vmax.f32 %v4752, 0.0
  %v4768 = vmul.f32 %v4754, %v63
  %v4769 = vmul.f32 %v4755, %v68
  %v4770 = vmul.f32 %v4756, %v73
  %v4771 = vmul.f32 %v4757, %v78
  %v4772 = vmul.f32 %v4758, %v83
  %v4773 = vmul.f32 %v4759, %v88
  %v4774 = vmul.f32 %v4760, %v93
  %v4775 = vmul.f32 %v4761, %v98
  %v4776 = vmul.f32 %v4762, %v103
  %v4777 = vmul.f32 %v4763, %v108
  %v4778 = vmul.f32 %v4764, %v113
  %v4779 = vmul.f32 %v4765, %v118
  %v4780 = vmul.f32 %v4766, %v123
  %v4781 = vmul.f32 %v4767, %v128
  %4782 = vst.msk [vmem:[#allocation2 + $0x10] sm:$0xff] %vm37, %v4768
  %4783 = vst.msk [vmem:[#allocation2 + $0x18] sm:$0xff] %vm37, %v4769
  %4784 = vst.msk [vmem:[#allocation2 + $0x20] sm:$0xff] %vm37, %v4770
  %4785 = vst.msk [vmem:[#allocation2 + $0x28] sm:$0xff] %vm37, %v4771
  %4786 = vst.msk [vmem:[#allocation2 + $0x30] sm:$0xff] %vm37, %v4772
  %4787 = vst.msk [vmem:[#allocation2 + $0x38] sm:$0xff] %vm37, %v4773
  %4788 = vst.msk [vmem:[#allocation2 + $0x40] sm:$0xff] %vm37, %v4774
  %4789 = vst.msk [vmem:[#allocation2 + $0x48] sm:$0xff] %vm37, %v4775
  %4790 = vst.msk [vmem:[#allocation2 + $0x50] sm:$0xff] %vm37, %v4776
  %4791 = vst.msk [vmem:[#allocation2 + $0x58] sm:$0xff] %vm37, %v4777
  %4792 = vst.msk [vmem:[#allocation2 + $0x60] sm:$0xff] %vm37, %v4778
  %4793 = vst.msk [vmem:[#allocation2 + $0x68] sm:$0xff] %vm37, %v4779
  %4794 = vst.msk [vmem:[#allocation2 + $0x70] sm:$0xff] %vm37, %v4780
  %4795 = vst.msk [vmem:[#allocation2 + $0x78] sm:$0xff] %vm37, %v4781
  %v4796 = vld [vmem:[#allocation2 + $0x10] sm:$0xff]
  %v4797 = vld [vmem:[#allocation2 + $0x18] sm:$0xff]
  %v4798 = vld [vmem:[#allocation2 + $0x20] sm:$0xff]
  %v4799 = vld [vmem:[#allocation2 + $0x28] sm:$0xff]
  %v4800 = vld [vmem:[#allocation2 + $0x30] sm:$0xff]
  %v4801 = vld [vmem:[#allocation2 + $0x38] sm:$0xff]
  %v4802 = vld [vmem:[#allocation2 + $0x40] sm:$0xff]
  %v4803 = vld [vmem:[#allocation2 + $0x48] sm:$0xff]
  %v4804 = vld [vmem:[#allocation2 + $0x50] sm:$0xff]
  %v4805 = vld [vmem:[#allocation2 + $0x58] sm:$0xff]
  %v4806 = vld [vmem:[#allocation2 + $0x60] sm:$0xff]
  %v4807 = vld [vmem:[#allocation2 + $0x68] sm:$0xff]
  %v4808 = vld [vmem:[#allocation2 + $0x70] sm:$0xff]
  %v4809 = vld [vmem:[#allocation2 + $0x78] sm:$0xff]
  %v4810 = vld [vmem:[%s4] sm:$0xff]
  %v4811 = vld [vmem:[%s4 + $0x8] sm:$0xff]
  %v4812 = vld [vmem:[%s4 + $0x10] sm:$0xff]
  %v4813 = vld [vmem:[%s4 + $0x18] sm:$0xff]
  %v4815 = vsel %vm37, %v4796, 0
  %v4818 = vsel %vm37, %v4797, 0
  %v4821 = vsel %vm37, %v4798, 0
  %v4824 = vsel %vm37, %v4799, 0
  %v4827 = vsel %vm37, %v4800, 0
  %v4830 = vsel %vm37, %v4801, 0
  %v4833 = vsel %vm37, %v4802, 0
  %v4836 = vsel %vm37, %v4803, 0
  %v4839 = vsel %vm37, %v4804, 0
  %v4842 = vsel %vm37, %v4805, 0
  %v4845 = vsel %vm37, %v4806, 0
  %v4848 = vsel %vm37, %v4807, 0
  %v4851 = vsel %vm37, %v4808, 0
  %v4854 = vsel %vm37, %v4809, 0
  %4856 = vmatpush.msra.mxu0 0.0
  %4857 = vmatpush.msra.mxu0 0.0
  %4858 = vmatpush.msra.mxu0 0.0
  %4859 = vmatpush.msra.mxu0 0.0
  %4860 = vmatpush.msra.mxu0 0.0
  %4861 = vmatpush.msra.mxu0 0.0
  %4862 = vmatpush.msra.mxu0 0.0
  %4863 = vmatpush.msra.mxu0 0.0
  %4864 = vmatpush.msra.mxu0 0.0
  %4865 = vmatpush.msra.mxu0 0.0
  %4866 = vmatpush.msra.mxu0 0.0
  %4867 = vmatpush.msra.mxu0 0.0
  %4868 = vmatpush.msra.mxu0 %v4813
  %4869 = vmatpush.msra.mxu0 %v4812
  %4870 = vmatpush.msra.mxu0 %v4811
  %4871 = vmatpush.msra.mxu0 %v4810
  %4872 = vmatmul.f32.gmra.mxu0 %v4815
  %v4873 = vpop.f32.mrf.mxu0
  %v4874 = vadd.f32 0.0, %v4873
  %4875 = vmatmul.f32.gmra.mxu0 %v4818
  %v4876 = vpop.f32.mrf.mxu0
  %v4877 = vadd.f32 0.0, %v4876
  %4878 = vmatmul.f32.gmra.mxu0 %v4821
  %v4879 = vpop.f32.mrf.mxu0
  %v4880 = vadd.f32 0.0, %v4879
  %4881 = vmatmul.f32.gmra.mxu0 %v4824
  %v4882 = vpop.f32.mrf.mxu0
  %v4883 = vadd.f32 0.0, %v4882
  %4884 = vmatmul.f32.gmra.mxu0 %v4827
  %v4885 = vpop.f32.mrf.mxu0
  %v4886 = vadd.f32 0.0, %v4885
  %4887 = vmatmul.f32.gmra.mxu0 %v4830
  %v4888 = vpop.f32.mrf.mxu0
  %v4889 = vadd.f32 0.0, %v4888
  %4890 = vmatmul.f32.gmra.mxu0 %v4833
  %v4891 = vpop.f32.mrf.mxu0
  %v4892 = vadd.f32 0.0, %v4891
  %4893 = vmatmul.f32.gmra.mxu0 %v4836
  %v4894 = vpop.f32.mrf.mxu0
  %v4895 = vadd.f32 0.0, %v4894
  %4896 = vmatmul.f32.gmra.mxu0 %v4839
  %v4897 = vpop.f32.mrf.mxu0
  %v4898 = vadd.f32 0.0, %v4897
  %4899 = vmatmul.f32.gmra.mxu0 %v4842
  %v4900 = vpop.f32.mrf.mxu0
  %v4901 = vadd.f32 0.0, %v4900
  %4902 = vmatmul.f32.gmra.mxu0 %v4845
  %v4903 = vpop.f32.mrf.mxu0
  %v4904 = vadd.f32 0.0, %v4903
  %4905 = vmatmul.f32.gmra.mxu0 %v4848
  %v4906 = vpop.f32.mrf.mxu0
  %v4907 = vadd.f32 0.0, %v4906
  %4908 = vmatmul.f32.gmra.mxu0 %v4851
  %v4909 = vpop.f32.mrf.mxu0
  %v4910 = vadd.f32 0.0, %v4909
  %4911 = vmatmul.f32.gmra.mxu0 %v4854
  %v4912 = vpop.f32.mrf.mxu0
  %v4913 = vadd.f32 0.0, %v4912
  %4914 = vdwg.mxu0
  %v4915 = vmax.f32 %v4874, 0.0
  %v4916 = vmax.f32 %v4877, 0.0
  %v4917 = vmax.f32 %v4880, 0.0
  %v4918 = vmax.f32 %v4883, 0.0
  %v4919 = vmax.f32 %v4886, 0.0
  %v4920 = vmax.f32 %v4889, 0.0
  %v4921 = vmax.f32 %v4892, 0.0
  %v4922 = vmax.f32 %v4895, 0.0
  %v4923 = vmax.f32 %v4898, 0.0
  %v4924 = vmax.f32 %v4901, 0.0
  %v4925 = vmax.f32 %v4904, 0.0
  %v4926 = vmax.f32 %v4907, 0.0
  %v4927 = vmax.f32 %v4910, 0.0
  %v4928 = vmax.f32 %v4913, 0.0
  %v4929 = vld [vmem:[%s5] sm:$0xff]
  %v4930 = vld [vmem:[%s5 + $0x8] sm:$0xff]
  %v4931 = vld [vmem:[%s5 + $0x10] sm:$0xff]
  %v4932 = vld [vmem:[%s5 + $0x18] sm:$0xff]
  %v4933 = vld [vmem:[%s5 + $0x20] sm:$0xff]
  %v4934 = vld [vmem:[%s5 + $0x28] sm:$0xff]
  %v4935 = vld [vmem:[%s5 + $0x30] sm:$0xff]
  %4937 = vset.pattern.permute.xlu0 0
  %4938 = vperm.xlu0 %4937, %v4915
  %v4939 = vpop.permute.xlu0 %4938
  %4942 = vset.pattern.permute.xlu0 0
  %4943 = vperm.xlu0 %4942, %v4916
  %v4944 = vpop.permute.xlu0 %4943
  %4947 = vset.pattern.permute.xlu0 0
  %4948 = vperm.xlu0 %4947, %v4917
  %v4949 = vpop.permute.xlu0 %4948
  %4952 = vset.pattern.permute.xlu0 0
  %4953 = vperm.xlu0 %4952, %v4918
  %v4954 = vpop.permute.xlu0 %4953
  %4957 = vset.pattern.permute.xlu0 0
  %4958 = vperm.xlu0 %4957, %v4919
  %v4959 = vpop.permute.xlu0 %4958
  %4962 = vset.pattern.permute.xlu0 0
  %4963 = vperm.xlu0 %4962, %v4920
  %v4964 = vpop.permute.xlu0 %4963
  %4967 = vset.pattern.permute.xlu0 0
  %4968 = vperm.xlu0 %4967, %v4921
  %v4969 = vpop.permute.xlu0 %4968
  %v4971 = vmul.f32 %v4939, %v4929
  %v4972 = vmul.f32 %v4944, %v4930
  %v4973 = vmul.f32 %v4949, %v4931
  %v4974 = vmul.f32 %v4954, %v4932
  %v4975 = vmul.f32 %v4959, %v4933
  %v4976 = vmul.f32 %v4964, %v4934
  %v4977 = vmul.f32 %v4969, %v4935
  %v4978 = vadd.f32 %v4971, 0.0
  %v4979 = vadd.f32 %v4972, 0.0
  %v4980 = vadd.f32 %v4973, 0.0
  %v4981 = vadd.f32 %v4974, 0.0
  %v4982 = vadd.f32 %v4975, 0.0
  %v4983 = vadd.f32 %v4976, 0.0
  %v4984 = vadd.f32 %v4977, 0.0
  %v4985 = vld [vmem:[%s5 + $0x38] sm:$0xff]
  %v4986 = vld [vmem:[%s5 + $0x40] sm:$0xff]
  %v4987 = vld [vmem:[%s5 + $0x48] sm:$0xff]
  %v4988 = vld [vmem:[%s5 + $0x50] sm:$0xff]
  %v4989 = vld [vmem:[%s5 + $0x58] sm:$0xff]
  %v4990 = vld [vmem:[%s5 + $0x60] sm:$0xff]
  %v4991 = vld [vmem:[%s5 + $0x68] sm:$0xff]
  %4992 = vset.pattern.permute.xlu0 1
  %4993 = vperm.xlu0 %4992, %v4915
  %v4994 = vpop.permute.xlu0 %4993
  %4996 = vset.pattern.permute.xlu0 1
  %4997 = vperm.xlu0 %4996, %v4916
  %v4998 = vpop.permute.xlu0 %4997
  %5000 = vset.pattern.permute.xlu0 1
  %5001 = vperm.xlu0 %5000, %v4917
  %v5002 = vpop.permute.xlu0 %5001
  %5004 = vset.pattern.permute.xlu0 1
  %5005 = vperm.xlu0 %5004, %v4918
  %v5006 = vpop.permute.xlu0 %5005
  %5008 = vset.pattern.permute.xlu0 1
  %5009 = vperm.xlu0 %5008, %v4919
  %v5010 = vpop.permute.xlu0 %5009
  %5012 = vset.pattern.permute.xlu0 1
  %5013 = vperm.xlu0 %5012, %v4920
  %v5014 = vpop.permute.xlu0 %5013
  %5016 = vset.pattern.permute.xlu0 1
  %5017 = vperm.xlu0 %5016, %v4921
  %v5018 = vpop.permute.xlu0 %5017
  %v5020 = vmul.f32 %v4994, %v4985
  %v5021 = vmul.f32 %v4998, %v4986
  %v5022 = vmul.f32 %v5002, %v4987
  %v5023 = vmul.f32 %v5006, %v4988
  %v5024 = vmul.f32 %v5010, %v4989
  %v5025 = vmul.f32 %v5014, %v4990
  %v5026 = vmul.f32 %v5018, %v4991
  %v5027 = vadd.f32 %v4978, %v5020
  %v5028 = vadd.f32 %v4979, %v5021
  %v5029 = vadd.f32 %v4980, %v5022
  %v5030 = vadd.f32 %v4981, %v5023
  %v5031 = vadd.f32 %v4982, %v5024
  %v5032 = vadd.f32 %v4983, %v5025
  %v5033 = vadd.f32 %v4984, %v5026
  %v5034 = vld [vmem:[%s5 + $0x70] sm:$0xff]
  %v5035 = vld [vmem:[%s5 + $0x78] sm:$0xff]
  %v5036 = vld [vmem:[%s5 + $0x80] sm:$0xff]
  %v5037 = vld [vmem:[%s5 + $0x88] sm:$0xff]
  %v5038 = vld [vmem:[%s5 + $0x90] sm:$0xff]
  %v5039 = vld [vmem:[%s5 + $0x98] sm:$0xff]
  %v5040 = vld [vmem:[%s5 + $0xa0] sm:$0xff]
  %5041 = vset.pattern.permute.xlu0 2
  %5042 = vperm.xlu0 %5041, %v4915
  %v5043 = vpop.permute.xlu0 %5042
  %5045 = vset.pattern.permute.xlu0 2
  %5046 = vperm.xlu0 %5045, %v4916
  %v5047 = vpop.permute.xlu0 %5046
  %5049 = vset.pattern.permute.xlu0 2
  %5050 = vperm.xlu0 %5049, %v4917
  %v5051 = vpop.permute.xlu0 %5050
  %5053 = vset.pattern.permute.xlu0 2
  %5054 = vperm.xlu0 %5053, %v4918
  %v5055 = vpop.permute.xlu0 %5054
  %5057 = vset.pattern.permute.xlu0 2
  %5058 = vperm.xlu0 %5057, %v4919
  %v5059 = vpop.permute.xlu0 %5058
  %5061 = vset.pattern.permute.xlu0 2
  %5062 = vperm.xlu0 %5061, %v4920
  %v5063 = vpop.permute.xlu0 %5062
  %5065 = vset.pattern.permute.xlu0 2
  %5066 = vperm.xlu0 %5065, %v4921
  %v5067 = vpop.permute.xlu0 %5066
  %v5069 = vmul.f32 %v5043, %v5034
  %v5070 = vmul.f32 %v5047, %v5035
  %v5071 = vmul.f32 %v5051, %v5036
  %v5072 = vmul.f32 %v5055, %v5037
  %v5073 = vmul.f32 %v5059, %v5038
  %v5074 = vmul.f32 %v5063, %v5039
  %v5075 = vmul.f32 %v5067, %v5040
  %v5076 = vadd.f32 %v5027, %v5069
  %v5077 = vadd.f32 %v5028, %v5070
  %v5078 = vadd.f32 %v5029, %v5071
  %v5079 = vadd.f32 %v5030, %v5072
  %v5080 = vadd.f32 %v5031, %v5073
  %v5081 = vadd.f32 %v5032, %v5074
  %v5082 = vadd.f32 %v5033, %v5075
  %v5083 = vld [vmem:[%s5 + $0xa8] sm:$0xff]
  %v5084 = vld [vmem:[%s5 + $0xb0] sm:$0xff]
  %v5085 = vld [vmem:[%s5 + $0xb8] sm:$0xff]
  %v5086 = vld [vmem:[%s5 + $0xc0] sm:$0xff]
  %v5087 = vld [vmem:[%s5 + $0xc8] sm:$0xff]
  %v5088 = vld [vmem:[%s5 + $0xd0] sm:$0xff]
  %v5089 = vld [vmem:[%s5 + $0xd8] sm:$0xff]
  %5090 = vset.pattern.permute.xlu0 3
  %5091 = vperm.xlu0 %5090, %v4915
  %v5092 = vpop.permute.xlu0 %5091
  %5094 = vset.pattern.permute.xlu0 3
  %5095 = vperm.xlu0 %5094, %v4916
  %v5096 = vpop.permute.xlu0 %5095
  %5098 = vset.pattern.permute.xlu0 3
  %5099 = vperm.xlu0 %5098, %v4917
  %v5100 = vpop.permute.xlu0 %5099
  %5102 = vset.pattern.permute.xlu0 3
  %5103 = vperm.xlu0 %5102, %v4918
  %v5104 = vpop.permute.xlu0 %5103
  %5106 = vset.pattern.permute.xlu0 3
  %5107 = vperm.xlu0 %5106, %v4919
  %v5108 = vpop.permute.xlu0 %5107
  %5110 = vset.pattern.permute.xlu0 3
  %5111 = vperm.xlu0 %5110, %v4920
  %v5112 = vpop.permute.xlu0 %5111
  %5114 = vset.pattern.permute.xlu0 3
  %5115 = vperm.xlu0 %5114, %v4921
  %v5116 = vpop.permute.xlu0 %5115
  %v5118 = vmul.f32 %v5092, %v5083
  %v5119 = vmul.f32 %v5096, %v5084
  %v5120 = vmul.f32 %v5100, %v5085
  %v5121 = vmul.f32 %v5104, %v5086
  %v5122 = vmul.f32 %v5108, %v5087
  %v5123 = vmul.f32 %v5112, %v5088
  %v5124 = vmul.f32 %v5116, %v5089
  %v5125 = vadd.f32 %v5076, %v5118
  %v5126 = vadd.f32 %v5077, %v5119
  %v5127 = vadd.f32 %v5078, %v5120
  %v5128 = vadd.f32 %v5079, %v5121
  %v5129 = vadd.f32 %v5080, %v5122
  %v5130 = vadd.f32 %v5081, %v5123
  %v5131 = vadd.f32 %v5082, %v5124
  %v5132 = vld [vmem:[%s5 + $0xe0] sm:$0xff]
  %v5133 = vld [vmem:[%s5 + $0xe8] sm:$0xff]
  %v5134 = vld [vmem:[%s5 + $0xf0] sm:$0xff]
  %v5135 = vld [vmem:[%s5 + $0xf8] sm:$0xff]
  %v5136 = vld [vmem:[%s5 + $0x100] sm:$0xff]
  %v5137 = vld [vmem:[%s5 + $0x108] sm:$0xff]
  %v5138 = vld [vmem:[%s5 + $0x110] sm:$0xff]
  %5139 = vset.pattern.permute.xlu0 4
  %5140 = vperm.xlu0 %5139, %v4915
  %v5141 = vpop.permute.xlu0 %5140
  %5143 = vset.pattern.permute.xlu0 4
  %5144 = vperm.xlu0 %5143, %v4916
  %v5145 = vpop.permute.xlu0 %5144
  %5147 = vset.pattern.permute.xlu0 4
  %5148 = vperm.xlu0 %5147, %v4917
  %v5149 = vpop.permute.xlu0 %5148
  %5151 = vset.pattern.permute.xlu0 4
  %5152 = vperm.xlu0 %5151, %v4918
  %v5153 = vpop.permute.xlu0 %5152
  %5155 = vset.pattern.permute.xlu0 4
  %5156 = vperm.xlu0 %5155, %v4919
  %v5157 = vpop.permute.xlu0 %5156
  %5159 = vset.pattern.permute.xlu0 4
  %5160 = vperm.xlu0 %5159, %v4920
  %v5161 = vpop.permute.xlu0 %5160
  %5163 = vset.pattern.permute.xlu0 4
  %5164 = vperm.xlu0 %5163, %v4921
  %v5165 = vpop.permute.xlu0 %5164
  %v5167 = vmul.f32 %v5141, %v5132
  %v5168 = vmul.f32 %v5145, %v5133
  %v5169 = vmul.f32 %v5149, %v5134
  %v5170 = vmul.f32 %v5153, %v5135
  %v5171 = vmul.f32 %v5157, %v5136
  %v5172 = vmul.f32 %v5161, %v5137
  %v5173 = vmul.f32 %v5165, %v5138
  %v5174 = vadd.f32 %v5125, %v5167
  %v5175 = vadd.f32 %v5126, %v5168
  %v5176 = vadd.f32 %v5127, %v5169
  %v5177 = vadd.f32 %v5128, %v5170
  %v5178 = vadd.f32 %v5129, %v5171
  %v5179 = vadd.f32 %v5130, %v5172
  %v5180 = vadd.f32 %v5131, %v5173
  %vm5181 = vcmask 392192
  %v5182 = vsel %vm5181, %v5174, 0.0
  %v5183 = vsel %vm5181, %v5175, 0.0
  %v5184 = vadd.f32 %v5182, %v5183
  %v5185 = vsel %vm5181, %v5176, 0.0
  %v5186 = vadd.f32 %v5184, %v5185
  %v5187 = vsel %vm5181, %v5177, 0.0
  %v5188 = vadd.f32 %v5186, %v5187
  %v5189 = vsel %vm5181, %v5178, 0.0
  %v5190 = vadd.f32 %v5188, %v5189
  %v5191 = vsel %vm5181, %v5179, 0.0
  %v5192 = vadd.f32 %v5190, %v5191
  %v5193 = vsel %vm5181, %v5180, 0.0
  %v5194 = vadd.f32 %v5192, %v5193
  %v5195 = vrot.slane %v5194, 4
  %v5196 = vadd.f32 %v5194, %v5195
  %v5197 = vrot.slane %v5196, 2
  %v5198 = vadd.f32 %v5196, %v5197
  %v5199 = vrot.slane %v5198, 1
  %v5200 = vadd.f32 %v5198, %v5199
  %5202 = vset.pattern.permute.xlu0 0
  %5203 = vperm.xlu0 %5202, %v4922
  %v5204 = vpop.permute.xlu0 %5203
  %5207 = vset.pattern.permute.xlu0 0
  %5208 = vperm.xlu0 %5207, %v4923
  %v5209 = vpop.permute.xlu0 %5208
  %5212 = vset.pattern.permute.xlu0 0
  %5213 = vperm.xlu0 %5212, %v4924
  %v5214 = vpop.permute.xlu0 %5213
  %5217 = vset.pattern.permute.xlu0 0
  %5218 = vperm.xlu0 %5217, %v4925
  %v5219 = vpop.permute.xlu0 %5218
  %5222 = vset.pattern.permute.xlu0 0
  %5223 = vperm.xlu0 %5222, %v4926
  %v5224 = vpop.permute.xlu0 %5223
  %5227 = vset.pattern.permute.xlu0 0
  %5228 = vperm.xlu0 %5227, %v4927
  %v5229 = vpop.permute.xlu0 %5228
  %5232 = vset.pattern.permute.xlu0 0
  %5233 = vperm.xlu0 %5232, %v4928
  %v5234 = vpop.permute.xlu0 %5233
  %v5236 = vmul.f32 %v5204, %v4929
  %v5237 = vmul.f32 %v5209, %v4930
  %v5238 = vmul.f32 %v5214, %v4931
  %v5239 = vmul.f32 %v5219, %v4932
  %v5240 = vmul.f32 %v5224, %v4933
  %v5241 = vmul.f32 %v5229, %v4934
  %v5242 = vmul.f32 %v5234, %v4935
  %v5243 = vadd.f32 %v5236, 0.0
  %v5244 = vadd.f32 %v5237, 0.0
  %v5245 = vadd.f32 %v5238, 0.0
  %v5246 = vadd.f32 %v5239, 0.0
  %v5247 = vadd.f32 %v5240, 0.0
  %v5248 = vadd.f32 %v5241, 0.0
  %v5249 = vadd.f32 %v5242, 0.0
  %5250 = vset.pattern.permute.xlu0 1
  %5251 = vperm.xlu0 %5250, %v4922
  %v5252 = vpop.permute.xlu0 %5251
  %5254 = vset.pattern.permute.xlu0 1
  %5255 = vperm.xlu0 %5254, %v4923
  %v5256 = vpop.permute.xlu0 %5255
  %5258 = vset.pattern.permute.xlu0 1
  %5259 = vperm.xlu0 %5258, %v4924
  %v5260 = vpop.permute.xlu0 %5259
  %5262 = vset.pattern.permute.xlu0 1
  %5263 = vperm.xlu0 %5262, %v4925
  %v5264 = vpop.permute.xlu0 %5263
  %5266 = vset.pattern.permute.xlu0 1
  %5267 = vperm.xlu0 %5266, %v4926
  %v5268 = vpop.permute.xlu0 %5267
  %5270 = vset.pattern.permute.xlu0 1
  %5271 = vperm.xlu0 %5270, %v4927
  %v5272 = vpop.permute.xlu0 %5271
  %5274 = vset.pattern.permute.xlu0 1
  %5275 = vperm.xlu0 %5274, %v4928
  %v5276 = vpop.permute.xlu0 %5275
  %v5278 = vmul.f32 %v5252, %v4985
  %v5279 = vmul.f32 %v5256, %v4986
  %v5280 = vmul.f32 %v5260, %v4987
  %v5281 = vmul.f32 %v5264, %v4988
  %v5282 = vmul.f32 %v5268, %v4989
  %v5283 = vmul.f32 %v5272, %v4990
  %v5284 = vmul.f32 %v5276, %v4991
  %v5285 = vadd.f32 %v5243, %v5278
  %v5286 = vadd.f32 %v5244, %v5279
  %v5287 = vadd.f32 %v5245, %v5280
  %v5288 = vadd.f32 %v5246, %v5281
  %v5289 = vadd.f32 %v5247, %v5282
  %v5290 = vadd.f32 %v5248, %v5283
  %v5291 = vadd.f32 %v5249, %v5284
  %5292 = vset.pattern.permute.xlu0 2
  %5293 = vperm.xlu0 %5292, %v4922
  %v5294 = vpop.permute.xlu0 %5293
  %5296 = vset.pattern.permute.xlu0 2
  %5297 = vperm.xlu0 %5296, %v4923
  %v5298 = vpop.permute.xlu0 %5297
  %5300 = vset.pattern.permute.xlu0 2
  %5301 = vperm.xlu0 %5300, %v4924
  %v5302 = vpop.permute.xlu0 %5301
  %5304 = vset.pattern.permute.xlu0 2
  %5305 = vperm.xlu0 %5304, %v4925
  %v5306 = vpop.permute.xlu0 %5305
  %5308 = vset.pattern.permute.xlu0 2
  %5309 = vperm.xlu0 %5308, %v4926
  %v5310 = vpop.permute.xlu0 %5309
  %5312 = vset.pattern.permute.xlu0 2
  %5313 = vperm.xlu0 %5312, %v4927
  %v5314 = vpop.permute.xlu0 %5313
  %5316 = vset.pattern.permute.xlu0 2
  %5317 = vperm.xlu0 %5316, %v4928
  %v5318 = vpop.permute.xlu0 %5317
  %v5320 = vmul.f32 %v5294, %v5034
  %v5321 = vmul.f32 %v5298, %v5035
  %v5322 = vmul.f32 %v5302, %v5036
  %v5323 = vmul.f32 %v5306, %v5037
  %v5324 = vmul.f32 %v5310, %v5038
  %v5325 = vmul.f32 %v5314, %v5039
  %v5326 = vmul.f32 %v5318, %v5040
  %v5327 = vadd.f32 %v5285, %v5320
  %v5328 = vadd.f32 %v5286, %v5321
  %v5329 = vadd.f32 %v5287, %v5322
  %v5330 = vadd.f32 %v5288, %v5323
  %v5331 = vadd.f32 %v5289, %v5324
  %v5332 = vadd.f32 %v5290, %v5325
  %v5333 = vadd.f32 %v5291, %v5326
  %5334 = vset.pattern.permute.xlu0 3
  %5335 = vperm.xlu0 %5334, %v4922
  %v5336 = vpop.permute.xlu0 %5335
  %5338 = vset.pattern.permute.xlu0 3
  %5339 = vperm.xlu0 %5338, %v4923
  %v5340 = vpop.permute.xlu0 %5339
  %5342 = vset.pattern.permute.xlu0 3
  %5343 = vperm.xlu0 %5342, %v4924
  %v5344 = vpop.permute.xlu0 %5343
  %5346 = vset.pattern.permute.xlu0 3
  %5347 = vperm.xlu0 %5346, %v4925
  %v5348 = vpop.permute.xlu0 %5347
  %5350 = vset.pattern.permute.xlu0 3
  %5351 = vperm.xlu0 %5350, %v4926
  %v5352 = vpop.permute.xlu0 %5351
  %5354 = vset.pattern.permute.xlu0 3
  %5355 = vperm.xlu0 %5354, %v4927
  %v5356 = vpop.permute.xlu0 %5355
  %5358 = vset.pattern.permute.xlu0 3
  %5359 = vperm.xlu0 %5358, %v4928
  %v5360 = vpop.permute.xlu0 %5359
  %v5362 = vmul.f32 %v5336, %v5083
  %v5363 = vmul.f32 %v5340, %v5084
  %v5364 = vmul.f32 %v5344, %v5085
  %v5365 = vmul.f32 %v5348, %v5086
  %v5366 = vmul.f32 %v5352, %v5087
  %v5367 = vmul.f32 %v5356, %v5088
  %v5368 = vmul.f32 %v5360, %v5089
  %v5369 = vadd.f32 %v5327, %v5362
  %v5370 = vadd.f32 %v5328, %v5363
  %v5371 = vadd.f32 %v5329, %v5364
  %v5372 = vadd.f32 %v5330, %v5365
  %v5373 = vadd.f32 %v5331, %v5366
  %v5374 = vadd.f32 %v5332, %v5367
  %v5375 = vadd.f32 %v5333, %v5368
  %5376 = vset.pattern.permute.xlu0 4
  %5377 = vperm.xlu0 %5376, %v4922
  %v5378 = vpop.permute.xlu0 %5377
  %5380 = vset.pattern.permute.xlu0 4
  %5381 = vperm.xlu0 %5380, %v4923
  %v5382 = vpop.permute.xlu0 %5381
  %5384 = vset.pattern.permute.xlu0 4
  %5385 = vperm.xlu0 %5384, %v4924
  %v5386 = vpop.permute.xlu0 %5385
  %5388 = vset.pattern.permute.xlu0 4
  %5389 = vperm.xlu0 %5388, %v4925
  %v5390 = vpop.permute.xlu0 %5389
  %5392 = vset.pattern.permute.xlu0 4
  %5393 = vperm.xlu0 %5392, %v4926
  %v5394 = vpop.permute.xlu0 %5393
  %5396 = vset.pattern.permute.xlu0 4
  %5397 = vperm.xlu0 %5396, %v4927
  %v5398 = vpop.permute.xlu0 %5397
  %5400 = vset.pattern.permute.xlu0 4
  %5401 = vperm.xlu0 %5400, %v4928
  %v5402 = vpop.permute.xlu0 %5401
  %v5404 = vmul.f32 %v5378, %v5132
  %v5405 = vmul.f32 %v5382, %v5133
  %v5406 = vmul.f32 %v5386, %v5134
  %v5407 = vmul.f32 %v5390, %v5135
  %v5408 = vmul.f32 %v5394, %v5136
  %v5409 = vmul.f32 %v5398, %v5137
  %v5410 = vmul.f32 %v5402, %v5138
  %v5411 = vadd.f32 %v5369, %v5404
  %v5412 = vadd.f32 %v5370, %v5405
  %v5413 = vadd.f32 %v5371, %v5406
  %v5414 = vadd.f32 %v5372, %v5407
  %v5415 = vadd.f32 %v5373, %v5408
  %v5416 = vadd.f32 %v5374, %v5409
  %v5417 = vadd.f32 %v5375, %v5410
  %v5418 = vsel %vm5181, %v5411, 0.0
  %v5419 = vsel %vm5181, %v5412, 0.0
  %v5420 = vadd.f32 %v5418, %v5419
  %v5421 = vsel %vm5181, %v5413, 0.0
  %v5422 = vadd.f32 %v5420, %v5421
  %v5423 = vsel %vm5181, %v5414, 0.0
  %v5424 = vadd.f32 %v5422, %v5423
  %v5425 = vsel %vm5181, %v5415, 0.0
  %v5426 = vadd.f32 %v5424, %v5425
  %v5427 = vsel %vm5181, %v5416, 0.0
  %v5428 = vadd.f32 %v5426, %v5427
  %v5429 = vsel %vm5181, %v5417, 0.0
  %v5430 = vadd.f32 %v5428, %v5429
  %v5431 = vrot.slane %v5430, 4
  %v5432 = vadd.f32 %v5430, %v5431
  %v5433 = vrot.slane %v5432, 2
  %v5434 = vadd.f32 %v5432, %v5433
  %v5435 = vrot.slane %v5434, 1
  %v5436 = vadd.f32 %v5434, %v5435
  %vm5437 = vcmask 1040384
  %v5438 = vsel %vm5437, %v5200, %v5436
  %v5439 = vld [vmem:[%s6] sm:$0x1]
  %v5441 = vperm.slane %v5439, 0
  %v5443 = vadd.f32 %v5438, %v5441
  %v5444 = vmax.f32 %v5443, 0.0
  %v5445 = vld [vmem:[%s7] sm:$0x1]
  %v5447 = vperm.slane %v5445, 0
  %v5449 = vmul.f32 %v5444, %v5447
  %vm5450 = vcmask 254976
  %v5451 = vsel %vm5450, %v5449, 0.0
  %5452 = vadd.xlane.f32.xlu0 %v5451
  %v5453 = vpop.xlane.xlu0 %5452
  %v5454 = vld [vmem:[#allocation5] sm:$0x1]
  %v5456 = vperm.slane %v5454, 0
  %v5458 = vadd.f32 %v5453, %v5456
  %v5459 = vld [vmem:[%s9] sm:$0x1]
  %v5461 = vperm.slane %v5459, 0
  %5462 = vrot.lane.b32.xlu0 %v5461, 32
  %v5463 = vpop.permute.xlu0 %5462
  %v5465 = vadd.f32 %v5438, %v5463
  %5467 = vset.pattern.permute.xlu0 0
  %5468 = vperm.xlu0 %5467, %v5458
  %v5469 = vpop.permute.xlu0 %5468
  %v5471 = vadd.f32 %v5469, %v5465
  %5473 = vrot.lane.b32.xlu0 %v5465, 96
  %v5474 = vpop.permute.xlu0 %5473
  %vm5476 = vcmask 58368
  %v5477 = vsel %vm5476, %v5474, 0.0
  %5478 = vadd.xlane.f32.xlu0 %v5477
  %v5479 = vpop.xlane.xlu0 %5478
  %v5480 = vrcp.pop 8.0
  %v5481 = vmul.f32 8.0, %v5480
  %v5482 = vsub.f32 1.0, %v5481
  %v5483 = vmul.f32 %v5480, %v5482
  %v5484 = vadd.f32 %v5480, %v5483
  %vm5485 = vweird.f32 %v5480
  %v5486 = vsel %vm5485, %v5480, %v5484
  %v5487 = vmul.f32 %v5479, %v5486
  %v5488 = vsub.f32 %v5471, %v5487
  %5490 = vrot.lane.b32.xlu0 %v5488, 96
  %v5491 = vpop.permute.xlu0 %5490
  %5493 = vst.msk [vmem:[%s10] sm:$0x3] %vm5476, %v5491
  %5494 = vrot.lane.b32.xlu0 %v5465, 88
  %v5495 = vpop.permute.xlu0 %5494
  %v5497 = vsel %vm5476, %v5495, 0.0
  %5498 = vadd.xlane.f32.xlu0 %v5497
  %v5499 = vpop.xlane.xlu0 %5498
  %v5500 = vmul.f32 %v5499, %v5486
  %v5501 = vsub.f32 %v5471, %v5500
  %5503 = vrot.lane.b32.xlu0 %v5501, 96
  %v5504 = vpop.permute.xlu0 %5503
  %vm5506 = vcmask 123968
  %5507 = vst.msk [vmem:[%s10] sm:$0x3] %vm5506, %v5504
  // Predicated region
  $region42: #{ddqn_forward.1} parent=0 // pred_check
    _
  $region43: #{ddqn_forward.1} parent=0 // pred_check_branch
    %5509 = sbr.rel (0) target = $region45
  $region44: #{ddqn_forward.1} parent=0 // pred_region
    _
  $region45: #{ddqn_forward.1} parent=0 // pred_fallthru
    _
  // Predicated region
  $region46: #{ddqn_forward.1} parent=0 // pred_check
    _
  $region47: #{ddqn_forward.1} parent=0 // pred_check_branch
    %5511 = sbr.rel (0) target = $region49
  $region48: #{ddqn_forward.1} parent=0 // pred_region
    _
  $region49: #{ddqn_forward.1} parent=0 // pred_fallthru
    _

</llo_original>
